<compile_context>
chip_gen: v7x
topology: tpu7x:2x2x1
jax: 0.10.0
libtpu: 0.0.40
codegen_flags: <defaults>
</compile_context>

<pallas_src>
import functools

import numpy as np
import jax
import jax.numpy as jnp
from jax.experimental import pallas as pl
from jax.experimental.pallas import tpu as pltpu

GTU_VALUE = 1.0
DIM_IN = 2
DIM_OUT = 1
DIM_HIDDEN = 32
DIM_FOURIER = 4
NFF = 2 + 4 * DIM_FOURIER          # 18 fourier features per net
HALF = DIM_HIDDEN                  # per-net width (features zero-padded 18 -> 32)
WIDTH = 2 * HALF                   # 64 = block-diagonal width [global | local]
NUM_HIDDEN_LAYERS = 7              # fc1..fc7 (fc8 is the 2-row head matmul)
MB = 256                           # points per grid block (multiple of 128/256)

# misc_ref row layout: (15, 64, 1)
MISC_ROWS = 15                     # rows 0..6 biases fc1..fc7, then constants:
MISC_CX0, MISC_CX1 = 7, 8          # coordinate selectors (x0 / x1)
MISC_CRAW, MISC_CSIN = 9, 10       # raw-lane / trig-lane indicators
MISC_SCALE, MISC_PHASE = 11, 12    # 2^f scale, sin/cos phase (0 or pi/2)
MISC_XIN, MISC_SPD = 13, 14        # timetransform shifts (local half only)


def layer_dims(skipopt):
    dims = [(NFF, DIM_HIDDEN), (DIM_HIDDEN, DIM_HIDDEN), (DIM_HIDDEN, DIM_HIDDEN)]
    dims.append((NFF, DIM_HIDDEN) if skipopt else (DIM_HIDDEN, DIM_HIDDEN))  # fc4
    dims += [(DIM_HIDDEN, DIM_HIDDEN)] * 3                                   # fc5..fc7
    dims.append((DIM_HIDDEN, DIM_OUT))                                       # fc8
    return dims


# ---------------------------------------------------------------------------
# Pallas kernel: both OdeNets, all 8 layers, featurization and final add,
# for one block of MB evaluation points.
# ---------------------------------------------------------------------------
def make_fullodenet_kernel(skipopt):
    def kernel(pts_ref, w_ref, misc_ref, head_ref, hb_ref, o_ref):
        # pts_ref : (8, MB)            rows: 0=x0, 1=x1, 2=t, rest zero
        # w_ref   : (7, 64, 64)        transposed block-diag weights fc1..fc7
        # misc_ref: (15, 64, 1)        biases + host-packed feature constants
        # head_ref: (2, 64)            row0=[w8_g|0], row1=[0|w8_l]
        # hb_ref  : (2, 1)             fc8 biases (global, local)
        # o_ref   : (1, MB)            lane-dense per-point bkg+met
        x0 = pts_ref[0:1, :]                                   # (1, MB)
        x1 = pts_ref[1:2, :]
        tt = pts_ref[2:3, :]

        cx0, cx1 = misc_ref[MISC_CX0], misc_ref[MISC_CX1]       # (64, 1)
        craw, csin = misc_ref[MISC_CRAW], misc_ref[MISC_CSIN]
        scale, phase = misc_ref[MISC_SCALE], misc_ref[MISC_PHASE]
        xin_l, sp_l = misc_ref[MISC_XIN], misc_ref[MISC_SPD]

        # Fourier features + timetransform (local half shifted by x_in+speed*t),
        # features along sublanes, points along lanes. One sin per feature:
        # cos lanes use phase = pi/2. Padded sublanes get exactly 0 (craw=csin=0)
        # and also hit zero weight rows in fc1/fc4.
        base = cx0 * x0 + cx1 * x1 - xin_l - sp_l * tt                  # (64, MB)
        feat = craw * base + csin * jnp.sin(scale * base + phase)       # (64, MB)

        def dense_relu(li, h):
            return jnp.maximum(
                jnp.dot(w_ref[li], h, preferred_element_type=jnp.float32)
                + misc_ref[li], 0.0)

        if skipopt:
            xskip = dense_relu(3, feat)          # fc4 acts on fourier features
        h = dense_relu(0, feat)
        h = dense_relu(1, h)
        h = dense_relu(2, h)
        h = (h + xskip) if skipopt else dense_relu(3, h)
        h = dense_relu(4, h)
        h = dense_relu(5, h)
        h = dense_relu(6, h)

        # fc8 for both nets in one (2, 64) @ (64, MB) matmul; final add fused.
        logits = jnp.dot(head_ref[...], h, preferred_element_type=jnp.float32)
        probs = jax.nn.sigmoid(logits + hb_ref[...])                    # (2, MB)
        o_ref[...] = jnp.sum(probs, axis=0, keepdims=True)              # (1, MB)

    return kernel


# ---------------------------------------------------------------------------
# Host-side packing.
# ---------------------------------------------------------------------------
def _feature_constants():
    j = np.arange(HALF)
    is_x0 = (j % 2 == 0).astype(np.float32)
    is_raw = (j < 2).astype(np.float32)
    trig = (j >= 2) & (j < NFF)
    grp = np.maximum(j - 2, 0)
    scale = np.where(trig, 2.0 ** (grp // 4), 0.0).astype(np.float32)
    phase = np.where(trig & (grp % 4 >= 2), np.pi / 2.0, 0.0).astype(np.float32)
    csin = trig.astype(np.float32)
    return is_x0, is_raw, csin, scale, phase


def init_odenet_params(key, skipopt):
    """Deterministic per-layer (W, b) with W in (in, out) layout."""
    params = []
    for (k_in, k_out) in layer_dims(skipopt):
        key, kw, kb = jax.random.split(key, 3)
        bound = 1.0 / float(k_in) ** 0.5
        w = jax.random.uniform(kw, (k_in, k_out), jnp.float32, -bound, bound)
        b = jax.random.uniform(kb, (k_out,), jnp.float32, -bound, bound)
        params.append((w, b))
    return params


def pack_full_odenet(params_g, params_l, x_in, speed):
    def pad_k(w):
        k = w.shape[0]
        if k < HALF:
            w = jnp.concatenate(
                [w, jnp.zeros((HALF - k, w.shape[1]), jnp.float32)], axis=0)
        return w

    wts = []
    for li in range(NUM_HIDDEN_LAYERS):
        wg, wl = pad_k(params_g[li][0]), pad_k(params_l[li][0])
        wbd = jnp.zeros((WIDTH, WIDTH), jnp.float32)       # off-diag quadrants = 0
        wbd = wbd.at[:HALF, :HALF].set(wg).at[HALF:, HALF:].set(wl)
        wts.append(wbd.T)                                  # kernel computes W^T @ h
    w_all = jnp.stack(wts, axis=0)                         # (7, 64, 64)

    is_x0, is_raw, csin, scale, phase = _feature_constants()
    dup = lambda a: jnp.concatenate([jnp.asarray(a, jnp.float32)] * 2)
    zeros_h = jnp.zeros((HALF,), jnp.float32)
    xin_sel = jnp.where(is_x0 > 0.5, x_in[0], x_in[1]).astype(jnp.float32)
    sp_sel = (jnp.where(is_x0 > 0.5, speed[0], speed[1]) * GTU_VALUE).astype(jnp.float32)

    rows = [jnp.concatenate([params_g[li][1], params_l[li][1]])
            for li in range(NUM_HIDDEN_LAYERS)]            # rows 0..6: biases
    rows += [dup(is_x0), dup(1.0 - is_x0), dup(is_raw), dup(csin),
             dup(scale), dup(phase),
             jnp.concatenate([zeros_h, xin_sel]),          # x_in shift (local half)
             jnp.concatenate([zeros_h, sp_sel])]           # speed*gtu (local half)
    misc = jnp.stack(rows, axis=0)[:, :, None]             # (15, 64, 1)

    w8g, b8g = params_g[7][0][:, 0], params_g[7][1][0]
    w8l, b8l = params_l[7][0][:, 0], params_l[7][1][0]
    head = jnp.zeros((2, WIDTH), jnp.float32)
    head = head.at[0, :HALF].set(w8g).at[1, HALF:].set(w8l)
    hb = jnp.stack([b8g, b8l]).reshape(2, 1).astype(jnp.float32)
    return w_all, misc, head, hb


# ---------------------------------------------------------------------------
# Forward wrapper: batched over evaluation points (M, 2) x (M,).
# ---------------------------------------------------------------------------
def full_odenet_forward(packed, xs, ts, *, skipopt):
    w_all, misc, head, hb = packed
    xs = jnp.asarray(xs, jnp.float32).reshape(-1, DIM_IN)
    ts = jnp.asarray(ts, jnp.float32).reshape(-1)
    m = xs.shape[0]
    nb = max(1, pl.cdiv(m, MB))
    m_pad = nb * MB

    pts = jnp.zeros((8, m_pad), jnp.float32)
    pts = pts.at[0, :m].set(xs[:, 0])
    pts = pts.at[1, :m].set(xs[:, 1])
    pts = pts.at[2, :m].set(ts)

    out = pl.pallas_call(
        make_fullodenet_kernel(skipopt),
        out_shape=jax.ShapeDtypeStruct((1, m_pad), jnp.float32),
        grid_spec=pltpu.PrefetchScalarGridSpec(
            num_scalar_prefetch=0,
            grid=(nb,),
            in_specs=[
                pl.BlockSpec((8, MB), lambda b: (0, b)),
                pl.BlockSpec((NUM_HIDDEN_LAYERS, WIDTH, WIDTH), lambda b: (0, 0, 0)),
                pl.BlockSpec((MISC_ROWS, WIDTH, 1), lambda b: (0, 0, 0)),
                pl.BlockSpec((2, WIDTH), lambda b: (0, 0)),
                pl.BlockSpec((2, 1), lambda b: (0, 0)),
            ],
            out_specs=pl.BlockSpec((1, MB), lambda b: (0, b)),
        ),
        compiler_params=pltpu.CompilerParams(
            dimension_semantics=("parallel",)),
    )(pts, w_all, misc, head, hb)
    return out[0, :m].reshape(m, DIM_OUT)


# ---------------------------------------------------------------------------
# Pure-JAX reference (mirrors the PyTorch forward).
# ---------------------------------------------------------------------------
def fourier_features(x2d):
    feats = [x2d]
    for f in range(DIM_FOURIER):
        xp = (2.0 ** f) * x2d
        feats.append(jnp.sin(xp))
        feats.append(jnp.cos(xp))
    return jnp.concatenate(feats, axis=-1)


def ref_odenet(params, x2d, skipopt):
    feat = fourier_features(x2d)[None, :]

    def dr(h, p):
        w, b = p
        return jnp.maximum(h @ w + b, 0.0)

    if skipopt:
        xskip = dr(feat, params[3])
    h = dr(feat, params[0])
    h = dr(h, params[1])
    h = dr(h, params[2])
    h = (h + xskip) if skipopt else dr(h, params[3])
    h = dr(h, params[4])
    h = dr(h, params[5])
    h = dr(h, params[6])
    w8, b8 = params[7]
    return jax.nn.sigmoid(h @ w8 + b8)


def ref_full_odenet(params_g, params_l, x_in, speed, x, t, skipopt):
    bkg = ref_odenet(params_g, x, skipopt)
    met = ref_odenet(params_l, x - x_in - speed * t * GTU_VALUE, skipopt)
    return bkg + met


if __name__ == "__main__":
    key = jax.random.PRNGKey(0)
    k_pg, k_pl, k_x, k_xin, k_sp, k_t = jax.random.split(key, 6)

    M = 1000                                               # pads to 1024 -> grid 4
    xs = jax.random.normal(k_x, (M, DIM_IN), jnp.float32)
    ts = jax.random.uniform(k_t, (M,), jnp.float32)
    x_in = jax.random.normal(k_xin, (DIM_IN,), jnp.float32)
    # module initializes speed to zeros; use nonzero here to exercise timetransform
    speed = 0.1 * jax.random.normal(k_sp, (DIM_IN,), jnp.float32)

    for skipopt in (False, True):
        params_g = init_odenet_params(k_pg, skipopt)
        params_l = init_odenet_params(k_pl, skipopt)
        packed = pack_full_odenet(params_g, params_l, x_in, speed)

        fwd = jax.jit(functools.partial(full_odenet_forward, skipopt=skipopt))

        out = jax.block_until_ready(fwd(packed, xs, ts))
        assert out.shape == (M, DIM_OUT), out.shape
        ref_batch = jax.vmap(
            lambda xp, tp: ref_full_odenet(
                params_g, params_l, x_in, speed, xp, tp, skipopt)[0])(xs, ts)
        # tolerance: in-kernel f32 MXU matmul chain + sin-with-phase vs XLA cos
        assert jnp.allclose(out, ref_batch, atol=2e-4, rtol=2e-4), (
            skipopt, float(jnp.max(jnp.abs(out - ref_batch))))

        # module-equivalent single-point forward(x, t)
        out1 = jax.block_until_ready(fwd(packed, xs[:1], ts[:1]))
        ref1 = ref_full_odenet(params_g, params_l, x_in, speed, xs[0], ts[0], skipopt)
        assert out1.shape == (1, DIM_OUT), out1.shape
        assert jnp.allclose(out1, ref1, atol=2e-4, rtol=2e-4), (skipopt, out1, ref1)

    print("KERNEL_OK")
</pallas_src>

<mosaic_0001>
module attributes {stable_mosaic.version = 11 : i64} {
  func.func @kernel(%arg0: i32, %arg1: memref<8x256xf32, #tpu.memory_space<vmem>>, %arg2: memref<7x64x64xf32, #tpu.memory_space<vmem>>, %arg3: memref<15x64x1xf32, #tpu.memory_space<vmem>>, %arg4: memref<2x64xf32, #tpu.memory_space<vmem>>, %arg5: memref<2x1xf32, #tpu.memory_space<vmem>>, %arg6: memref<1x256xf32, #tpu.memory_space<vmem>>) attributes {dimension_semantics = [#tpu.dimension_semantics<parallel>], iteration_bounds = array<i64: 4>, scalar_prefetch = 0 : i64, scratch_operands = 0 : i64, tpu.core_type = #tpu.core_type<tc>, window_params = [{transform_indices = @transform_0, window_bounds = array<i64: 8, 256>}, {pipeline_mode = #tpu.pipeline_mode<synchronous>, transform_indices = @transform_1, window_bounds = array<i64: 7, 64, 64>}, {pipeline_mode = #tpu.pipeline_mode<synchronous>, transform_indices = @transform_2, window_bounds = array<i64: 15, 64, 1>}, {pipeline_mode = #tpu.pipeline_mode<synchronous>, transform_indices = @transform_3, window_bounds = array<i64: 2, 64>}, {pipeline_mode = #tpu.pipeline_mode<synchronous>, transform_indices = @transform_4, window_bounds = array<i64: 2, 1>}, {transform_indices = @transform_5, window_bounds = array<i64: 1, 256>}]} {
    %c0 = arith.constant 0 : index
    %c0_0 = arith.constant 0 : index
    %0 = vector.load %arg1[%c0, %c0_0] : memref<8x256xf32, #tpu.memory_space<vmem>>, vector<1x256xf32>
    %c1 = arith.constant 1 : index
    %c0_1 = arith.constant 0 : index
    %1 = vector.load %arg1[%c1, %c0_1] : memref<8x256xf32, #tpu.memory_space<vmem>>, vector<1x256xf32>
    %c2 = arith.constant 2 : index
    %c0_2 = arith.constant 0 : index
    %2 = vector.load %arg1[%c2, %c0_2] : memref<8x256xf32, #tpu.memory_space<vmem>>, vector<1x256xf32>
    %c7 = arith.constant 7 : index
    %c0_3 = arith.constant 0 : index
    %c0_4 = arith.constant 0 : index
    %3 = vector.load %arg3[%c7, %c0_3, %c0_4] : memref<15x64x1xf32, #tpu.memory_space<vmem>>, vector<1x64x1xf32>
    %4 = vector.shape_cast %3 : vector<1x64x1xf32> to vector<64x1xf32>
    %c8 = arith.constant 8 : index
    %c0_5 = arith.constant 0 : index
    %c0_6 = arith.constant 0 : index
    %5 = vector.load %arg3[%c8, %c0_5, %c0_6] : memref<15x64x1xf32, #tpu.memory_space<vmem>>, vector<1x64x1xf32>
    %6 = vector.shape_cast %5 : vector<1x64x1xf32> to vector<64x1xf32>
    %c9 = arith.constant 9 : index
    %c0_7 = arith.constant 0 : index
    %c0_8 = arith.constant 0 : index
    %7 = vector.load %arg3[%c9, %c0_7, %c0_8] : memref<15x64x1xf32, #tpu.memory_space<vmem>>, vector<1x64x1xf32>
    %8 = vector.shape_cast %7 : vector<1x64x1xf32> to vector<64x1xf32>
    %c10 = arith.constant 10 : index
    %c0_9 = arith.constant 0 : index
    %c0_10 = arith.constant 0 : index
    %9 = vector.load %arg3[%c10, %c0_9, %c0_10] : memref<15x64x1xf32, #tpu.memory_space<vmem>>, vector<1x64x1xf32>
    %10 = vector.shape_cast %9 : vector<1x64x1xf32> to vector<64x1xf32>
    %c11 = arith.constant 11 : index
    %c0_11 = arith.constant 0 : index
    %c0_12 = arith.constant 0 : index
    %11 = vector.load %arg3[%c11, %c0_11, %c0_12] : memref<15x64x1xf32, #tpu.memory_space<vmem>>, vector<1x64x1xf32>
    %12 = vector.shape_cast %11 : vector<1x64x1xf32> to vector<64x1xf32>
    %c12 = arith.constant 12 : index
    %c0_13 = arith.constant 0 : index
    %c0_14 = arith.constant 0 : index
    %13 = vector.load %arg3[%c12, %c0_13, %c0_14] : memref<15x64x1xf32, #tpu.memory_space<vmem>>, vector<1x64x1xf32>
    %14 = vector.shape_cast %13 : vector<1x64x1xf32> to vector<64x1xf32>
    %c13 = arith.constant 13 : index
    %c0_15 = arith.constant 0 : index
    %c0_16 = arith.constant 0 : index
    %15 = vector.load %arg3[%c13, %c0_15, %c0_16] : memref<15x64x1xf32, #tpu.memory_space<vmem>>, vector<1x64x1xf32>
    %16 = vector.shape_cast %15 : vector<1x64x1xf32> to vector<64x1xf32>
    %c14 = arith.constant 14 : index
    %c0_17 = arith.constant 0 : index
    %c0_18 = arith.constant 0 : index
    %17 = vector.load %arg3[%c14, %c0_17, %c0_18] : memref<15x64x1xf32, #tpu.memory_space<vmem>>, vector<1x64x1xf32>
    %18 = vector.shape_cast %17 : vector<1x64x1xf32> to vector<64x1xf32>
    %19 = vector.broadcast %4 : vector<64x1xf32> to vector<64x256xf32>
    %20 = vector.broadcast %0 : vector<1x256xf32> to vector<64x256xf32>
    %21 = arith.mulf %19, %20 : vector<64x256xf32>
    %22 = vector.broadcast %6 : vector<64x1xf32> to vector<64x256xf32>
    %23 = vector.broadcast %1 : vector<1x256xf32> to vector<64x256xf32>
    %24 = arith.mulf %22, %23 : vector<64x256xf32>
    %25 = arith.addf %21, %24 : vector<64x256xf32>
    %26 = vector.broadcast %16 : vector<64x1xf32> to vector<64x256xf32>
    %27 = arith.subf %25, %26 : vector<64x256xf32>
    %28 = vector.broadcast %18 : vector<64x1xf32> to vector<64x256xf32>
    %29 = vector.broadcast %2 : vector<1x256xf32> to vector<64x256xf32>
    %30 = arith.mulf %28, %29 : vector<64x256xf32>
    %31 = arith.subf %27, %30 : vector<64x256xf32>
    %32 = vector.broadcast %8 : vector<64x1xf32> to vector<64x256xf32>
    %33 = arith.mulf %32, %31 : vector<64x256xf32>
    %34 = vector.broadcast %12 : vector<64x1xf32> to vector<64x256xf32>
    %35 = arith.mulf %34, %31 : vector<64x256xf32>
    %36 = vector.broadcast %14 : vector<64x1xf32> to vector<64x256xf32>
    %37 = arith.addf %35, %36 : vector<64x256xf32>
    %38 = math.sin %37 : vector<64x256xf32>
    %39 = vector.broadcast %10 : vector<64x1xf32> to vector<64x256xf32>
    %40 = arith.mulf %39, %38 : vector<64x256xf32>
    %41 = arith.addf %33, %40 : vector<64x256xf32>
    %c0_19 = arith.constant 0 : index
    %c0_20 = arith.constant 0 : index
    %c0_21 = arith.constant 0 : index
    %42 = vector.load %arg2[%c0_19, %c0_20, %c0_21] : memref<7x64x64xf32, #tpu.memory_space<vmem>>, vector<1x64x64xf32>
    %43 = vector.shape_cast %42 : vector<1x64x64xf32> to vector<64x64xf32>
    %cst = arith.constant dense<0.000000e+00> : vector<64x256xf32>
    %44 = tpu.matmul %43, %41, %cst {dimension_numbers = #tpu.dot_dimension_numbers<[1], [0], [0], [1], [0, 0, 1, 1], [], []>} : vector<64x64xf32>, vector<64x256xf32>, vector<64x256xf32> -> vector<64x256xf32>
    %c0_22 = arith.constant 0 : index
    %c0_23 = arith.constant 0 : index
    %c0_24 = arith.constant 0 : index
    %45 = vector.load %arg3[%c0_22, %c0_23, %c0_24] : memref<15x64x1xf32, #tpu.memory_space<vmem>>, vector<1x64x1xf32>
    %46 = vector.shape_cast %45 : vector<1x64x1xf32> to vector<64x1xf32>
    %47 = vector.broadcast %46 : vector<64x1xf32> to vector<64x256xf32>
    %48 = arith.addf %44, %47 : vector<64x256xf32>
    %cst_25 = arith.constant 0.000000e+00 : f32
    %49 = vector.broadcast %cst_25 : f32 to vector<64x256xf32>
    %50 = arith.maximumf %48, %49 : vector<64x256xf32>
    %c1_26 = arith.constant 1 : index
    %c0_27 = arith.constant 0 : index
    %c0_28 = arith.constant 0 : index
    %51 = vector.load %arg2[%c1_26, %c0_27, %c0_28] : memref<7x64x64xf32, #tpu.memory_space<vmem>>, vector<1x64x64xf32>
    %52 = vector.shape_cast %51 : vector<1x64x64xf32> to vector<64x64xf32>
    %cst_29 = arith.constant dense<0.000000e+00> : vector<64x256xf32>
    %53 = tpu.matmul %52, %50, %cst_29 {dimension_numbers = #tpu.dot_dimension_numbers<[1], [0], [0], [1], [0, 0, 1, 1], [], []>} : vector<64x64xf32>, vector<64x256xf32>, vector<64x256xf32> -> vector<64x256xf32>
    %c1_30 = arith.constant 1 : index
    %c0_31 = arith.constant 0 : index
    %c0_32 = arith.constant 0 : index
    %54 = vector.load %arg3[%c1_30, %c0_31, %c0_32] : memref<15x64x1xf32, #tpu.memory_space<vmem>>, vector<1x64x1xf32>
    %55 = vector.shape_cast %54 : vector<1x64x1xf32> to vector<64x1xf32>
    %56 = vector.broadcast %55 : vector<64x1xf32> to vector<64x256xf32>
    %57 = arith.addf %53, %56 : vector<64x256xf32>
    %cst_33 = arith.constant 0.000000e+00 : f32
    %58 = vector.broadcast %cst_33 : f32 to vector<64x256xf32>
    %59 = arith.maximumf %57, %58 : vector<64x256xf32>
    %c2_34 = arith.constant 2 : index
    %c0_35 = arith.constant 0 : index
    %c0_36 = arith.constant 0 : index
    %60 = vector.load %arg2[%c2_34, %c0_35, %c0_36] : memref<7x64x64xf32, #tpu.memory_space<vmem>>, vector<1x64x64xf32>
    %61 = vector.shape_cast %60 : vector<1x64x64xf32> to vector<64x64xf32>
    %cst_37 = arith.constant dense<0.000000e+00> : vector<64x256xf32>
    %62 = tpu.matmul %61, %59, %cst_37 {dimension_numbers = #tpu.dot_dimension_numbers<[1], [0], [0], [1], [0, 0, 1, 1], [], []>} : vector<64x64xf32>, vector<64x256xf32>, vector<64x256xf32> -> vector<64x256xf32>
    %c2_38 = arith.constant 2 : index
    %c0_39 = arith.constant 0 : index
    %c0_40 = arith.constant 0 : index
    %63 = vector.load %arg3[%c2_38, %c0_39, %c0_40] : memref<15x64x1xf32, #tpu.memory_space<vmem>>, vector<1x64x1xf32>
    %64 = vector.shape_cast %63 : vector<1x64x1xf32> to vector<64x1xf32>
    %65 = vector.broadcast %64 : vector<64x1xf32> to vector<64x256xf32>
    %66 = arith.addf %62, %65 : vector<64x256xf32>
    %cst_41 = arith.constant 0.000000e+00 : f32
    %67 = vector.broadcast %cst_41 : f32 to vector<64x256xf32>
    %68 = arith.maximumf %66, %67 : vector<64x256xf32>
    %c3 = arith.constant 3 : index
    %c0_42 = arith.constant 0 : index
    %c0_43 = arith.constant 0 : index
    %69 = vector.load %arg2[%c3, %c0_42, %c0_43] : memref<7x64x64xf32, #tpu.memory_space<vmem>>, vector<1x64x64xf32>
    %70 = vector.shape_cast %69 : vector<1x64x64xf32> to vector<64x64xf32>
    %cst_44 = arith.constant dense<0.000000e+00> : vector<64x256xf32>
    %71 = tpu.matmul %70, %68, %cst_44 {dimension_numbers = #tpu.dot_dimension_numbers<[1], [0], [0], [1], [0, 0, 1, 1], [], []>} : vector<64x64xf32>, vector<64x256xf32>, vector<64x256xf32> -> vector<64x256xf32>
    %c3_45 = arith.constant 3 : index
    %c0_46 = arith.constant 0 : index
    %c0_47 = arith.constant 0 : index
    %72 = vector.load %arg3[%c3_45, %c0_46, %c0_47] : memref<15x64x1xf32, #tpu.memory_space<vmem>>, vector<1x64x1xf32>
    %73 = vector.shape_cast %72 : vector<1x64x1xf32> to vector<64x1xf32>
    %74 = vector.broadcast %73 : vector<64x1xf32> to vector<64x256xf32>
    %75 = arith.addf %71, %74 : vector<64x256xf32>
    %cst_48 = arith.constant 0.000000e+00 : f32
    %76 = vector.broadcast %cst_48 : f32 to vector<64x256xf32>
    %77 = arith.maximumf %75, %76 : vector<64x256xf32>
    %c4 = arith.constant 4 : index
    %c0_49 = arith.constant 0 : index
    %c0_50 = arith.constant 0 : index
    %78 = vector.load %arg2[%c4, %c0_49, %c0_50] : memref<7x64x64xf32, #tpu.memory_space<vmem>>, vector<1x64x64xf32>
    %79 = vector.shape_cast %78 : vector<1x64x64xf32> to vector<64x64xf32>
    %cst_51 = arith.constant dense<0.000000e+00> : vector<64x256xf32>
    %80 = tpu.matmul %79, %77, %cst_51 {dimension_numbers = #tpu.dot_dimension_numbers<[1], [0], [0], [1], [0, 0, 1, 1], [], []>} : vector<64x64xf32>, vector<64x256xf32>, vector<64x256xf32> -> vector<64x256xf32>
    %c4_52 = arith.constant 4 : index
    %c0_53 = arith.constant 0 : index
    %c0_54 = arith.constant 0 : index
    %81 = vector.load %arg3[%c4_52, %c0_53, %c0_54] : memref<15x64x1xf32, #tpu.memory_space<vmem>>, vector<1x64x1xf32>
    %82 = vector.shape_cast %81 : vector<1x64x1xf32> to vector<64x1xf32>
    %83 = vector.broadcast %82 : vector<64x1xf32> to vector<64x256xf32>
    %84 = arith.addf %80, %83 : vector<64x256xf32>
    %cst_55 = arith.constant 0.000000e+00 : f32
    %85 = vector.broadcast %cst_55 : f32 to vector<64x256xf32>
    %86 = arith.maximumf %84, %85 : vector<64x256xf32>
    %c5 = arith.constant 5 : index
    %c0_56 = arith.constant 0 : index
    %c0_57 = arith.constant 0 : index
    %87 = vector.load %arg2[%c5, %c0_56, %c0_57] : memref<7x64x64xf32, #tpu.memory_space<vmem>>, vector<1x64x64xf32>
    %88 = vector.shape_cast %87 : vector<1x64x64xf32> to vector<64x64xf32>
    %cst_58 = arith.constant dense<0.000000e+00> : vector<64x256xf32>
    %89 = tpu.matmul %88, %86, %cst_58 {dimension_numbers = #tpu.dot_dimension_numbers<[1], [0], [0], [1], [0, 0, 1, 1], [], []>} : vector<64x64xf32>, vector<64x256xf32>, vector<64x256xf32> -> vector<64x256xf32>
    %c5_59 = arith.constant 5 : index
    %c0_60 = arith.constant 0 : index
    %c0_61 = arith.constant 0 : index
    %90 = vector.load %arg3[%c5_59, %c0_60, %c0_61] : memref<15x64x1xf32, #tpu.memory_space<vmem>>, vector<1x64x1xf32>
    %91 = vector.shape_cast %90 : vector<1x64x1xf32> to vector<64x1xf32>
    %92 = vector.broadcast %91 : vector<64x1xf32> to vector<64x256xf32>
    %93 = arith.addf %89, %92 : vector<64x256xf32>
    %cst_62 = arith.constant 0.000000e+00 : f32
    %94 = vector.broadcast %cst_62 : f32 to vector<64x256xf32>
    %95 = arith.maximumf %93, %94 : vector<64x256xf32>
    %c6 = arith.constant 6 : index
    %c0_63 = arith.constant 0 : index
    %c0_64 = arith.constant 0 : index
    %96 = vector.load %arg2[%c6, %c0_63, %c0_64] : memref<7x64x64xf32, #tpu.memory_space<vmem>>, vector<1x64x64xf32>
    %97 = vector.shape_cast %96 : vector<1x64x64xf32> to vector<64x64xf32>
    %cst_65 = arith.constant dense<0.000000e+00> : vector<64x256xf32>
    %98 = tpu.matmul %97, %95, %cst_65 {dimension_numbers = #tpu.dot_dimension_numbers<[1], [0], [0], [1], [0, 0, 1, 1], [], []>} : vector<64x64xf32>, vector<64x256xf32>, vector<64x256xf32> -> vector<64x256xf32>
    %c6_66 = arith.constant 6 : index
    %c0_67 = arith.constant 0 : index
    %c0_68 = arith.constant 0 : index
    %99 = vector.load %arg3[%c6_66, %c0_67, %c0_68] : memref<15x64x1xf32, #tpu.memory_space<vmem>>, vector<1x64x1xf32>
    %100 = vector.shape_cast %99 : vector<1x64x1xf32> to vector<64x1xf32>
    %101 = vector.broadcast %100 : vector<64x1xf32> to vector<64x256xf32>
    %102 = arith.addf %98, %101 : vector<64x256xf32>
    %cst_69 = arith.constant 0.000000e+00 : f32
    %103 = vector.broadcast %cst_69 : f32 to vector<64x256xf32>
    %104 = arith.maximumf %102, %103 : vector<64x256xf32>
    %c0_70 = arith.constant 0 : index
    %c0_71 = arith.constant 0 : index
    %105 = vector.load %arg4[%c0_70, %c0_71] : memref<2x64xf32, #tpu.memory_space<vmem>>, vector<2x64xf32>
    %cst_72 = arith.constant dense<0.000000e+00> : vector<2x256xf32>
    %106 = tpu.matmul %105, %104, %cst_72 {dimension_numbers = #tpu.dot_dimension_numbers<[1], [0], [0], [1], [0, 0, 1, 1], [], []>} : vector<2x64xf32>, vector<64x256xf32>, vector<2x256xf32> -> vector<2x256xf32>
    %c0_73 = arith.constant 0 : index
    %c0_74 = arith.constant 0 : index
    %107 = vector.load %arg5[%c0_73, %c0_74] : memref<2x1xf32, #tpu.memory_space<vmem>>, vector<2x1xf32>
    %108 = vector.broadcast %107 : vector<2x1xf32> to vector<2x256xf32>
    %109 = arith.addf %106, %108 : vector<2x256xf32>
    %110 = arith.negf %109 : vector<2x256xf32>
    %111 = math.exp %110 : vector<2x256xf32>
    %cst_75 = arith.constant 1.000000e+00 : f32
    %112 = vector.broadcast %cst_75 : f32 to vector<2x256xf32>
    %113 = arith.addf %112, %111 : vector<2x256xf32>
    %114 = arith.divf %112, %113 : vector<2x256xf32>
    %cst_76 = arith.constant dense<0.000000e+00> : vector<256xf32>
    %115 = vector.multi_reduction <add>, %114, %cst_76 [0] : vector<2x256xf32> to vector<256xf32>
    %116 = vector.shape_cast %115 : vector<256xf32> to vector<1x256xf32>
    %c0_77 = arith.constant 0 : index
    %c0_78 = arith.constant 0 : index
    %117 = vector.load %arg6[%c0_77, %c0_78] : memref<1x256xf32, #tpu.memory_space<vmem>>, vector<1x256xf32>
    tpu.vector_store %arg6[%c0_77, %c0_78], %116 {strides = array<i32>} : memref<1x256xf32, #tpu.memory_space<vmem>>, vector<1x256xf32>,
    return
  }
  func.func @transform_0(%arg0: i32) -> (i32, i32) {
    %c0_i32 = arith.constant 0 : i32
    %c0_i32_0 = arith.constant 0 : i32
    return %c0_i32, %arg0 : i32, i32
  }
  func.func @transform_1(%arg0: i32) -> (i32, i32, i32) {
    %c0_i32 = arith.constant 0 : i32
    %c0_i32_0 = arith.constant 0 : i32
    %c0_i32_1 = arith.constant 0 : i32
    %c0_i32_2 = arith.constant 0 : i32
    return %c0_i32, %c0_i32_0, %c0_i32_1 : i32, i32, i32
  }
  func.func @transform_2(%arg0: i32) -> (i32, i32, i32) {
    %c0_i32 = arith.constant 0 : i32
    %c0_i32_0 = arith.constant 0 : i32
    %c0_i32_1 = arith.constant 0 : i32
    %c0_i32_2 = arith.constant 0 : i32
    return %c0_i32, %c0_i32_0, %c0_i32_1 : i32, i32, i32
  }
  func.func @transform_3(%arg0: i32) -> (i32, i32) {
    %c0_i32 = arith.constant 0 : i32
    %c0_i32_0 = arith.constant 0 : i32
    %c0_i32_1 = arith.constant 0 : i32
    return %c0_i32, %c0_i32_0 : i32, i32
  }
  func.func @transform_4(%arg0: i32) -> (i32, i32) {
    %c0_i32 = arith.constant 0 : i32
    %c0_i32_0 = arith.constant 0 : i32
    %c0_i32_1 = arith.constant 0 : i32
    return %c0_i32, %c0_i32_0 : i32, i32
  }
  func.func @transform_5(%arg0: i32) -> (i32, i32) {
    %c0_i32 = arith.constant 0 : i32
    %c0_i32_0 = arith.constant 0 : i32
    return %c0_i32, %arg0 : i32, i32
  }
}

</mosaic_0001>

<llo_original>
// kernel: full_odenet_forward.1
$region0: #{full_odenet_forward.1}
  #allocation0 [shape = 'u32[]', space=smem, size = 0x4, offset = 0x4, fixed_abs, tag = 'smem constant byte address 0x4 - core index']
  #allocation1 [shape = 'u32[144,128]{1,0:T(1,128)}', space=vmem, size = 0x12000, scoped, tag = 'internal scratch']
  %s0 = inlined_call_operand.vmem [shape: f32[8,1024], index: 0, kind: input, shape index: {}]
  %s1 = inlined_call_operand.vmem [shape: f32[7,64,64], index: 1, kind: input, shape index: {}]
  %s2 = inlined_call_operand.vmem [shape: f32[15,64,1], index: 2, kind: input, shape index: {}]
  %s3 = inlined_call_operand.vmem [shape: f32[2,64], index: 3, kind: input, shape index: {}]
  %s4 = inlined_call_operand.vmem [shape: f32[2,1], index: 4, kind: input, shape index: {}]
  %s5 = inlined_call_operand.vmem [shape: f32[1,1024], index: 5, kind: output, shape index: {}]
  %s6 = sld [smem:[#allocation0]]
  $region53: #{full_odenet_forward.1} parent=0
    _
  %s8 = ssub.s32 1, %s6
  %s9 = scalar_select 0, %s8, %s6
  loop: start=0, step=1, limit=6
  $region2: #{full_odenet_forward.1} parent=0 // loop_pre_header
    _
  $region3: #{full_odenet_forward.1} parent=0 // loop_header
    %s11 = sphi 0, %s15
    %p12 = scmp.ge.s32.totalorder %s11, 6
    %s21 = sphi 0, %s23
    %s24 = sphi 0, %s21
    %s25 = sphi 0, %s24
    %s41 = sphi 0, %s25
    %s45 = sphi 0, %s45
    %s47 = sphi 0, %s45
    %s48 = sphi 0, %s47
    %s62 = sphi 0, %s48
    %s66 = sphi 0, %s66
    %s68 = sphi 0, %s66
    %s69 = sphi 0, %s68
    %s83 = sphi 0, %s69
    %s87 = sphi 0, %s87
    %s89 = sphi 0, %s87
    %s90 = sphi 0, %s89
    %s104 = sphi 0, %s90
    %s108 = sphi 0, %s108
    %s110 = sphi 0, %s108
    %s111 = sphi 0, %s110
    %s125 = sphi 0, %s111
    %s131 = sphi 0, %s133
    %s134 = sphi 0, %s131
    %s135 = sphi 0, %s134
    %s151 = sphi 0, %s135
  $region4: #{full_odenet_forward.1} parent=0 // loop_header_branch
    %14 = sbr.rel (%p12) target = $region8
  $region5: #{full_odenet_forward.1} parent=0 // loop_body
    %s16 = ssub.s32 %s11, 1
    %s17 = ssub.s32 %s11, 2
    %s18 = sadd.s32 %s11, 1
    %s19 = ssub.s32 %s11, %s18
    %p20 = scmp.eq.s32.totalorder %s19, 0
    %s22 = sadd.s32 %s21, 1
    %s23 = scalar_select %p20, %s21, %s22
    %p26 = pneg %p20
    %p27 = scmp.eq.s32.totalorder %s11, 3
    %p28 = por %p26, %p27
    %p29 = scmp.ne.s32.totalorder %s21, %s24
    %p30 = scmp.eq.s32.totalorder %s11, 0
    %p31 = por %p29, %p30
    %p32 = scmp.ne.s32.totalorder %s21, %s24
    %p33 = scmp.eq.s32.totalorder %s16, 3
    %p34 = por %p32, %p33
    %p35 = scmp.ne.s32.totalorder %s24, %s25
    %p36 = scmp.eq.s32.totalorder %s16, 0
    %p37 = por %p35, %p36
    %p38 = scmp.ne.s32.totalorder %s24, %s25
    %p39 = scmp.eq.s32.totalorder %s17, 3
    %p40 = por %p38, %p39
    %p42 = scmp.ne.s32.totalorder %s25, %s41
    %p43 = scmp.eq.s32.totalorder %s17, 0
    %p44 = por %p42, %p43
    %s46 = sadd.s32 %s45, 1
    %p49 = scmp.eq.s32.totalorder %s11, 3
    %p50 = scmp.ne.s32.totalorder %s45, %s47
    %p51 = scmp.eq.s32.totalorder %s11, 0
    %p52 = por %p50, %p51
    %p53 = scmp.ne.s32.totalorder %s45, %s47
    %p54 = scmp.eq.s32.totalorder %s16, 3
    %p55 = por %p53, %p54
    %p56 = scmp.ne.s32.totalorder %s47, %s48
    %p57 = scmp.eq.s32.totalorder %s16, 0
    %p58 = por %p56, %p57
    %p59 = scmp.ne.s32.totalorder %s47, %s48
    %p60 = scmp.eq.s32.totalorder %s17, 3
    %p61 = por %p59, %p60
    %p63 = scmp.ne.s32.totalorder %s48, %s62
    %p64 = scmp.eq.s32.totalorder %s17, 0
    %p65 = por %p63, %p64
    %s67 = sadd.s32 %s66, 1
    %p70 = scmp.eq.s32.totalorder %s11, 3
    %p71 = scmp.ne.s32.totalorder %s66, %s68
    %p72 = scmp.eq.s32.totalorder %s11, 0
    %p73 = por %p71, %p72
    %p74 = scmp.ne.s32.totalorder %s66, %s68
    %p75 = scmp.eq.s32.totalorder %s16, 3
    %p76 = por %p74, %p75
    %p77 = scmp.ne.s32.totalorder %s68, %s69
    %p78 = scmp.eq.s32.totalorder %s16, 0
    %p79 = por %p77, %p78
    %p80 = scmp.ne.s32.totalorder %s68, %s69
    %p81 = scmp.eq.s32.totalorder %s17, 3
    %p82 = por %p80, %p81
    %p84 = scmp.ne.s32.totalorder %s69, %s83
    %p85 = scmp.eq.s32.totalorder %s17, 0
    %p86 = por %p84, %p85
    %s88 = sadd.s32 %s87, 1
    %p91 = scmp.eq.s32.totalorder %s11, 3
    %p92 = scmp.ne.s32.totalorder %s87, %s89
    %p93 = scmp.eq.s32.totalorder %s11, 0
    %p94 = por %p92, %p93
    %p95 = scmp.ne.s32.totalorder %s87, %s89
    %p96 = scmp.eq.s32.totalorder %s16, 3
    %p97 = por %p95, %p96
    %p98 = scmp.ne.s32.totalorder %s89, %s90
    %p99 = scmp.eq.s32.totalorder %s16, 0
    %p100 = por %p98, %p99
    %p101 = scmp.ne.s32.totalorder %s89, %s90
    %p102 = scmp.eq.s32.totalorder %s17, 3
    %p103 = por %p101, %p102
    %p105 = scmp.ne.s32.totalorder %s90, %s104
    %p106 = scmp.eq.s32.totalorder %s17, 0
    %p107 = por %p105, %p106
    %s109 = sadd.s32 %s108, 1
    %p112 = scmp.eq.s32.totalorder %s11, 3
    %p113 = scmp.ne.s32.totalorder %s108, %s110
    %p114 = scmp.eq.s32.totalorder %s11, 0
    %p115 = por %p113, %p114
    %p116 = scmp.ne.s32.totalorder %s108, %s110
    %p117 = scmp.eq.s32.totalorder %s16, 3
    %p118 = por %p116, %p117
    %p119 = scmp.ne.s32.totalorder %s110, %s111
    %p120 = scmp.eq.s32.totalorder %s16, 0
    %p121 = por %p119, %p120
    %p122 = scmp.ne.s32.totalorder %s110, %s111
    %p123 = scmp.eq.s32.totalorder %s17, 3
    %p124 = por %p122, %p123
    %p126 = scmp.ne.s32.totalorder %s111, %s125
    %p127 = scmp.eq.s32.totalorder %s17, 0
    %p128 = por %p126, %p127
    %s129 = ssub.s32 %s11, %s18
    %p130 = scmp.eq.s32.totalorder %s129, 0
    %s132 = sadd.s32 %s131, 1
    %s133 = scalar_select %p130, %s131, %s132
    %p136 = pneg %p130
    %p137 = scmp.eq.s32.totalorder %s11, 3
    %p138 = por %p136, %p137
    %p139 = scmp.ne.s32.totalorder %s131, %s134
    %p140 = scmp.eq.s32.totalorder %s11, 0
    %p141 = por %p139, %p140
    %p142 = scmp.ne.s32.totalorder %s131, %s134
    %p143 = scmp.eq.s32.totalorder %s16, 3
    %p144 = por %p142, %p143
    %p145 = scmp.ne.s32.totalorder %s134, %s135
    %p146 = scmp.eq.s32.totalorder %s16, 0
    %p147 = por %p145, %p146
    %p148 = scmp.ne.s32.totalorder %s134, %s135
    %p149 = scmp.eq.s32.totalorder %s17, 3
    %p150 = por %p148, %p149
    %p152 = scmp.ne.s32.totalorder %s135, %s151
    %p153 = scmp.eq.s32.totalorder %s17, 0
    %p154 = por %p152, %p153
    %p155 = scmp.le.s32.totalorder 1, %s11
    %p156 = scmp.lt.s32.totalorder %s11, 5
    %p157 = pnand %p155, %p156
    %p158 = pneg %p157
    // Predicated region
    $region9: #{full_odenet_forward.1} parent=5 // pred_check
      _
    $region10: #{full_odenet_forward.1} parent=5 // pred_check_branch
      %160 = sbr.rel (%p157) target = $region12
    $region11: #{full_odenet_forward.1} parent=5 // pred_region
      %s161 = ssub.s32 %s11, 1
      // Predicated region
      $region13: #{full_odenet_forward.1} parent=11 // pred_check
        %p162 = pneg %p58
      $region14: #{full_odenet_forward.1} parent=11 // pred_check_branch
        %164 = sbr.rel (%p162) target = $region16
      $region15: #{full_odenet_forward.1} parent=11 // pred_region
        _
      $region16: #{full_odenet_forward.1} parent=11 // pred_fallthru
        _
      // Predicated region
      $region17: #{full_odenet_forward.1} parent=11 // pred_check
        %p165 = pneg %p79
      $region18: #{full_odenet_forward.1} parent=11 // pred_check_branch
        %167 = sbr.rel (%p165) target = $region20
      $region19: #{full_odenet_forward.1} parent=11 // pred_region
        _
      $region20: #{full_odenet_forward.1} parent=11 // pred_fallthru
        _
      // Predicated region
      $region21: #{full_odenet_forward.1} parent=11 // pred_check
        %p168 = pneg %p100
      $region22: #{full_odenet_forward.1} parent=11 // pred_check_branch
        %170 = sbr.rel (%p168) target = $region24
      $region23: #{full_odenet_forward.1} parent=11 // pred_region
        _
      $region24: #{full_odenet_forward.1} parent=11 // pred_fallthru
        _
      // Predicated region
      $region25: #{full_odenet_forward.1} parent=11 // pred_check
        %p171 = pneg %p121
      $region26: #{full_odenet_forward.1} parent=11 // pred_check_branch
        %173 = sbr.rel (%p171) target = $region28
      $region27: #{full_odenet_forward.1} parent=11 // pred_region
        _
      $region28: #{full_odenet_forward.1} parent=11 // pred_fallthru
        _
    $region12: #{full_odenet_forward.1} parent=5 // pred_fallthru
      _
    %p174 = scmp.lt.s32.totalorder %s11, 4
    // Predicated region
    $region29: #{full_odenet_forward.1} parent=5 // pred_check
      %p175 = pneg %p174
    $region30: #{full_odenet_forward.1} parent=5 // pred_check_branch
      %177 = sbr.rel (%p175) target = $region32
    $region31: #{full_odenet_forward.1} parent=5 // pred_region
      // Predicated region
      $region33: #{full_odenet_forward.1} parent=31 // pred_check
        %p178 = pneg %p31
      $region34: #{full_odenet_forward.1} parent=31 // pred_check_branch
        %180 = sbr.rel (%p178) target = $region36
      $region35: #{full_odenet_forward.1} parent=31 // pred_region
        %s181 = smul.u32 2, %s11
        %p182 = scmp.lt.s32.totalorder %s181, 7
        %s183 = scalar_select %p182, %s181, 7
        %s184 = smul.addr %s183, 8
        %s185 = scalar_lea.vmem %s0, %s184
        %s186 = smul.u32 2, %s11
      $region36: #{full_odenet_forward.1} parent=31 // pred_fallthru
        _
    $region32: #{full_odenet_forward.1} parent=5 // pred_fallthru
      _
    %p187 = scmp.le.s32.totalorder 1, %s11
    %p188 = scmp.lt.s32.totalorder %s11, 5
    %p189 = pnand %p187, %p188
    %p190 = pneg %p189
    // Predicated region
    $region37: #{full_odenet_forward.1} parent=5 // pred_check
      _
    $region38: #{full_odenet_forward.1} parent=5 // pred_check_branch
      %192 = sbr.rel (%p189) target = $region40
    $region39: #{full_odenet_forward.1} parent=5 // pred_region
      %s193 = ssub.s32 %s11, 1
      %s194 = smul.u32 2, %s16
      %p195 = scmp.lt.s32.totalorder %s194, 7
      %s196 = scalar_select %p195, %s194, 7
      %s197 = smul.addr %s196, 8
      %s198 = scalar_lea.vmem %s0, %s197
      %p199 = pneg %p37
      %p200 = pneg %p34
      %p201 = pneg %p58
      %p202 = pneg %p55
      %p203 = pneg %p79
      %p204 = pneg %p76
      %p205 = pneg %p100
      %p206 = pneg %p97
      %p207 = pneg %p121
      %p208 = pneg %p118
      %p209 = pneg %p147
      %p210 = pneg %p144
      %s211 = smul.u32 2, %s16
      %p212 = scmp.lt.s32.totalorder %s211, 7
      %s213 = scalar_select %p212, %s211, 7
      %s214 = scalar_lea.vmem %s5, %s213
      %s215 = smul.u32 2, %s16
      %p216 = scmp.lt.s32.totalorder %s215, 7
      %s217 = scalar_select %p216, %s215, 7
      %s218 = smul.addr %s217, 8
      %s219 = scalar_lea.vmem %s0, %s218
      %s220 = smul.u32 2, %s16
      %s221 = smul.u32 2, %s16
      %p222 = scmp.lt.s32.totalorder %s221, 7
      %s223 = scalar_select %p222, %s221, 7
      %s224 = scalar_lea.vmem %s5, %s223
      %s225 = smul.u32 2, %s16
      %v226 = vld [vmem:[%s219] ss:$8 sm:$0x3]
      %s227 = scalar_lea.vmem %s219, 1
      %v228 = vld [vmem:[%s227] ss:$8 sm:$0x3]
      %s229 = scalar_lea.vmem %s219, 2
      %v230 = vld [vmem:[%s229] ss:$8 sm:$0x3]
      %s231 = scalar_lea.vmem %s2, 448
      %v232 = vld [vmem:[%s231] sm:$0xff]
      %v233 = vld [vmem:[%s231 + $0x8] sm:$0xff]
      %v234 = vld [vmem:[%s231 + $0x10] sm:$0xff]
      %v235 = vld [vmem:[%s231 + $0x18] sm:$0xff]
      %v236 = vld [vmem:[%s231 + $0x20] sm:$0xff]
      %v237 = vld [vmem:[%s231 + $0x28] sm:$0xff]
      %v238 = vld [vmem:[%s231 + $0x30] sm:$0xff]
      %v239 = vld [vmem:[%s231 + $0x38] sm:$0xff]
      %s240 = scalar_lea.vmem %s2, 512
      %v241 = vld [vmem:[%s240] sm:$0xff]
      %v242 = vld [vmem:[%s240 + $0x8] sm:$0xff]
      %v243 = vld [vmem:[%s240 + $0x10] sm:$0xff]
      %v244 = vld [vmem:[%s240 + $0x18] sm:$0xff]
      %v245 = vld [vmem:[%s240 + $0x20] sm:$0xff]
      %v246 = vld [vmem:[%s240 + $0x28] sm:$0xff]
      %v247 = vld [vmem:[%s240 + $0x30] sm:$0xff]
      %v248 = vld [vmem:[%s240 + $0x38] sm:$0xff]
      %s249 = scalar_lea.vmem %s2, 576
      %v250 = vld [vmem:[%s249] sm:$0xff]
      %v251 = vld [vmem:[%s249 + $0x8] sm:$0xff]
      %v252 = vld [vmem:[%s249 + $0x10] sm:$0xff]
      %v253 = vld [vmem:[%s249 + $0x18] sm:$0xff]
      %v254 = vld [vmem:[%s249 + $0x20] sm:$0xff]
      %v255 = vld [vmem:[%s249 + $0x28] sm:$0xff]
      %v256 = vld [vmem:[%s249 + $0x30] sm:$0xff]
      %v257 = vld [vmem:[%s249 + $0x38] sm:$0xff]
      %s258 = scalar_lea.vmem %s2, 640
      %v259 = vld [vmem:[%s258] sm:$0xff]
      %v260 = vld [vmem:[%s258 + $0x8] sm:$0xff]
      %v261 = vld [vmem:[%s258 + $0x10] sm:$0xff]
      %v262 = vld [vmem:[%s258 + $0x18] sm:$0xff]
      %v263 = vld [vmem:[%s258 + $0x20] sm:$0xff]
      %v264 = vld [vmem:[%s258 + $0x28] sm:$0xff]
      %v265 = vld [vmem:[%s258 + $0x30] sm:$0xff]
      %v266 = vld [vmem:[%s258 + $0x38] sm:$0xff]
      %s267 = scalar_lea.vmem %s2, 704
      %v268 = vld [vmem:[%s267] sm:$0xff]
      %v269 = vld [vmem:[%s267 + $0x8] sm:$0xff]
      %v270 = vld [vmem:[%s267 + $0x10] sm:$0xff]
      %v271 = vld [vmem:[%s267 + $0x18] sm:$0xff]
      %v272 = vld [vmem:[%s267 + $0x20] sm:$0xff]
      %v273 = vld [vmem:[%s267 + $0x28] sm:$0xff]
      %v274 = vld [vmem:[%s267 + $0x30] sm:$0xff]
      %v275 = vld [vmem:[%s267 + $0x38] sm:$0xff]
      %s276 = scalar_lea.vmem %s2, 768
      %v277 = vld [vmem:[%s276] sm:$0xff]
      %v278 = vld [vmem:[%s276 + $0x8] sm:$0xff]
      %v279 = vld [vmem:[%s276 + $0x10] sm:$0xff]
      %v280 = vld [vmem:[%s276 + $0x18] sm:$0xff]
      %v281 = vld [vmem:[%s276 + $0x20] sm:$0xff]
      %v282 = vld [vmem:[%s276 + $0x28] sm:$0xff]
      %v283 = vld [vmem:[%s276 + $0x30] sm:$0xff]
      %v284 = vld [vmem:[%s276 + $0x38] sm:$0xff]
      %s285 = scalar_lea.vmem %s2, 832
      %v286 = vld [vmem:[%s285] sm:$0xff]
      %v287 = vld [vmem:[%s285 + $0x8] sm:$0xff]
      %v288 = vld [vmem:[%s285 + $0x10] sm:$0xff]
      %v289 = vld [vmem:[%s285 + $0x18] sm:$0xff]
      %v290 = vld [vmem:[%s285 + $0x20] sm:$0xff]
      %v291 = vld [vmem:[%s285 + $0x28] sm:$0xff]
      %v292 = vld [vmem:[%s285 + $0x30] sm:$0xff]
      %v293 = vld [vmem:[%s285 + $0x38] sm:$0xff]
      %s294 = scalar_lea.vmem %s2, 896
      %v295 = vld [vmem:[%s294] sm:$0xff]
      %v296 = vld [vmem:[%s294 + $0x8] sm:$0xff]
      %v297 = vld [vmem:[%s294 + $0x10] sm:$0xff]
      %v298 = vld [vmem:[%s294 + $0x18] sm:$0xff]
      %v299 = vld [vmem:[%s294 + $0x20] sm:$0xff]
      %v300 = vld [vmem:[%s294 + $0x28] sm:$0xff]
      %v301 = vld [vmem:[%s294 + $0x30] sm:$0xff]
      %v302 = vld [vmem:[%s294 + $0x38] sm:$0xff]
      %304 = vset.pattern.permute.xlu0 0
      %305 = vperm.xlu0 %304, %v232
      %v306 = vpop.permute.xlu0 %305
      %309 = vset.pattern.permute.xlu0 0
      %310 = vperm.xlu0 %309, %v233
      %v311 = vpop.permute.xlu0 %310
      %314 = vset.pattern.permute.xlu0 0
      %315 = vperm.xlu0 %314, %v234
      %v316 = vpop.permute.xlu0 %315
      %319 = vset.pattern.permute.xlu0 0
      %320 = vperm.xlu0 %319, %v235
      %v321 = vpop.permute.xlu0 %320
      %324 = vset.pattern.permute.xlu0 0
      %325 = vperm.xlu0 %324, %v236
      %v326 = vpop.permute.xlu0 %325
      %329 = vset.pattern.permute.xlu0 0
      %330 = vperm.xlu0 %329, %v237
      %v331 = vpop.permute.xlu0 %330
      %334 = vset.pattern.permute.xlu0 0
      %335 = vperm.xlu0 %334, %v238
      %v336 = vpop.permute.xlu0 %335
      %339 = vset.pattern.permute.xlu0 0
      %340 = vperm.xlu0 %339, %v239
      %v341 = vpop.permute.xlu0 %340
      %v344 = vlaneseq
      %v345 = vshrl.u32 %v344, 7
      %v346 = vsub.s32 0, %v345
      %v347 = vrot.slane %v226, %v346
      %v348 = vlaneseq
      %v349 = vshrl.u32 %v348, 7
      %v350 = vsub.s32 1, %v349
      %v351 = vrot.slane %v226, %v350
      %v354 = vmul.f32 %v306, %v347
      %v355 = vmul.f32 %v306, %v351
      %v356 = vmul.f32 %v311, %v347
      %v357 = vmul.f32 %v311, %v351
      %v358 = vmul.f32 %v316, %v347
      %v359 = vmul.f32 %v316, %v351
      %v360 = vmul.f32 %v321, %v347
      %v361 = vmul.f32 %v321, %v351
      %v362 = vmul.f32 %v326, %v347
      %v363 = vmul.f32 %v326, %v351
      %v364 = vmul.f32 %v331, %v347
      %v365 = vmul.f32 %v331, %v351
      %v366 = vmul.f32 %v336, %v347
      %v367 = vmul.f32 %v336, %v351
      %v368 = vmul.f32 %v341, %v347
      %v369 = vmul.f32 %v341, %v351
      %371 = vset.pattern.permute.xlu0 0
      %372 = vperm.xlu0 %371, %v241
      %v373 = vpop.permute.xlu0 %372
      %376 = vset.pattern.permute.xlu0 0
      %377 = vperm.xlu0 %376, %v242
      %v378 = vpop.permute.xlu0 %377
      %381 = vset.pattern.permute.xlu0 0
      %382 = vperm.xlu0 %381, %v243
      %v383 = vpop.permute.xlu0 %382
      %386 = vset.pattern.permute.xlu0 0
      %387 = vperm.xlu0 %386, %v244
      %v388 = vpop.permute.xlu0 %387
      %391 = vset.pattern.permute.xlu0 0
      %392 = vperm.xlu0 %391, %v245
      %v393 = vpop.permute.xlu0 %392
      %396 = vset.pattern.permute.xlu0 0
      %397 = vperm.xlu0 %396, %v246
      %v398 = vpop.permute.xlu0 %397
      %401 = vset.pattern.permute.xlu0 0
      %402 = vperm.xlu0 %401, %v247
      %v403 = vpop.permute.xlu0 %402
      %406 = vset.pattern.permute.xlu0 0
      %407 = vperm.xlu0 %406, %v248
      %v408 = vpop.permute.xlu0 %407
      %v411 = vlaneseq
      %v412 = vshrl.u32 %v411, 7
      %v413 = vsub.s32 0, %v412
      %v414 = vrot.slane %v228, %v413
      %v415 = vlaneseq
      %v416 = vshrl.u32 %v415, 7
      %v417 = vsub.s32 1, %v416
      %v418 = vrot.slane %v228, %v417
      %v421 = vmul.f32 %v373, %v414
      %v422 = vmul.f32 %v373, %v418
      %v423 = vmul.f32 %v378, %v414
      %v424 = vmul.f32 %v378, %v418
      %v425 = vmul.f32 %v383, %v414
      %v426 = vmul.f32 %v383, %v418
      %v427 = vmul.f32 %v388, %v414
      %v428 = vmul.f32 %v388, %v418
      %v429 = vmul.f32 %v393, %v414
      %v430 = vmul.f32 %v393, %v418
      %v431 = vmul.f32 %v398, %v414
      %v432 = vmul.f32 %v398, %v418
      %v433 = vmul.f32 %v403, %v414
      %v434 = vmul.f32 %v403, %v418
      %v435 = vmul.f32 %v408, %v414
      %v436 = vmul.f32 %v408, %v418
      %v437 = vadd.f32 %v354, %v421
      %v438 = vadd.f32 %v355, %v422
      %v439 = vadd.f32 %v356, %v423
      %v440 = vadd.f32 %v357, %v424
      %v441 = vadd.f32 %v358, %v425
      %v442 = vadd.f32 %v359, %v426
      %v443 = vadd.f32 %v360, %v427
      %v444 = vadd.f32 %v361, %v428
      %v445 = vadd.f32 %v362, %v429
      %v446 = vadd.f32 %v363, %v430
      %v447 = vadd.f32 %v364, %v431
      %v448 = vadd.f32 %v365, %v432
      %v449 = vadd.f32 %v366, %v433
      %v450 = vadd.f32 %v367, %v434
      %v451 = vadd.f32 %v368, %v435
      %v452 = vadd.f32 %v369, %v436
      %454 = vset.pattern.permute.xlu0 0
      %455 = vperm.xlu0 %454, %v286
      %v456 = vpop.permute.xlu0 %455
      %459 = vset.pattern.permute.xlu0 0
      %460 = vperm.xlu0 %459, %v287
      %v461 = vpop.permute.xlu0 %460
      %464 = vset.pattern.permute.xlu0 0
      %465 = vperm.xlu0 %464, %v288
      %v466 = vpop.permute.xlu0 %465
      %469 = vset.pattern.permute.xlu0 0
      %470 = vperm.xlu0 %469, %v289
      %v471 = vpop.permute.xlu0 %470
      %474 = vset.pattern.permute.xlu0 0
      %475 = vperm.xlu0 %474, %v290
      %v476 = vpop.permute.xlu0 %475
      %479 = vset.pattern.permute.xlu0 0
      %480 = vperm.xlu0 %479, %v291
      %v481 = vpop.permute.xlu0 %480
      %484 = vset.pattern.permute.xlu0 0
      %485 = vperm.xlu0 %484, %v292
      %v486 = vpop.permute.xlu0 %485
      %489 = vset.pattern.permute.xlu0 0
      %490 = vperm.xlu0 %489, %v293
      %v491 = vpop.permute.xlu0 %490
      %v493 = vsub.f32 %v437, %v456
      %v494 = vsub.f32 %v438, %v456
      %v495 = vsub.f32 %v439, %v461
      %v496 = vsub.f32 %v440, %v461
      %v497 = vsub.f32 %v441, %v466
      %v498 = vsub.f32 %v442, %v466
      %v499 = vsub.f32 %v443, %v471
      %v500 = vsub.f32 %v444, %v471
      %v501 = vsub.f32 %v445, %v476
      %v502 = vsub.f32 %v446, %v476
      %v503 = vsub.f32 %v447, %v481
      %v504 = vsub.f32 %v448, %v481
      %v505 = vsub.f32 %v449, %v486
      %v506 = vsub.f32 %v450, %v486
      %v507 = vsub.f32 %v451, %v491
      %v508 = vsub.f32 %v452, %v491
      %510 = vset.pattern.permute.xlu0 0
      %511 = vperm.xlu0 %510, %v295
      %v512 = vpop.permute.xlu0 %511
      %515 = vset.pattern.permute.xlu0 0
      %516 = vperm.xlu0 %515, %v296
      %v517 = vpop.permute.xlu0 %516
      %520 = vset.pattern.permute.xlu0 0
      %521 = vperm.xlu0 %520, %v297
      %v522 = vpop.permute.xlu0 %521
      %525 = vset.pattern.permute.xlu0 0
      %526 = vperm.xlu0 %525, %v298
      %v527 = vpop.permute.xlu0 %526
      %530 = vset.pattern.permute.xlu0 0
      %531 = vperm.xlu0 %530, %v299
      %v532 = vpop.permute.xlu0 %531
      %535 = vset.pattern.permute.xlu0 0
      %536 = vperm.xlu0 %535, %v300
      %v537 = vpop.permute.xlu0 %536
      %540 = vset.pattern.permute.xlu0 0
      %541 = vperm.xlu0 %540, %v301
      %v542 = vpop.permute.xlu0 %541
      %545 = vset.pattern.permute.xlu0 0
      %546 = vperm.xlu0 %545, %v302
      %v547 = vpop.permute.xlu0 %546
      %v550 = vlaneseq
      %v551 = vshrl.u32 %v550, 7
      %v552 = vsub.s32 0, %v551
      %v553 = vrot.slane %v230, %v552
      %v554 = vlaneseq
      %v555 = vshrl.u32 %v554, 7
      %v556 = vsub.s32 1, %v555
      %v557 = vrot.slane %v230, %v556
      %v560 = vmul.f32 %v512, %v553
      %v561 = vmul.f32 %v512, %v557
      %v562 = vmul.f32 %v517, %v553
      %v563 = vmul.f32 %v517, %v557
      %v564 = vmul.f32 %v522, %v553
      %v565 = vmul.f32 %v522, %v557
      %v566 = vmul.f32 %v527, %v553
      %v567 = vmul.f32 %v527, %v557
      %v568 = vmul.f32 %v532, %v553
      %v569 = vmul.f32 %v532, %v557
      %v570 = vmul.f32 %v537, %v553
      %v571 = vmul.f32 %v537, %v557
      %v572 = vmul.f32 %v542, %v553
      %v573 = vmul.f32 %v542, %v557
      %v574 = vmul.f32 %v547, %v553
      %v575 = vmul.f32 %v547, %v557
      %v576 = vsub.f32 %v493, %v560
      %v577 = vsub.f32 %v494, %v561
      %v578 = vsub.f32 %v495, %v562
      %v579 = vsub.f32 %v496, %v563
      %v580 = vsub.f32 %v497, %v564
      %v581 = vsub.f32 %v498, %v565
      %v582 = vsub.f32 %v499, %v566
      %v583 = vsub.f32 %v500, %v567
      %v584 = vsub.f32 %v501, %v568
      %v585 = vsub.f32 %v502, %v569
      %v586 = vsub.f32 %v503, %v570
      %v587 = vsub.f32 %v504, %v571
      %v588 = vsub.f32 %v505, %v572
      %v589 = vsub.f32 %v506, %v573
      %v590 = vsub.f32 %v507, %v574
      %v591 = vsub.f32 %v508, %v575
      %593 = vset.pattern.permute.xlu0 0
      %594 = vperm.xlu0 %593, %v250
      %v595 = vpop.permute.xlu0 %594
      %598 = vset.pattern.permute.xlu0 0
      %599 = vperm.xlu0 %598, %v251
      %v600 = vpop.permute.xlu0 %599
      %603 = vset.pattern.permute.xlu0 0
      %604 = vperm.xlu0 %603, %v252
      %v605 = vpop.permute.xlu0 %604
      %608 = vset.pattern.permute.xlu0 0
      %609 = vperm.xlu0 %608, %v253
      %v610 = vpop.permute.xlu0 %609
      %613 = vset.pattern.permute.xlu0 0
      %614 = vperm.xlu0 %613, %v254
      %v615 = vpop.permute.xlu0 %614
      %618 = vset.pattern.permute.xlu0 0
      %619 = vperm.xlu0 %618, %v255
      %v620 = vpop.permute.xlu0 %619
      %623 = vset.pattern.permute.xlu0 0
      %624 = vperm.xlu0 %623, %v256
      %v625 = vpop.permute.xlu0 %624
      %628 = vset.pattern.permute.xlu0 0
      %629 = vperm.xlu0 %628, %v257
      %v630 = vpop.permute.xlu0 %629
      %v632 = vmul.f32 %v595, %v576
      %v633 = vmul.f32 %v595, %v577
      %v634 = vmul.f32 %v600, %v578
      %v635 = vmul.f32 %v600, %v579
      %v636 = vmul.f32 %v605, %v580
      %v637 = vmul.f32 %v605, %v581
      %v638 = vmul.f32 %v610, %v582
      %v639 = vmul.f32 %v610, %v583
      %v640 = vmul.f32 %v615, %v584
      %v641 = vmul.f32 %v615, %v585
      %v642 = vmul.f32 %v620, %v586
      %v643 = vmul.f32 %v620, %v587
      %v644 = vmul.f32 %v625, %v588
      %v645 = vmul.f32 %v625, %v589
      %v646 = vmul.f32 %v630, %v590
      %v647 = vmul.f32 %v630, %v591
      %649 = vset.pattern.permute.xlu0 0
      %650 = vperm.xlu0 %649, %v268
      %v651 = vpop.permute.xlu0 %650
      %654 = vset.pattern.permute.xlu0 0
      %655 = vperm.xlu0 %654, %v269
      %v656 = vpop.permute.xlu0 %655
      %659 = vset.pattern.permute.xlu0 0
      %660 = vperm.xlu0 %659, %v270
      %v661 = vpop.permute.xlu0 %660
      %664 = vset.pattern.permute.xlu0 0
      %665 = vperm.xlu0 %664, %v271
      %v666 = vpop.permute.xlu0 %665
      %669 = vset.pattern.permute.xlu0 0
      %670 = vperm.xlu0 %669, %v272
      %v671 = vpop.permute.xlu0 %670
      %674 = vset.pattern.permute.xlu0 0
      %675 = vperm.xlu0 %674, %v273
      %v676 = vpop.permute.xlu0 %675
      %679 = vset.pattern.permute.xlu0 0
      %680 = vperm.xlu0 %679, %v274
      %v681 = vpop.permute.xlu0 %680
      %684 = vset.pattern.permute.xlu0 0
      %685 = vperm.xlu0 %684, %v275
      %v686 = vpop.permute.xlu0 %685
      %v688 = vmul.f32 %v651, %v576
      %v689 = vmul.f32 %v651, %v577
      %v690 = vmul.f32 %v656, %v578
      %v691 = vmul.f32 %v656, %v579
      %v692 = vmul.f32 %v661, %v580
      %v693 = vmul.f32 %v661, %v581
      %v694 = vmul.f32 %v666, %v582
      %v695 = vmul.f32 %v666, %v583
      %v696 = vmul.f32 %v671, %v584
      %v697 = vmul.f32 %v671, %v585
      %v698 = vmul.f32 %v676, %v586
      %v699 = vmul.f32 %v676, %v587
      %v700 = vmul.f32 %v681, %v588
      %v701 = vmul.f32 %v681, %v589
      %v702 = vmul.f32 %v686, %v590
      %v703 = vmul.f32 %v686, %v591
      %705 = vset.pattern.permute.xlu0 0
      %706 = vperm.xlu0 %705, %v277
      %v707 = vpop.permute.xlu0 %706
      %710 = vset.pattern.permute.xlu0 0
      %711 = vperm.xlu0 %710, %v278
      %v712 = vpop.permute.xlu0 %711
      %715 = vset.pattern.permute.xlu0 0
      %716 = vperm.xlu0 %715, %v279
      %v717 = vpop.permute.xlu0 %716
      %720 = vset.pattern.permute.xlu0 0
      %721 = vperm.xlu0 %720, %v280
      %v722 = vpop.permute.xlu0 %721
      %725 = vset.pattern.permute.xlu0 0
      %726 = vperm.xlu0 %725, %v281
      %v727 = vpop.permute.xlu0 %726
      %730 = vset.pattern.permute.xlu0 0
      %731 = vperm.xlu0 %730, %v282
      %v732 = vpop.permute.xlu0 %731
      %735 = vset.pattern.permute.xlu0 0
      %736 = vperm.xlu0 %735, %v283
      %v737 = vpop.permute.xlu0 %736
      %740 = vset.pattern.permute.xlu0 0
      %741 = vperm.xlu0 %740, %v284
      %v742 = vpop.permute.xlu0 %741
      %v744 = vadd.f32 %v688, %v707
      %v745 = vadd.f32 %v689, %v707
      %v746 = vadd.f32 %v690, %v712
      %v747 = vadd.f32 %v691, %v712
      %v748 = vadd.f32 %v692, %v717
      %v749 = vadd.f32 %v693, %v717
      %v750 = vadd.f32 %v694, %v722
      %v751 = vadd.f32 %v695, %v722
      %v752 = vadd.f32 %v696, %v727
      %v753 = vadd.f32 %v697, %v727
      %v754 = vadd.f32 %v698, %v732
      %v755 = vadd.f32 %v699, %v732
      %v756 = vadd.f32 %v700, %v737
      %v757 = vadd.f32 %v701, %v737
      %v758 = vadd.f32 %v702, %v742
      %v759 = vadd.f32 %v703, %v742
      %v760 = vand.u32 2147483647, %v744
      %vm761 = vcmp.le.f32.partialorder %v760, 0.7853982
      %vm762 = vcmp.lt.s32.totalorder %v744, 0
      %v763 = vand.u32 %v744, 2139095040
      %v764 = vshrl.u32 %v763, 23
      %v765 = vsub.s32 %v764, 127
      %v766 = vand.u32 2147483647, %v744
      %v767 = vand.u32 %v766, 8388607
      %v768 = vor.u32 %v767, 8388608
      %v769 = vsub.s32 0, %v768
      %v770 = vadd.s32 %v765, 1
      %vm771 = vcmp.gt.s32.totalorder %v770, 0
      %v772 = vsel %vm771, %v770, 0
      %v773 = vshrl.u32 %v772, 5
      %v774 = vand.u32 %v772, 31
      %v775 = vsub.s32 32, %v774
      %v776 = vshrl.u32 683565275, %v775
      %v777 = vshll.u32 683565275, %v774
      %v778 = vshrl.u32 2475754826, %v775
      %v779 = vor.u32 %v777, %v778
      %v780 = vshll.u32 2475754826, %v774
      %v781 = vshrl.u32 2131351028, %v775
      %v782 = vor.u32 %v780, %v781
      %v783 = vshll.u32 2131351028, %v774
      %v784 = vshrl.u32 2102212464, %v775
      %v785 = vor.u32 %v783, %v784
      %v786 = vshll.u32 2102212464, %v774
      %v787 = vshrl.u32 920167782, %v775
      %v788 = vor.u32 %v786, %v787
      %v789 = vshll.u32 920167782, %v774
      %v790 = vshrl.u32 1326507024, %v775
      %v791 = vor.u32 %v789, %v790
      %vm792 = vcmp.lt.s32.totalorder %v773, 1
      %vm793 = vcmp.lt.s32.totalorder %v773, 2
      %vm794 = vcmp.lt.s32.totalorder %v773, 3
      %vm795 = vcmp.lt.s32.totalorder %v773, 4
      %v796 = vsel %vm792, %v776, %v779
      %v797 = vsel %vm795, %v785, 2102212464
      %v798 = vsel %vm794, %v782, %v797
      %v799 = vsel %vm793, %v796, %v798
      %v800 = vsel %vm792, %v779, %v782
      %v801 = vsel %vm795, %v788, 920167782
      %v802 = vsel %vm794, %v785, %v801
      %v803 = vsel %vm793, %v800, %v802
      %v804 = vsel %vm792, %v782, %v785
      %v805 = vsel %vm795, %v791, 1326507024
      %v806 = vsel %vm794, %v788, %v805
      %v807 = vsel %vm793, %v804, %v806
      %v808 = vshll.u32 %v768, 8
      %v809 = vmul.u32.u64.compose %v808, %v807
      %v810 = vextract.low.u32 %v809
      %v811 = vextract.high.u32 %v809
      %v812 = vmul.u32.u64.compose %v808, %v803
      %v813 = vextract.low.u32 %v812
      %v814 = vextract.high.u32 %v812
      %v815 = vmul.u32 %v808, %v799
      %v816 = vadd.s32 %v811, %v813
      %vm817 = vc.u32 %v811, %v813
      %v818 = vadd.s32 %v814, 1
      %v819 = vsel %vm817, %v818, %v814
      %v820 = vadd.s32 %v815, %v819
      %v821 = vadd.s32 %v820, 536870912
      %v822 = vshrl.u32 %v821, 30
      %v823 = vshll.u32 %v822, 30
      %v824 = vsub.s32 %v820, %v823
      %vm825 = vcmp.lt.s32.totalorder %v824, 0
      %v826 = vsub.s32 0, %v824
      %v827 = vsel %vm825, %v826, %v824
      %v828 = vclz %v827
      %v829 = vsub.s32 %v828, 2
      %vm830 = vcmp.gt.s32.totalorder 0, %v829
      %v831 = vsel %vm830, 0, %v829
      %v832 = vsub.s32 32, %v831
      %v833 = vshll.u32 %v824, %v831
      %v834 = vshrl.u32 %v816, %v832
      %v835 = vor.u32 %v833, %v834
      %v836 = vsub.s32 4294967266, %v831
      %v837 = vadd.s32 %v836, 127
      %v838 = vshll.u32 %v837, 23
      %v839 = vor.u32 4788187, %v838
      %v840 = vand.u32 2147483647, %v839
      %v842 = vcvt.s32.f32 %v835
      %v843 = vmul.f32 %v842, %v840
      %v844 = vxor.u32 %v843, 2147483648
      %v845 = vsel %vm762, %v844, %v843
      %v846 = vsub.s32 4, %v822
      %v847 = vsel %vm762, %v846, %v822
      %v848 = vsel %vm761, %v744, %v845
      %v849 = vsel %vm761, 0, %v847
      %v850 = vcosq.f32.pop %v848
      %v851 = vsinq.f32.pop %v848
      %vm852 = vweird.f32 %v744
      %v853 = vadd.s32 %v849, 3
      %v854 = vand.u32 %v853, 3
      %vm855 = vcmp.lt.s32.totalorder %v854, 2
      %vm856 = vcmp.eq.s32.totalorder %v854, 0
      %v857 = vxor.u32 %v851, 2147483648
      %v858 = vsel %vm856, %v850, %v857
      %vm859 = vcmp.eq.s32.totalorder %v854, 2
      %v860 = vxor.u32 %v850, 2147483648
      %v861 = vsel %vm859, %v860, %v851
      %v862 = vsel %vm855, %v858, %v861
      %v863 = vsel %vm852, nan, %v862
      %v864 = vand.u32 2147483647, %v745
      %vm865 = vcmp.le.f32.partialorder %v864, 0.7853982
      %vm866 = vcmp.lt.s32.totalorder %v745, 0
      %v867 = vand.u32 %v745, 2139095040
      %v868 = vshrl.u32 %v867, 23
      %v869 = vsub.s32 %v868, 127
      %v870 = vand.u32 2147483647, %v745
      %v871 = vand.u32 %v870, 8388607
      %v872 = vor.u32 %v871, 8388608
      %v873 = vsub.s32 0, %v872
      %v874 = vadd.s32 %v869, 1
      %vm875 = vcmp.gt.s32.totalorder %v874, 0
      %v876 = vsel %vm875, %v874, 0
      %v877 = vshrl.u32 %v876, 5
      %v878 = vand.u32 %v876, 31
      %v879 = vsub.s32 32, %v878
      %v880 = vshrl.u32 683565275, %v879
      %v881 = vshll.u32 683565275, %v878
      %v882 = vshrl.u32 2475754826, %v879
      %v883 = vor.u32 %v881, %v882
      %v884 = vshll.u32 2475754826, %v878
      %v885 = vshrl.u32 2131351028, %v879
      %v886 = vor.u32 %v884, %v885
      %v887 = vshll.u32 2131351028, %v878
      %v888 = vshrl.u32 2102212464, %v879
      %v889 = vor.u32 %v887, %v888
      %v890 = vshll.u32 2102212464, %v878
      %v891 = vshrl.u32 920167782, %v879
      %v892 = vor.u32 %v890, %v891
      %v893 = vshll.u32 920167782, %v878
      %v894 = vshrl.u32 1326507024, %v879
      %v895 = vor.u32 %v893, %v894
      %vm896 = vcmp.lt.s32.totalorder %v877, 1
      %vm897 = vcmp.lt.s32.totalorder %v877, 2
      %vm898 = vcmp.lt.s32.totalorder %v877, 3
      %vm899 = vcmp.lt.s32.totalorder %v877, 4
      %v900 = vsel %vm896, %v880, %v883
      %v901 = vsel %vm899, %v889, 2102212464
      %v902 = vsel %vm898, %v886, %v901
      %v903 = vsel %vm897, %v900, %v902
      %v904 = vsel %vm896, %v883, %v886
      %v905 = vsel %vm899, %v892, 920167782
      %v906 = vsel %vm898, %v889, %v905
      %v907 = vsel %vm897, %v904, %v906
      %v908 = vsel %vm896, %v886, %v889
      %v909 = vsel %vm899, %v895, 1326507024
      %v910 = vsel %vm898, %v892, %v909
      %v911 = vsel %vm897, %v908, %v910
      %v912 = vshll.u32 %v872, 8
      %v913 = vmul.u32.u64.compose %v912, %v911
      %v914 = vextract.low.u32 %v913
      %v915 = vextract.high.u32 %v913
      %v916 = vmul.u32.u64.compose %v912, %v907
      %v917 = vextract.low.u32 %v916
      %v918 = vextract.high.u32 %v916
      %v919 = vmul.u32 %v912, %v903
      %v920 = vadd.s32 %v915, %v917
      %vm921 = vc.u32 %v915, %v917
      %v922 = vadd.s32 %v918, 1
      %v923 = vsel %vm921, %v922, %v918
      %v924 = vadd.s32 %v919, %v923
      %v925 = vadd.s32 %v924, 536870912
      %v926 = vshrl.u32 %v925, 30
      %v927 = vshll.u32 %v926, 30
      %v928 = vsub.s32 %v924, %v927
      %vm929 = vcmp.lt.s32.totalorder %v928, 0
      %v930 = vsub.s32 0, %v928
      %v931 = vsel %vm929, %v930, %v928
      %v932 = vclz %v931
      %v933 = vsub.s32 %v932, 2
      %vm934 = vcmp.gt.s32.totalorder 0, %v933
      %v935 = vsel %vm934, 0, %v933
      %v936 = vsub.s32 32, %v935
      %v937 = vshll.u32 %v928, %v935
      %v938 = vshrl.u32 %v920, %v936
      %v939 = vor.u32 %v937, %v938
      %v940 = vsub.s32 4294967266, %v935
      %v941 = vadd.s32 %v940, 127
      %v942 = vshll.u32 %v941, 23
      %v943 = vor.u32 4788187, %v942
      %v944 = vand.u32 2147483647, %v943
      %v946 = vcvt.s32.f32 %v939
      %v947 = vmul.f32 %v946, %v944
      %v948 = vxor.u32 %v947, 2147483648
      %v949 = vsel %vm866, %v948, %v947
      %v950 = vsub.s32 4, %v926
      %v951 = vsel %vm866, %v950, %v926
      %v952 = vsel %vm865, %v745, %v949
      %v953 = vsel %vm865, 0, %v951
      %v954 = vcosq.f32.pop %v952
      %v955 = vsinq.f32.pop %v952
      %vm956 = vweird.f32 %v745
      %v957 = vadd.s32 %v953, 3
      %v958 = vand.u32 %v957, 3
      %vm959 = vcmp.lt.s32.totalorder %v958, 2
      %vm960 = vcmp.eq.s32.totalorder %v958, 0
      %v961 = vxor.u32 %v955, 2147483648
      %v962 = vsel %vm960, %v954, %v961
      %vm963 = vcmp.eq.s32.totalorder %v958, 2
      %v964 = vxor.u32 %v954, 2147483648
      %v965 = vsel %vm963, %v964, %v955
      %v966 = vsel %vm959, %v962, %v965
      %v967 = vsel %vm956, nan, %v966
      %v968 = vand.u32 2147483647, %v746
      %vm969 = vcmp.le.f32.partialorder %v968, 0.7853982
      %vm970 = vcmp.lt.s32.totalorder %v746, 0
      %v971 = vand.u32 %v746, 2139095040
      %v972 = vshrl.u32 %v971, 23
      %v973 = vsub.s32 %v972, 127
      %v974 = vand.u32 2147483647, %v746
      %v975 = vand.u32 %v974, 8388607
      %v976 = vor.u32 %v975, 8388608
      %v977 = vsub.s32 0, %v976
      %v978 = vadd.s32 %v973, 1
      %vm979 = vcmp.gt.s32.totalorder %v978, 0
      %v980 = vsel %vm979, %v978, 0
      %v981 = vshrl.u32 %v980, 5
      %v982 = vand.u32 %v980, 31
      %v983 = vsub.s32 32, %v982
      %v984 = vshrl.u32 683565275, %v983
      %v985 = vshll.u32 683565275, %v982
      %v986 = vshrl.u32 2475754826, %v983
      %v987 = vor.u32 %v985, %v986
      %v988 = vshll.u32 2475754826, %v982
      %v989 = vshrl.u32 2131351028, %v983
      %v990 = vor.u32 %v988, %v989
      %v991 = vshll.u32 2131351028, %v982
      %v992 = vshrl.u32 2102212464, %v983
      %v993 = vor.u32 %v991, %v992
      %v994 = vshll.u32 2102212464, %v982
      %v995 = vshrl.u32 920167782, %v983
      %v996 = vor.u32 %v994, %v995
      %v997 = vshll.u32 920167782, %v982
      %v998 = vshrl.u32 1326507024, %v983
      %v999 = vor.u32 %v997, %v998
      %vm1000 = vcmp.lt.s32.totalorder %v981, 1
      %vm1001 = vcmp.lt.s32.totalorder %v981, 2
      %vm1002 = vcmp.lt.s32.totalorder %v981, 3
      %vm1003 = vcmp.lt.s32.totalorder %v981, 4
      %v1004 = vsel %vm1000, %v984, %v987
      %v1005 = vsel %vm1003, %v993, 2102212464
      %v1006 = vsel %vm1002, %v990, %v1005
      %v1007 = vsel %vm1001, %v1004, %v1006
      %v1008 = vsel %vm1000, %v987, %v990
      %v1009 = vsel %vm1003, %v996, 920167782
      %v1010 = vsel %vm1002, %v993, %v1009
      %v1011 = vsel %vm1001, %v1008, %v1010
      %v1012 = vsel %vm1000, %v990, %v993
      %v1013 = vsel %vm1003, %v999, 1326507024
      %v1014 = vsel %vm1002, %v996, %v1013
      %v1015 = vsel %vm1001, %v1012, %v1014
      %v1016 = vshll.u32 %v976, 8
      %v1017 = vmul.u32.u64.compose %v1016, %v1015
      %v1018 = vextract.low.u32 %v1017
      %v1019 = vextract.high.u32 %v1017
      %v1020 = vmul.u32.u64.compose %v1016, %v1011
      %v1021 = vextract.low.u32 %v1020
      %v1022 = vextract.high.u32 %v1020
      %v1023 = vmul.u32 %v1016, %v1007
      %v1024 = vadd.s32 %v1019, %v1021
      %vm1025 = vc.u32 %v1019, %v1021
      %v1026 = vadd.s32 %v1022, 1
      %v1027 = vsel %vm1025, %v1026, %v1022
      %v1028 = vadd.s32 %v1023, %v1027
      %v1029 = vadd.s32 %v1028, 536870912
      %v1030 = vshrl.u32 %v1029, 30
      %v1031 = vshll.u32 %v1030, 30
      %v1032 = vsub.s32 %v1028, %v1031
      %vm1033 = vcmp.lt.s32.totalorder %v1032, 0
      %v1034 = vsub.s32 0, %v1032
      %v1035 = vsel %vm1033, %v1034, %v1032
      %v1036 = vclz %v1035
      %v1037 = vsub.s32 %v1036, 2
      %vm1038 = vcmp.gt.s32.totalorder 0, %v1037
      %v1039 = vsel %vm1038, 0, %v1037
      %v1040 = vsub.s32 32, %v1039
      %v1041 = vshll.u32 %v1032, %v1039
      %v1042 = vshrl.u32 %v1024, %v1040
      %v1043 = vor.u32 %v1041, %v1042
      %v1044 = vsub.s32 4294967266, %v1039
      %v1045 = vadd.s32 %v1044, 127
      %v1046 = vshll.u32 %v1045, 23
      %v1047 = vor.u32 4788187, %v1046
      %v1048 = vand.u32 2147483647, %v1047
      %v1050 = vcvt.s32.f32 %v1043
      %v1051 = vmul.f32 %v1050, %v1048
      %v1052 = vxor.u32 %v1051, 2147483648
      %v1053 = vsel %vm970, %v1052, %v1051
      %v1054 = vsub.s32 4, %v1030
      %v1055 = vsel %vm970, %v1054, %v1030
      %v1056 = vsel %vm969, %v746, %v1053
      %v1057 = vsel %vm969, 0, %v1055
      %v1058 = vcosq.f32.pop %v1056
      %v1059 = vsinq.f32.pop %v1056
      %vm1060 = vweird.f32 %v746
      %v1061 = vadd.s32 %v1057, 3
      %v1062 = vand.u32 %v1061, 3
      %vm1063 = vcmp.lt.s32.totalorder %v1062, 2
      %vm1064 = vcmp.eq.s32.totalorder %v1062, 0
      %v1065 = vxor.u32 %v1059, 2147483648
      %v1066 = vsel %vm1064, %v1058, %v1065
      %vm1067 = vcmp.eq.s32.totalorder %v1062, 2
      %v1068 = vxor.u32 %v1058, 2147483648
      %v1069 = vsel %vm1067, %v1068, %v1059
      %v1070 = vsel %vm1063, %v1066, %v1069
      %v1071 = vsel %vm1060, nan, %v1070
      %v1072 = vand.u32 2147483647, %v747
      %vm1073 = vcmp.le.f32.partialorder %v1072, 0.7853982
      %vm1074 = vcmp.lt.s32.totalorder %v747, 0
      %v1075 = vand.u32 %v747, 2139095040
      %v1076 = vshrl.u32 %v1075, 23
      %v1077 = vsub.s32 %v1076, 127
      %v1078 = vand.u32 2147483647, %v747
      %v1079 = vand.u32 %v1078, 8388607
      %v1080 = vor.u32 %v1079, 8388608
      %v1081 = vsub.s32 0, %v1080
      %v1082 = vadd.s32 %v1077, 1
      %vm1083 = vcmp.gt.s32.totalorder %v1082, 0
      %v1084 = vsel %vm1083, %v1082, 0
      %v1085 = vshrl.u32 %v1084, 5
      %v1086 = vand.u32 %v1084, 31
      %v1087 = vsub.s32 32, %v1086
      %v1088 = vshrl.u32 683565275, %v1087
      %v1089 = vshll.u32 683565275, %v1086
      %v1090 = vshrl.u32 2475754826, %v1087
      %v1091 = vor.u32 %v1089, %v1090
      %v1092 = vshll.u32 2475754826, %v1086
      %v1093 = vshrl.u32 2131351028, %v1087
      %v1094 = vor.u32 %v1092, %v1093
      %v1095 = vshll.u32 2131351028, %v1086
      %v1096 = vshrl.u32 2102212464, %v1087
      %v1097 = vor.u32 %v1095, %v1096
      %v1098 = vshll.u32 2102212464, %v1086
      %v1099 = vshrl.u32 920167782, %v1087
      %v1100 = vor.u32 %v1098, %v1099
      %v1101 = vshll.u32 920167782, %v1086
      %v1102 = vshrl.u32 1326507024, %v1087
      %v1103 = vor.u32 %v1101, %v1102
      %vm1104 = vcmp.lt.s32.totalorder %v1085, 1
      %vm1105 = vcmp.lt.s32.totalorder %v1085, 2
      %vm1106 = vcmp.lt.s32.totalorder %v1085, 3
      %vm1107 = vcmp.lt.s32.totalorder %v1085, 4
      %v1108 = vsel %vm1104, %v1088, %v1091
      %v1109 = vsel %vm1107, %v1097, 2102212464
      %v1110 = vsel %vm1106, %v1094, %v1109
      %v1111 = vsel %vm1105, %v1108, %v1110
      %v1112 = vsel %vm1104, %v1091, %v1094
      %v1113 = vsel %vm1107, %v1100, 920167782
      %v1114 = vsel %vm1106, %v1097, %v1113
      %v1115 = vsel %vm1105, %v1112, %v1114
      %v1116 = vsel %vm1104, %v1094, %v1097
      %v1117 = vsel %vm1107, %v1103, 1326507024
      %v1118 = vsel %vm1106, %v1100, %v1117
      %v1119 = vsel %vm1105, %v1116, %v1118
      %v1120 = vshll.u32 %v1080, 8
      %v1121 = vmul.u32.u64.compose %v1120, %v1119
      %v1122 = vextract.low.u32 %v1121
      %v1123 = vextract.high.u32 %v1121
      %v1124 = vmul.u32.u64.compose %v1120, %v1115
      %v1125 = vextract.low.u32 %v1124
      %v1126 = vextract.high.u32 %v1124
      %v1127 = vmul.u32 %v1120, %v1111
      %v1128 = vadd.s32 %v1123, %v1125
      %vm1129 = vc.u32 %v1123, %v1125
      %v1130 = vadd.s32 %v1126, 1
      %v1131 = vsel %vm1129, %v1130, %v1126
      %v1132 = vadd.s32 %v1127, %v1131
      %v1133 = vadd.s32 %v1132, 536870912
      %v1134 = vshrl.u32 %v1133, 30
      %v1135 = vshll.u32 %v1134, 30
      %v1136 = vsub.s32 %v1132, %v1135
      %vm1137 = vcmp.lt.s32.totalorder %v1136, 0
      %v1138 = vsub.s32 0, %v1136
      %v1139 = vsel %vm1137, %v1138, %v1136
      %v1140 = vclz %v1139
      %v1141 = vsub.s32 %v1140, 2
      %vm1142 = vcmp.gt.s32.totalorder 0, %v1141
      %v1143 = vsel %vm1142, 0, %v1141
      %v1144 = vsub.s32 32, %v1143
      %v1145 = vshll.u32 %v1136, %v1143
      %v1146 = vshrl.u32 %v1128, %v1144
      %v1147 = vor.u32 %v1145, %v1146
      %v1148 = vsub.s32 4294967266, %v1143
      %v1149 = vadd.s32 %v1148, 127
      %v1150 = vshll.u32 %v1149, 23
      %v1151 = vor.u32 4788187, %v1150
      %v1152 = vand.u32 2147483647, %v1151
      %v1154 = vcvt.s32.f32 %v1147
      %v1155 = vmul.f32 %v1154, %v1152
      %v1156 = vxor.u32 %v1155, 2147483648
      %v1157 = vsel %vm1074, %v1156, %v1155
      %v1158 = vsub.s32 4, %v1134
      %v1159 = vsel %vm1074, %v1158, %v1134
      %v1160 = vsel %vm1073, %v747, %v1157
      %v1161 = vsel %vm1073, 0, %v1159
      %v1162 = vcosq.f32.pop %v1160
      %v1163 = vsinq.f32.pop %v1160
      %vm1164 = vweird.f32 %v747
      %v1165 = vadd.s32 %v1161, 3
      %v1166 = vand.u32 %v1165, 3
      %vm1167 = vcmp.lt.s32.totalorder %v1166, 2
      %vm1168 = vcmp.eq.s32.totalorder %v1166, 0
      %v1169 = vxor.u32 %v1163, 2147483648
      %v1170 = vsel %vm1168, %v1162, %v1169
      %vm1171 = vcmp.eq.s32.totalorder %v1166, 2
      %v1172 = vxor.u32 %v1162, 2147483648
      %v1173 = vsel %vm1171, %v1172, %v1163
      %v1174 = vsel %vm1167, %v1170, %v1173
      %v1175 = vsel %vm1164, nan, %v1174
      %v1176 = vand.u32 2147483647, %v748
      %vm1177 = vcmp.le.f32.partialorder %v1176, 0.7853982
      %vm1178 = vcmp.lt.s32.totalorder %v748, 0
      %v1179 = vand.u32 %v748, 2139095040
      %v1180 = vshrl.u32 %v1179, 23
      %v1181 = vsub.s32 %v1180, 127
      %v1182 = vand.u32 2147483647, %v748
      %v1183 = vand.u32 %v1182, 8388607
      %v1184 = vor.u32 %v1183, 8388608
      %v1185 = vsub.s32 0, %v1184
      %v1186 = vadd.s32 %v1181, 1
      %vm1187 = vcmp.gt.s32.totalorder %v1186, 0
      %v1188 = vsel %vm1187, %v1186, 0
      %v1189 = vshrl.u32 %v1188, 5
      %v1190 = vand.u32 %v1188, 31
      %v1191 = vsub.s32 32, %v1190
      %v1192 = vshrl.u32 683565275, %v1191
      %v1193 = vshll.u32 683565275, %v1190
      %v1194 = vshrl.u32 2475754826, %v1191
      %v1195 = vor.u32 %v1193, %v1194
      %v1196 = vshll.u32 2475754826, %v1190
      %v1197 = vshrl.u32 2131351028, %v1191
      %v1198 = vor.u32 %v1196, %v1197
      %v1199 = vshll.u32 2131351028, %v1190
      %v1200 = vshrl.u32 2102212464, %v1191
      %v1201 = vor.u32 %v1199, %v1200
      %v1202 = vshll.u32 2102212464, %v1190
      %v1203 = vshrl.u32 920167782, %v1191
      %v1204 = vor.u32 %v1202, %v1203
      %v1205 = vshll.u32 920167782, %v1190
      %v1206 = vshrl.u32 1326507024, %v1191
      %v1207 = vor.u32 %v1205, %v1206
      %vm1208 = vcmp.lt.s32.totalorder %v1189, 1
      %vm1209 = vcmp.lt.s32.totalorder %v1189, 2
      %vm1210 = vcmp.lt.s32.totalorder %v1189, 3
      %vm1211 = vcmp.lt.s32.totalorder %v1189, 4
      %v1212 = vsel %vm1208, %v1192, %v1195
      %v1213 = vsel %vm1211, %v1201, 2102212464
      %v1214 = vsel %vm1210, %v1198, %v1213
      %v1215 = vsel %vm1209, %v1212, %v1214
      %v1216 = vsel %vm1208, %v1195, %v1198
      %v1217 = vsel %vm1211, %v1204, 920167782
      %v1218 = vsel %vm1210, %v1201, %v1217
      %v1219 = vsel %vm1209, %v1216, %v1218
      %v1220 = vsel %vm1208, %v1198, %v1201
      %v1221 = vsel %vm1211, %v1207, 1326507024
      %v1222 = vsel %vm1210, %v1204, %v1221
      %v1223 = vsel %vm1209, %v1220, %v1222
      %v1224 = vshll.u32 %v1184, 8
      %v1225 = vmul.u32.u64.compose %v1224, %v1223
      %v1226 = vextract.low.u32 %v1225
      %v1227 = vextract.high.u32 %v1225
      %v1228 = vmul.u32.u64.compose %v1224, %v1219
      %v1229 = vextract.low.u32 %v1228
      %v1230 = vextract.high.u32 %v1228
      %v1231 = vmul.u32 %v1224, %v1215
      %v1232 = vadd.s32 %v1227, %v1229
      %vm1233 = vc.u32 %v1227, %v1229
      %v1234 = vadd.s32 %v1230, 1
      %v1235 = vsel %vm1233, %v1234, %v1230
      %v1236 = vadd.s32 %v1231, %v1235
      %v1237 = vadd.s32 %v1236, 536870912
      %v1238 = vshrl.u32 %v1237, 30
      %v1239 = vshll.u32 %v1238, 30
      %v1240 = vsub.s32 %v1236, %v1239
      %vm1241 = vcmp.lt.s32.totalorder %v1240, 0
      %v1242 = vsub.s32 0, %v1240
      %v1243 = vsel %vm1241, %v1242, %v1240
      %v1244 = vclz %v1243
      %v1245 = vsub.s32 %v1244, 2
      %vm1246 = vcmp.gt.s32.totalorder 0, %v1245
      %v1247 = vsel %vm1246, 0, %v1245
      %v1248 = vsub.s32 32, %v1247
      %v1249 = vshll.u32 %v1240, %v1247
      %v1250 = vshrl.u32 %v1232, %v1248
      %v1251 = vor.u32 %v1249, %v1250
      %v1252 = vsub.s32 4294967266, %v1247
      %v1253 = vadd.s32 %v1252, 127
      %v1254 = vshll.u32 %v1253, 23
      %v1255 = vor.u32 4788187, %v1254
      %v1256 = vand.u32 2147483647, %v1255
      %v1258 = vcvt.s32.f32 %v1251
      %v1259 = vmul.f32 %v1258, %v1256
      %v1260 = vxor.u32 %v1259, 2147483648
      %v1261 = vsel %vm1178, %v1260, %v1259
      %v1262 = vsub.s32 4, %v1238
      %v1263 = vsel %vm1178, %v1262, %v1238
      %v1264 = vsel %vm1177, %v748, %v1261
      %v1265 = vsel %vm1177, 0, %v1263
      %v1266 = vcosq.f32.pop %v1264
      %v1267 = vsinq.f32.pop %v1264
      %vm1268 = vweird.f32 %v748
      %v1269 = vadd.s32 %v1265, 3
      %v1270 = vand.u32 %v1269, 3
      %vm1271 = vcmp.lt.s32.totalorder %v1270, 2
      %vm1272 = vcmp.eq.s32.totalorder %v1270, 0
      %v1273 = vxor.u32 %v1267, 2147483648
      %v1274 = vsel %vm1272, %v1266, %v1273
      %vm1275 = vcmp.eq.s32.totalorder %v1270, 2
      %v1276 = vxor.u32 %v1266, 2147483648
      %v1277 = vsel %vm1275, %v1276, %v1267
      %v1278 = vsel %vm1271, %v1274, %v1277
      %v1279 = vsel %vm1268, nan, %v1278
      %v1280 = vand.u32 2147483647, %v749
      %vm1281 = vcmp.le.f32.partialorder %v1280, 0.7853982
      %vm1282 = vcmp.lt.s32.totalorder %v749, 0
      %v1283 = vand.u32 %v749, 2139095040
      %v1284 = vshrl.u32 %v1283, 23
      %v1285 = vsub.s32 %v1284, 127
      %v1286 = vand.u32 2147483647, %v749
      %v1287 = vand.u32 %v1286, 8388607
      %v1288 = vor.u32 %v1287, 8388608
      %v1289 = vsub.s32 0, %v1288
      %v1290 = vadd.s32 %v1285, 1
      %vm1291 = vcmp.gt.s32.totalorder %v1290, 0
      %v1292 = vsel %vm1291, %v1290, 0
      %v1293 = vshrl.u32 %v1292, 5
      %v1294 = vand.u32 %v1292, 31
      %v1295 = vsub.s32 32, %v1294
      %v1296 = vshrl.u32 683565275, %v1295
      %v1297 = vshll.u32 683565275, %v1294
      %v1298 = vshrl.u32 2475754826, %v1295
      %v1299 = vor.u32 %v1297, %v1298
      %v1300 = vshll.u32 2475754826, %v1294
      %v1301 = vshrl.u32 2131351028, %v1295
      %v1302 = vor.u32 %v1300, %v1301
      %v1303 = vshll.u32 2131351028, %v1294
      %v1304 = vshrl.u32 2102212464, %v1295
      %v1305 = vor.u32 %v1303, %v1304
      %v1306 = vshll.u32 2102212464, %v1294
      %v1307 = vshrl.u32 920167782, %v1295
      %v1308 = vor.u32 %v1306, %v1307
      %v1309 = vshll.u32 920167782, %v1294
      %v1310 = vshrl.u32 1326507024, %v1295
      %v1311 = vor.u32 %v1309, %v1310
      %vm1312 = vcmp.lt.s32.totalorder %v1293, 1
      %vm1313 = vcmp.lt.s32.totalorder %v1293, 2
      %vm1314 = vcmp.lt.s32.totalorder %v1293, 3
      %vm1315 = vcmp.lt.s32.totalorder %v1293, 4
      %v1316 = vsel %vm1312, %v1296, %v1299
      %v1317 = vsel %vm1315, %v1305, 2102212464
      %v1318 = vsel %vm1314, %v1302, %v1317
      %v1319 = vsel %vm1313, %v1316, %v1318
      %v1320 = vsel %vm1312, %v1299, %v1302
      %v1321 = vsel %vm1315, %v1308, 920167782
      %v1322 = vsel %vm1314, %v1305, %v1321
      %v1323 = vsel %vm1313, %v1320, %v1322
      %v1324 = vsel %vm1312, %v1302, %v1305
      %v1325 = vsel %vm1315, %v1311, 1326507024
      %v1326 = vsel %vm1314, %v1308, %v1325
      %v1327 = vsel %vm1313, %v1324, %v1326
      %v1328 = vshll.u32 %v1288, 8
      %v1329 = vmul.u32.u64.compose %v1328, %v1327
      %v1330 = vextract.low.u32 %v1329
      %v1331 = vextract.high.u32 %v1329
      %v1332 = vmul.u32.u64.compose %v1328, %v1323
      %v1333 = vextract.low.u32 %v1332
      %v1334 = vextract.high.u32 %v1332
      %v1335 = vmul.u32 %v1328, %v1319
      %v1336 = vadd.s32 %v1331, %v1333
      %vm1337 = vc.u32 %v1331, %v1333
      %v1338 = vadd.s32 %v1334, 1
      %v1339 = vsel %vm1337, %v1338, %v1334
      %v1340 = vadd.s32 %v1335, %v1339
      %v1341 = vadd.s32 %v1340, 536870912
      %v1342 = vshrl.u32 %v1341, 30
      %v1343 = vshll.u32 %v1342, 30
      %v1344 = vsub.s32 %v1340, %v1343
      %vm1345 = vcmp.lt.s32.totalorder %v1344, 0
      %v1346 = vsub.s32 0, %v1344
      %v1347 = vsel %vm1345, %v1346, %v1344
      %v1348 = vclz %v1347
      %v1349 = vsub.s32 %v1348, 2
      %vm1350 = vcmp.gt.s32.totalorder 0, %v1349
      %v1351 = vsel %vm1350, 0, %v1349
      %v1352 = vsub.s32 32, %v1351
      %v1353 = vshll.u32 %v1344, %v1351
      %v1354 = vshrl.u32 %v1336, %v1352
      %v1355 = vor.u32 %v1353, %v1354
      %v1356 = vsub.s32 4294967266, %v1351
      %v1357 = vadd.s32 %v1356, 127
      %v1358 = vshll.u32 %v1357, 23
      %v1359 = vor.u32 4788187, %v1358
      %v1360 = vand.u32 2147483647, %v1359
      %v1362 = vcvt.s32.f32 %v1355
      %v1363 = vmul.f32 %v1362, %v1360
      %v1364 = vxor.u32 %v1363, 2147483648
      %v1365 = vsel %vm1282, %v1364, %v1363
      %v1366 = vsub.s32 4, %v1342
      %v1367 = vsel %vm1282, %v1366, %v1342
      %v1368 = vsel %vm1281, %v749, %v1365
      %v1369 = vsel %vm1281, 0, %v1367
      %v1370 = vcosq.f32.pop %v1368
      %v1371 = vsinq.f32.pop %v1368
      %vm1372 = vweird.f32 %v749
      %v1373 = vadd.s32 %v1369, 3
      %v1374 = vand.u32 %v1373, 3
      %vm1375 = vcmp.lt.s32.totalorder %v1374, 2
      %vm1376 = vcmp.eq.s32.totalorder %v1374, 0
      %v1377 = vxor.u32 %v1371, 2147483648
      %v1378 = vsel %vm1376, %v1370, %v1377
      %vm1379 = vcmp.eq.s32.totalorder %v1374, 2
      %v1380 = vxor.u32 %v1370, 2147483648
      %v1381 = vsel %vm1379, %v1380, %v1371
      %v1382 = vsel %vm1375, %v1378, %v1381
      %v1383 = vsel %vm1372, nan, %v1382
      %v1384 = vand.u32 2147483647, %v750
      %vm1385 = vcmp.le.f32.partialorder %v1384, 0.7853982
      %vm1386 = vcmp.lt.s32.totalorder %v750, 0
      %v1387 = vand.u32 %v750, 2139095040
      %v1388 = vshrl.u32 %v1387, 23
      %v1389 = vsub.s32 %v1388, 127
      %v1390 = vand.u32 2147483647, %v750
      %v1391 = vand.u32 %v1390, 8388607
      %v1392 = vor.u32 %v1391, 8388608
      %v1393 = vsub.s32 0, %v1392
      %v1394 = vadd.s32 %v1389, 1
      %vm1395 = vcmp.gt.s32.totalorder %v1394, 0
      %v1396 = vsel %vm1395, %v1394, 0
      %v1397 = vshrl.u32 %v1396, 5
      %v1398 = vand.u32 %v1396, 31
      %v1399 = vsub.s32 32, %v1398
      %v1400 = vshrl.u32 683565275, %v1399
      %v1401 = vshll.u32 683565275, %v1398
      %v1402 = vshrl.u32 2475754826, %v1399
      %v1403 = vor.u32 %v1401, %v1402
      %v1404 = vshll.u32 2475754826, %v1398
      %v1405 = vshrl.u32 2131351028, %v1399
      %v1406 = vor.u32 %v1404, %v1405
      %v1407 = vshll.u32 2131351028, %v1398
      %v1408 = vshrl.u32 2102212464, %v1399
      %v1409 = vor.u32 %v1407, %v1408
      %v1410 = vshll.u32 2102212464, %v1398
      %v1411 = vshrl.u32 920167782, %v1399
      %v1412 = vor.u32 %v1410, %v1411
      %v1413 = vshll.u32 920167782, %v1398
      %v1414 = vshrl.u32 1326507024, %v1399
      %v1415 = vor.u32 %v1413, %v1414
      %vm1416 = vcmp.lt.s32.totalorder %v1397, 1
      %vm1417 = vcmp.lt.s32.totalorder %v1397, 2
      %vm1418 = vcmp.lt.s32.totalorder %v1397, 3
      %vm1419 = vcmp.lt.s32.totalorder %v1397, 4
      %v1420 = vsel %vm1416, %v1400, %v1403
      %v1421 = vsel %vm1419, %v1409, 2102212464
      %v1422 = vsel %vm1418, %v1406, %v1421
      %v1423 = vsel %vm1417, %v1420, %v1422
      %v1424 = vsel %vm1416, %v1403, %v1406
      %v1425 = vsel %vm1419, %v1412, 920167782
      %v1426 = vsel %vm1418, %v1409, %v1425
      %v1427 = vsel %vm1417, %v1424, %v1426
      %v1428 = vsel %vm1416, %v1406, %v1409
      %v1429 = vsel %vm1419, %v1415, 1326507024
      %v1430 = vsel %vm1418, %v1412, %v1429
      %v1431 = vsel %vm1417, %v1428, %v1430
      %v1432 = vshll.u32 %v1392, 8
      %v1433 = vmul.u32.u64.compose %v1432, %v1431
      %v1434 = vextract.low.u32 %v1433
      %v1435 = vextract.high.u32 %v1433
      %v1436 = vmul.u32.u64.compose %v1432, %v1427
      %v1437 = vextract.low.u32 %v1436
      %v1438 = vextract.high.u32 %v1436
      %v1439 = vmul.u32 %v1432, %v1423
      %v1440 = vadd.s32 %v1435, %v1437
      %vm1441 = vc.u32 %v1435, %v1437
      %v1442 = vadd.s32 %v1438, 1
      %v1443 = vsel %vm1441, %v1442, %v1438
      %v1444 = vadd.s32 %v1439, %v1443
      %v1445 = vadd.s32 %v1444, 536870912
      %v1446 = vshrl.u32 %v1445, 30
      %v1447 = vshll.u32 %v1446, 30
      %v1448 = vsub.s32 %v1444, %v1447
      %vm1449 = vcmp.lt.s32.totalorder %v1448, 0
      %v1450 = vsub.s32 0, %v1448
      %v1451 = vsel %vm1449, %v1450, %v1448
      %v1452 = vclz %v1451
      %v1453 = vsub.s32 %v1452, 2
      %vm1454 = vcmp.gt.s32.totalorder 0, %v1453
      %v1455 = vsel %vm1454, 0, %v1453
      %v1456 = vsub.s32 32, %v1455
      %v1457 = vshll.u32 %v1448, %v1455
      %v1458 = vshrl.u32 %v1440, %v1456
      %v1459 = vor.u32 %v1457, %v1458
      %v1460 = vsub.s32 4294967266, %v1455
      %v1461 = vadd.s32 %v1460, 127
      %v1462 = vshll.u32 %v1461, 23
      %v1463 = vor.u32 4788187, %v1462
      %v1464 = vand.u32 2147483647, %v1463
      %v1466 = vcvt.s32.f32 %v1459
      %v1467 = vmul.f32 %v1466, %v1464
      %v1468 = vxor.u32 %v1467, 2147483648
      %v1469 = vsel %vm1386, %v1468, %v1467
      %v1470 = vsub.s32 4, %v1446
      %v1471 = vsel %vm1386, %v1470, %v1446
      %v1472 = vsel %vm1385, %v750, %v1469
      %v1473 = vsel %vm1385, 0, %v1471
      %v1474 = vcosq.f32.pop %v1472
      %v1475 = vsinq.f32.pop %v1472
      %vm1476 = vweird.f32 %v750
      %v1477 = vadd.s32 %v1473, 3
      %v1478 = vand.u32 %v1477, 3
      %vm1479 = vcmp.lt.s32.totalorder %v1478, 2
      %vm1480 = vcmp.eq.s32.totalorder %v1478, 0
      %v1481 = vxor.u32 %v1475, 2147483648
      %v1482 = vsel %vm1480, %v1474, %v1481
      %vm1483 = vcmp.eq.s32.totalorder %v1478, 2
      %v1484 = vxor.u32 %v1474, 2147483648
      %v1485 = vsel %vm1483, %v1484, %v1475
      %v1486 = vsel %vm1479, %v1482, %v1485
      %v1487 = vsel %vm1476, nan, %v1486
      %v1488 = vand.u32 2147483647, %v751
      %vm1489 = vcmp.le.f32.partialorder %v1488, 0.7853982
      %vm1490 = vcmp.lt.s32.totalorder %v751, 0
      %v1491 = vand.u32 %v751, 2139095040
      %v1492 = vshrl.u32 %v1491, 23
      %v1493 = vsub.s32 %v1492, 127
      %v1494 = vand.u32 2147483647, %v751
      %v1495 = vand.u32 %v1494, 8388607
      %v1496 = vor.u32 %v1495, 8388608
      %v1497 = vsub.s32 0, %v1496
      %v1498 = vadd.s32 %v1493, 1
      %vm1499 = vcmp.gt.s32.totalorder %v1498, 0
      %v1500 = vsel %vm1499, %v1498, 0
      %v1501 = vshrl.u32 %v1500, 5
      %v1502 = vand.u32 %v1500, 31
      %v1503 = vsub.s32 32, %v1502
      %v1504 = vshrl.u32 683565275, %v1503
      %v1505 = vshll.u32 683565275, %v1502
      %v1506 = vshrl.u32 2475754826, %v1503
      %v1507 = vor.u32 %v1505, %v1506
      %v1508 = vshll.u32 2475754826, %v1502
      %v1509 = vshrl.u32 2131351028, %v1503
      %v1510 = vor.u32 %v1508, %v1509
      %v1511 = vshll.u32 2131351028, %v1502
      %v1512 = vshrl.u32 2102212464, %v1503
      %v1513 = vor.u32 %v1511, %v1512
      %v1514 = vshll.u32 2102212464, %v1502
      %v1515 = vshrl.u32 920167782, %v1503
      %v1516 = vor.u32 %v1514, %v1515
      %v1517 = vshll.u32 920167782, %v1502
      %v1518 = vshrl.u32 1326507024, %v1503
      %v1519 = vor.u32 %v1517, %v1518
      %vm1520 = vcmp.lt.s32.totalorder %v1501, 1
      %vm1521 = vcmp.lt.s32.totalorder %v1501, 2
      %vm1522 = vcmp.lt.s32.totalorder %v1501, 3
      %vm1523 = vcmp.lt.s32.totalorder %v1501, 4
      %v1524 = vsel %vm1520, %v1504, %v1507
      %v1525 = vsel %vm1523, %v1513, 2102212464
      %v1526 = vsel %vm1522, %v1510, %v1525
      %v1527 = vsel %vm1521, %v1524, %v1526
      %v1528 = vsel %vm1520, %v1507, %v1510
      %v1529 = vsel %vm1523, %v1516, 920167782
      %v1530 = vsel %vm1522, %v1513, %v1529
      %v1531 = vsel %vm1521, %v1528, %v1530
      %v1532 = vsel %vm1520, %v1510, %v1513
      %v1533 = vsel %vm1523, %v1519, 1326507024
      %v1534 = vsel %vm1522, %v1516, %v1533
      %v1535 = vsel %vm1521, %v1532, %v1534
      %v1536 = vshll.u32 %v1496, 8
      %v1537 = vmul.u32.u64.compose %v1536, %v1535
      %v1538 = vextract.low.u32 %v1537
      %v1539 = vextract.high.u32 %v1537
      %v1540 = vmul.u32.u64.compose %v1536, %v1531
      %v1541 = vextract.low.u32 %v1540
      %v1542 = vextract.high.u32 %v1540
      %v1543 = vmul.u32 %v1536, %v1527
      %v1544 = vadd.s32 %v1539, %v1541
      %vm1545 = vc.u32 %v1539, %v1541
      %v1546 = vadd.s32 %v1542, 1
      %v1547 = vsel %vm1545, %v1546, %v1542
      %v1548 = vadd.s32 %v1543, %v1547
      %v1549 = vadd.s32 %v1548, 536870912
      %v1550 = vshrl.u32 %v1549, 30
      %v1551 = vshll.u32 %v1550, 30
      %v1552 = vsub.s32 %v1548, %v1551
      %vm1553 = vcmp.lt.s32.totalorder %v1552, 0
      %v1554 = vsub.s32 0, %v1552
      %v1555 = vsel %vm1553, %v1554, %v1552
      %v1556 = vclz %v1555
      %v1557 = vsub.s32 %v1556, 2
      %vm1558 = vcmp.gt.s32.totalorder 0, %v1557
      %v1559 = vsel %vm1558, 0, %v1557
      %v1560 = vsub.s32 32, %v1559
      %v1561 = vshll.u32 %v1552, %v1559
      %v1562 = vshrl.u32 %v1544, %v1560
      %v1563 = vor.u32 %v1561, %v1562
      %v1564 = vsub.s32 4294967266, %v1559
      %v1565 = vadd.s32 %v1564, 127
      %v1566 = vshll.u32 %v1565, 23
      %v1567 = vor.u32 4788187, %v1566
      %v1568 = vand.u32 2147483647, %v1567
      %v1570 = vcvt.s32.f32 %v1563
      %v1571 = vmul.f32 %v1570, %v1568
      %v1572 = vxor.u32 %v1571, 2147483648
      %v1573 = vsel %vm1490, %v1572, %v1571
      %v1574 = vsub.s32 4, %v1550
      %v1575 = vsel %vm1490, %v1574, %v1550
      %v1576 = vsel %vm1489, %v751, %v1573
      %v1577 = vsel %vm1489, 0, %v1575
      %v1578 = vcosq.f32.pop %v1576
      %v1579 = vsinq.f32.pop %v1576
      %vm1580 = vweird.f32 %v751
      %v1581 = vadd.s32 %v1577, 3
      %v1582 = vand.u32 %v1581, 3
      %vm1583 = vcmp.lt.s32.totalorder %v1582, 2
      %vm1584 = vcmp.eq.s32.totalorder %v1582, 0
      %v1585 = vxor.u32 %v1579, 2147483648
      %v1586 = vsel %vm1584, %v1578, %v1585
      %vm1587 = vcmp.eq.s32.totalorder %v1582, 2
      %v1588 = vxor.u32 %v1578, 2147483648
      %v1589 = vsel %vm1587, %v1588, %v1579
      %v1590 = vsel %vm1583, %v1586, %v1589
      %v1591 = vsel %vm1580, nan, %v1590
      %v1592 = vand.u32 2147483647, %v752
      %vm1593 = vcmp.le.f32.partialorder %v1592, 0.7853982
      %vm1594 = vcmp.lt.s32.totalorder %v752, 0
      %v1595 = vand.u32 %v752, 2139095040
      %v1596 = vshrl.u32 %v1595, 23
      %v1597 = vsub.s32 %v1596, 127
      %v1598 = vand.u32 2147483647, %v752
      %v1599 = vand.u32 %v1598, 8388607
      %v1600 = vor.u32 %v1599, 8388608
      %v1601 = vsub.s32 0, %v1600
      %v1602 = vadd.s32 %v1597, 1
      %vm1603 = vcmp.gt.s32.totalorder %v1602, 0
      %v1604 = vsel %vm1603, %v1602, 0
      %v1605 = vshrl.u32 %v1604, 5
      %v1606 = vand.u32 %v1604, 31
      %v1607 = vsub.s32 32, %v1606
      %v1608 = vshrl.u32 683565275, %v1607
      %v1609 = vshll.u32 683565275, %v1606
      %v1610 = vshrl.u32 2475754826, %v1607
      %v1611 = vor.u32 %v1609, %v1610
      %v1612 = vshll.u32 2475754826, %v1606
      %v1613 = vshrl.u32 2131351028, %v1607
      %v1614 = vor.u32 %v1612, %v1613
      %v1615 = vshll.u32 2131351028, %v1606
      %v1616 = vshrl.u32 2102212464, %v1607
      %v1617 = vor.u32 %v1615, %v1616
      %v1618 = vshll.u32 2102212464, %v1606
      %v1619 = vshrl.u32 920167782, %v1607
      %v1620 = vor.u32 %v1618, %v1619
      %v1621 = vshll.u32 920167782, %v1606
      %v1622 = vshrl.u32 1326507024, %v1607
      %v1623 = vor.u32 %v1621, %v1622
      %vm1624 = vcmp.lt.s32.totalorder %v1605, 1
      %vm1625 = vcmp.lt.s32.totalorder %v1605, 2
      %vm1626 = vcmp.lt.s32.totalorder %v1605, 3
      %vm1627 = vcmp.lt.s32.totalorder %v1605, 4
      %v1628 = vsel %vm1624, %v1608, %v1611
      %v1629 = vsel %vm1627, %v1617, 2102212464
      %v1630 = vsel %vm1626, %v1614, %v1629
      %v1631 = vsel %vm1625, %v1628, %v1630
      %v1632 = vsel %vm1624, %v1611, %v1614
      %v1633 = vsel %vm1627, %v1620, 920167782
      %v1634 = vsel %vm1626, %v1617, %v1633
      %v1635 = vsel %vm1625, %v1632, %v1634
      %v1636 = vsel %vm1624, %v1614, %v1617
      %v1637 = vsel %vm1627, %v1623, 1326507024
      %v1638 = vsel %vm1626, %v1620, %v1637
      %v1639 = vsel %vm1625, %v1636, %v1638
      %v1640 = vshll.u32 %v1600, 8
      %v1641 = vmul.u32.u64.compose %v1640, %v1639
      %v1642 = vextract.low.u32 %v1641
      %v1643 = vextract.high.u32 %v1641
      %v1644 = vmul.u32.u64.compose %v1640, %v1635
      %v1645 = vextract.low.u32 %v1644
      %v1646 = vextract.high.u32 %v1644
      %v1647 = vmul.u32 %v1640, %v1631
      %v1648 = vadd.s32 %v1643, %v1645
      %vm1649 = vc.u32 %v1643, %v1645
      %v1650 = vadd.s32 %v1646, 1
      %v1651 = vsel %vm1649, %v1650, %v1646
      %v1652 = vadd.s32 %v1647, %v1651
      %v1653 = vadd.s32 %v1652, 536870912
      %v1654 = vshrl.u32 %v1653, 30
      %v1655 = vshll.u32 %v1654, 30
      %v1656 = vsub.s32 %v1652, %v1655
      %vm1657 = vcmp.lt.s32.totalorder %v1656, 0
      %v1658 = vsub.s32 0, %v1656
      %v1659 = vsel %vm1657, %v1658, %v1656
      %v1660 = vclz %v1659
      %v1661 = vsub.s32 %v1660, 2
      %vm1662 = vcmp.gt.s32.totalorder 0, %v1661
      %v1663 = vsel %vm1662, 0, %v1661
      %v1664 = vsub.s32 32, %v1663
      %v1665 = vshll.u32 %v1656, %v1663
      %v1666 = vshrl.u32 %v1648, %v1664
      %v1667 = vor.u32 %v1665, %v1666
      %v1668 = vsub.s32 4294967266, %v1663
      %v1669 = vadd.s32 %v1668, 127
      %v1670 = vshll.u32 %v1669, 23
      %v1671 = vor.u32 4788187, %v1670
      %v1672 = vand.u32 2147483647, %v1671
      %v1674 = vcvt.s32.f32 %v1667
      %v1675 = vmul.f32 %v1674, %v1672
      %v1676 = vxor.u32 %v1675, 2147483648
      %v1677 = vsel %vm1594, %v1676, %v1675
      %v1678 = vsub.s32 4, %v1654
      %v1679 = vsel %vm1594, %v1678, %v1654
      %v1680 = vsel %vm1593, %v752, %v1677
      %v1681 = vsel %vm1593, 0, %v1679
      %v1682 = vcosq.f32.pop %v1680
      %v1683 = vsinq.f32.pop %v1680
      %vm1684 = vweird.f32 %v752
      %v1685 = vadd.s32 %v1681, 3
      %v1686 = vand.u32 %v1685, 3
      %vm1687 = vcmp.lt.s32.totalorder %v1686, 2
      %vm1688 = vcmp.eq.s32.totalorder %v1686, 0
      %v1689 = vxor.u32 %v1683, 2147483648
      %v1690 = vsel %vm1688, %v1682, %v1689
      %vm1691 = vcmp.eq.s32.totalorder %v1686, 2
      %v1692 = vxor.u32 %v1682, 2147483648
      %v1693 = vsel %vm1691, %v1692, %v1683
      %v1694 = vsel %vm1687, %v1690, %v1693
      %v1695 = vsel %vm1684, nan, %v1694
      %v1696 = vand.u32 2147483647, %v753
      %vm1697 = vcmp.le.f32.partialorder %v1696, 0.7853982
      %vm1698 = vcmp.lt.s32.totalorder %v753, 0
      %v1699 = vand.u32 %v753, 2139095040
      %v1700 = vshrl.u32 %v1699, 23
      %v1701 = vsub.s32 %v1700, 127
      %v1702 = vand.u32 2147483647, %v753
      %v1703 = vand.u32 %v1702, 8388607
      %v1704 = vor.u32 %v1703, 8388608
      %v1705 = vsub.s32 0, %v1704
      %v1706 = vadd.s32 %v1701, 1
      %vm1707 = vcmp.gt.s32.totalorder %v1706, 0
      %v1708 = vsel %vm1707, %v1706, 0
      %v1709 = vshrl.u32 %v1708, 5
      %v1710 = vand.u32 %v1708, 31
      %v1711 = vsub.s32 32, %v1710
      %v1712 = vshrl.u32 683565275, %v1711
      %v1713 = vshll.u32 683565275, %v1710
      %v1714 = vshrl.u32 2475754826, %v1711
      %v1715 = vor.u32 %v1713, %v1714
      %v1716 = vshll.u32 2475754826, %v1710
      %v1717 = vshrl.u32 2131351028, %v1711
      %v1718 = vor.u32 %v1716, %v1717
      %v1719 = vshll.u32 2131351028, %v1710
      %v1720 = vshrl.u32 2102212464, %v1711
      %v1721 = vor.u32 %v1719, %v1720
      %v1722 = vshll.u32 2102212464, %v1710
      %v1723 = vshrl.u32 920167782, %v1711
      %v1724 = vor.u32 %v1722, %v1723
      %v1725 = vshll.u32 920167782, %v1710
      %v1726 = vshrl.u32 1326507024, %v1711
      %v1727 = vor.u32 %v1725, %v1726
      %vm1728 = vcmp.lt.s32.totalorder %v1709, 1
      %vm1729 = vcmp.lt.s32.totalorder %v1709, 2
      %vm1730 = vcmp.lt.s32.totalorder %v1709, 3
      %vm1731 = vcmp.lt.s32.totalorder %v1709, 4
      %v1732 = vsel %vm1728, %v1712, %v1715
      %v1733 = vsel %vm1731, %v1721, 2102212464
      %v1734 = vsel %vm1730, %v1718, %v1733
      %v1735 = vsel %vm1729, %v1732, %v1734
      %v1736 = vsel %vm1728, %v1715, %v1718
      %v1737 = vsel %vm1731, %v1724, 920167782
      %v1738 = vsel %vm1730, %v1721, %v1737
      %v1739 = vsel %vm1729, %v1736, %v1738
      %v1740 = vsel %vm1728, %v1718, %v1721
      %v1741 = vsel %vm1731, %v1727, 1326507024
      %v1742 = vsel %vm1730, %v1724, %v1741
      %v1743 = vsel %vm1729, %v1740, %v1742
      %v1744 = vshll.u32 %v1704, 8
      %v1745 = vmul.u32.u64.compose %v1744, %v1743
      %v1746 = vextract.low.u32 %v1745
      %v1747 = vextract.high.u32 %v1745
      %v1748 = vmul.u32.u64.compose %v1744, %v1739
      %v1749 = vextract.low.u32 %v1748
      %v1750 = vextract.high.u32 %v1748
      %v1751 = vmul.u32 %v1744, %v1735
      %v1752 = vadd.s32 %v1747, %v1749
      %vm1753 = vc.u32 %v1747, %v1749
      %v1754 = vadd.s32 %v1750, 1
      %v1755 = vsel %vm1753, %v1754, %v1750
      %v1756 = vadd.s32 %v1751, %v1755
      %v1757 = vadd.s32 %v1756, 536870912
      %v1758 = vshrl.u32 %v1757, 30
      %v1759 = vshll.u32 %v1758, 30
      %v1760 = vsub.s32 %v1756, %v1759
      %vm1761 = vcmp.lt.s32.totalorder %v1760, 0
      %v1762 = vsub.s32 0, %v1760
      %v1763 = vsel %vm1761, %v1762, %v1760
      %v1764 = vclz %v1763
      %v1765 = vsub.s32 %v1764, 2
      %vm1766 = vcmp.gt.s32.totalorder 0, %v1765
      %v1767 = vsel %vm1766, 0, %v1765
      %v1768 = vsub.s32 32, %v1767
      %v1769 = vshll.u32 %v1760, %v1767
      %v1770 = vshrl.u32 %v1752, %v1768
      %v1771 = vor.u32 %v1769, %v1770
      %v1772 = vsub.s32 4294967266, %v1767
      %v1773 = vadd.s32 %v1772, 127
      %v1774 = vshll.u32 %v1773, 23
      %v1775 = vor.u32 4788187, %v1774
      %v1776 = vand.u32 2147483647, %v1775
      %v1778 = vcvt.s32.f32 %v1771
      %v1779 = vmul.f32 %v1778, %v1776
      %v1780 = vxor.u32 %v1779, 2147483648
      %v1781 = vsel %vm1698, %v1780, %v1779
      %v1782 = vsub.s32 4, %v1758
      %v1783 = vsel %vm1698, %v1782, %v1758
      %v1784 = vsel %vm1697, %v753, %v1781
      %v1785 = vsel %vm1697, 0, %v1783
      %v1786 = vcosq.f32.pop %v1784
      %v1787 = vsinq.f32.pop %v1784
      %vm1788 = vweird.f32 %v753
      %v1789 = vadd.s32 %v1785, 3
      %v1790 = vand.u32 %v1789, 3
      %vm1791 = vcmp.lt.s32.totalorder %v1790, 2
      %vm1792 = vcmp.eq.s32.totalorder %v1790, 0
      %v1793 = vxor.u32 %v1787, 2147483648
      %v1794 = vsel %vm1792, %v1786, %v1793
      %vm1795 = vcmp.eq.s32.totalorder %v1790, 2
      %v1796 = vxor.u32 %v1786, 2147483648
      %v1797 = vsel %vm1795, %v1796, %v1787
      %v1798 = vsel %vm1791, %v1794, %v1797
      %v1799 = vsel %vm1788, nan, %v1798
      %v1800 = vand.u32 2147483647, %v754
      %vm1801 = vcmp.le.f32.partialorder %v1800, 0.7853982
      %vm1802 = vcmp.lt.s32.totalorder %v754, 0
      %v1803 = vand.u32 %v754, 2139095040
      %v1804 = vshrl.u32 %v1803, 23
      %v1805 = vsub.s32 %v1804, 127
      %v1806 = vand.u32 2147483647, %v754
      %v1807 = vand.u32 %v1806, 8388607
      %v1808 = vor.u32 %v1807, 8388608
      %v1809 = vsub.s32 0, %v1808
      %v1810 = vadd.s32 %v1805, 1
      %vm1811 = vcmp.gt.s32.totalorder %v1810, 0
      %v1812 = vsel %vm1811, %v1810, 0
      %v1813 = vshrl.u32 %v1812, 5
      %v1814 = vand.u32 %v1812, 31
      %v1815 = vsub.s32 32, %v1814
      %v1816 = vshrl.u32 683565275, %v1815
      %v1817 = vshll.u32 683565275, %v1814
      %v1818 = vshrl.u32 2475754826, %v1815
      %v1819 = vor.u32 %v1817, %v1818
      %v1820 = vshll.u32 2475754826, %v1814
      %v1821 = vshrl.u32 2131351028, %v1815
      %v1822 = vor.u32 %v1820, %v1821
      %v1823 = vshll.u32 2131351028, %v1814
      %v1824 = vshrl.u32 2102212464, %v1815
      %v1825 = vor.u32 %v1823, %v1824
      %v1826 = vshll.u32 2102212464, %v1814
      %v1827 = vshrl.u32 920167782, %v1815
      %v1828 = vor.u32 %v1826, %v1827
      %v1829 = vshll.u32 920167782, %v1814
      %v1830 = vshrl.u32 1326507024, %v1815
      %v1831 = vor.u32 %v1829, %v1830
      %vm1832 = vcmp.lt.s32.totalorder %v1813, 1
      %vm1833 = vcmp.lt.s32.totalorder %v1813, 2
      %vm1834 = vcmp.lt.s32.totalorder %v1813, 3
      %vm1835 = vcmp.lt.s32.totalorder %v1813, 4
      %v1836 = vsel %vm1832, %v1816, %v1819
      %v1837 = vsel %vm1835, %v1825, 2102212464
      %v1838 = vsel %vm1834, %v1822, %v1837
      %v1839 = vsel %vm1833, %v1836, %v1838
      %v1840 = vsel %vm1832, %v1819, %v1822
      %v1841 = vsel %vm1835, %v1828, 920167782
      %v1842 = vsel %vm1834, %v1825, %v1841
      %v1843 = vsel %vm1833, %v1840, %v1842
      %v1844 = vsel %vm1832, %v1822, %v1825
      %v1845 = vsel %vm1835, %v1831, 1326507024
      %v1846 = vsel %vm1834, %v1828, %v1845
      %v1847 = vsel %vm1833, %v1844, %v1846
      %v1848 = vshll.u32 %v1808, 8
      %v1849 = vmul.u32.u64.compose %v1848, %v1847
      %v1850 = vextract.low.u32 %v1849
      %v1851 = vextract.high.u32 %v1849
      %v1852 = vmul.u32.u64.compose %v1848, %v1843
      %v1853 = vextract.low.u32 %v1852
      %v1854 = vextract.high.u32 %v1852
      %v1855 = vmul.u32 %v1848, %v1839
      %v1856 = vadd.s32 %v1851, %v1853
      %vm1857 = vc.u32 %v1851, %v1853
      %v1858 = vadd.s32 %v1854, 1
      %v1859 = vsel %vm1857, %v1858, %v1854
      %v1860 = vadd.s32 %v1855, %v1859
      %v1861 = vadd.s32 %v1860, 536870912
      %v1862 = vshrl.u32 %v1861, 30
      %v1863 = vshll.u32 %v1862, 30
      %v1864 = vsub.s32 %v1860, %v1863
      %vm1865 = vcmp.lt.s32.totalorder %v1864, 0
      %v1866 = vsub.s32 0, %v1864
      %v1867 = vsel %vm1865, %v1866, %v1864
      %v1868 = vclz %v1867
      %v1869 = vsub.s32 %v1868, 2
      %vm1870 = vcmp.gt.s32.totalorder 0, %v1869
      %v1871 = vsel %vm1870, 0, %v1869
      %v1872 = vsub.s32 32, %v1871
      %v1873 = vshll.u32 %v1864, %v1871
      %v1874 = vshrl.u32 %v1856, %v1872
      %v1875 = vor.u32 %v1873, %v1874
      %v1876 = vsub.s32 4294967266, %v1871
      %v1877 = vadd.s32 %v1876, 127
      %v1878 = vshll.u32 %v1877, 23
      %v1879 = vor.u32 4788187, %v1878
      %v1880 = vand.u32 2147483647, %v1879
      %v1882 = vcvt.s32.f32 %v1875
      %v1883 = vmul.f32 %v1882, %v1880
      %v1884 = vxor.u32 %v1883, 2147483648
      %v1885 = vsel %vm1802, %v1884, %v1883
      %v1886 = vsub.s32 4, %v1862
      %v1887 = vsel %vm1802, %v1886, %v1862
      %v1888 = vsel %vm1801, %v754, %v1885
      %v1889 = vsel %vm1801, 0, %v1887
      %v1890 = vcosq.f32.pop %v1888
      %v1891 = vsinq.f32.pop %v1888
      %vm1892 = vweird.f32 %v754
      %v1893 = vadd.s32 %v1889, 3
      %v1894 = vand.u32 %v1893, 3
      %vm1895 = vcmp.lt.s32.totalorder %v1894, 2
      %vm1896 = vcmp.eq.s32.totalorder %v1894, 0
      %v1897 = vxor.u32 %v1891, 2147483648
      %v1898 = vsel %vm1896, %v1890, %v1897
      %vm1899 = vcmp.eq.s32.totalorder %v1894, 2
      %v1900 = vxor.u32 %v1890, 2147483648
      %v1901 = vsel %vm1899, %v1900, %v1891
      %v1902 = vsel %vm1895, %v1898, %v1901
      %v1903 = vsel %vm1892, nan, %v1902
      %v1904 = vand.u32 2147483647, %v755
      %vm1905 = vcmp.le.f32.partialorder %v1904, 0.7853982
      %vm1906 = vcmp.lt.s32.totalorder %v755, 0
      %v1907 = vand.u32 %v755, 2139095040
      %v1908 = vshrl.u32 %v1907, 23
      %v1909 = vsub.s32 %v1908, 127
      %v1910 = vand.u32 2147483647, %v755
      %v1911 = vand.u32 %v1910, 8388607
      %v1912 = vor.u32 %v1911, 8388608
      %v1913 = vsub.s32 0, %v1912
      %v1914 = vadd.s32 %v1909, 1
      %vm1915 = vcmp.gt.s32.totalorder %v1914, 0
      %v1916 = vsel %vm1915, %v1914, 0
      %v1917 = vshrl.u32 %v1916, 5
      %v1918 = vand.u32 %v1916, 31
      %v1919 = vsub.s32 32, %v1918
      %v1920 = vshrl.u32 683565275, %v1919
      %v1921 = vshll.u32 683565275, %v1918
      %v1922 = vshrl.u32 2475754826, %v1919
      %v1923 = vor.u32 %v1921, %v1922
      %v1924 = vshll.u32 2475754826, %v1918
      %v1925 = vshrl.u32 2131351028, %v1919
      %v1926 = vor.u32 %v1924, %v1925
      %v1927 = vshll.u32 2131351028, %v1918
      %v1928 = vshrl.u32 2102212464, %v1919
      %v1929 = vor.u32 %v1927, %v1928
      %v1930 = vshll.u32 2102212464, %v1918
      %v1931 = vshrl.u32 920167782, %v1919
      %v1932 = vor.u32 %v1930, %v1931
      %v1933 = vshll.u32 920167782, %v1918
      %v1934 = vshrl.u32 1326507024, %v1919
      %v1935 = vor.u32 %v1933, %v1934
      %vm1936 = vcmp.lt.s32.totalorder %v1917, 1
      %vm1937 = vcmp.lt.s32.totalorder %v1917, 2
      %vm1938 = vcmp.lt.s32.totalorder %v1917, 3
      %vm1939 = vcmp.lt.s32.totalorder %v1917, 4
      %v1940 = vsel %vm1936, %v1920, %v1923
      %v1941 = vsel %vm1939, %v1929, 2102212464
      %v1942 = vsel %vm1938, %v1926, %v1941
      %v1943 = vsel %vm1937, %v1940, %v1942
      %v1944 = vsel %vm1936, %v1923, %v1926
      %v1945 = vsel %vm1939, %v1932, 920167782
      %v1946 = vsel %vm1938, %v1929, %v1945
      %v1947 = vsel %vm1937, %v1944, %v1946
      %v1948 = vsel %vm1936, %v1926, %v1929
      %v1949 = vsel %vm1939, %v1935, 1326507024
      %v1950 = vsel %vm1938, %v1932, %v1949
      %v1951 = vsel %vm1937, %v1948, %v1950
      %v1952 = vshll.u32 %v1912, 8
      %v1953 = vmul.u32.u64.compose %v1952, %v1951
      %v1954 = vextract.low.u32 %v1953
      %v1955 = vextract.high.u32 %v1953
      %v1956 = vmul.u32.u64.compose %v1952, %v1947
      %v1957 = vextract.low.u32 %v1956
      %v1958 = vextract.high.u32 %v1956
      %v1959 = vmul.u32 %v1952, %v1943
      %v1960 = vadd.s32 %v1955, %v1957
      %vm1961 = vc.u32 %v1955, %v1957
      %v1962 = vadd.s32 %v1958, 1
      %v1963 = vsel %vm1961, %v1962, %v1958
      %v1964 = vadd.s32 %v1959, %v1963
      %v1965 = vadd.s32 %v1964, 536870912
      %v1966 = vshrl.u32 %v1965, 30
      %v1967 = vshll.u32 %v1966, 30
      %v1968 = vsub.s32 %v1964, %v1967
      %vm1969 = vcmp.lt.s32.totalorder %v1968, 0
      %v1970 = vsub.s32 0, %v1968
      %v1971 = vsel %vm1969, %v1970, %v1968
      %v1972 = vclz %v1971
      %v1973 = vsub.s32 %v1972, 2
      %vm1974 = vcmp.gt.s32.totalorder 0, %v1973
      %v1975 = vsel %vm1974, 0, %v1973
      %v1976 = vsub.s32 32, %v1975
      %v1977 = vshll.u32 %v1968, %v1975
      %v1978 = vshrl.u32 %v1960, %v1976
      %v1979 = vor.u32 %v1977, %v1978
      %v1980 = vsub.s32 4294967266, %v1975
      %v1981 = vadd.s32 %v1980, 127
      %v1982 = vshll.u32 %v1981, 23
      %v1983 = vor.u32 4788187, %v1982
      %v1984 = vand.u32 2147483647, %v1983
      %v1986 = vcvt.s32.f32 %v1979
      %v1987 = vmul.f32 %v1986, %v1984
      %v1988 = vxor.u32 %v1987, 2147483648
      %v1989 = vsel %vm1906, %v1988, %v1987
      %v1990 = vsub.s32 4, %v1966
      %v1991 = vsel %vm1906, %v1990, %v1966
      %v1992 = vsel %vm1905, %v755, %v1989
      %v1993 = vsel %vm1905, 0, %v1991
      %v1994 = vcosq.f32.pop %v1992
      %v1995 = vsinq.f32.pop %v1992
      %vm1996 = vweird.f32 %v755
      %v1997 = vadd.s32 %v1993, 3
      %v1998 = vand.u32 %v1997, 3
      %vm1999 = vcmp.lt.s32.totalorder %v1998, 2
      %vm2000 = vcmp.eq.s32.totalorder %v1998, 0
      %v2001 = vxor.u32 %v1995, 2147483648
      %v2002 = vsel %vm2000, %v1994, %v2001
      %vm2003 = vcmp.eq.s32.totalorder %v1998, 2
      %v2004 = vxor.u32 %v1994, 2147483648
      %v2005 = vsel %vm2003, %v2004, %v1995
      %v2006 = vsel %vm1999, %v2002, %v2005
      %v2007 = vsel %vm1996, nan, %v2006
      %v2008 = vand.u32 2147483647, %v756
      %vm2009 = vcmp.le.f32.partialorder %v2008, 0.7853982
      %vm2010 = vcmp.lt.s32.totalorder %v756, 0
      %v2011 = vand.u32 %v756, 2139095040
      %v2012 = vshrl.u32 %v2011, 23
      %v2013 = vsub.s32 %v2012, 127
      %v2014 = vand.u32 2147483647, %v756
      %v2015 = vand.u32 %v2014, 8388607
      %v2016 = vor.u32 %v2015, 8388608
      %v2017 = vsub.s32 0, %v2016
      %v2018 = vadd.s32 %v2013, 1
      %vm2019 = vcmp.gt.s32.totalorder %v2018, 0
      %v2020 = vsel %vm2019, %v2018, 0
      %v2021 = vshrl.u32 %v2020, 5
      %v2022 = vand.u32 %v2020, 31
      %v2023 = vsub.s32 32, %v2022
      %v2024 = vshrl.u32 683565275, %v2023
      %v2025 = vshll.u32 683565275, %v2022
      %v2026 = vshrl.u32 2475754826, %v2023
      %v2027 = vor.u32 %v2025, %v2026
      %v2028 = vshll.u32 2475754826, %v2022
      %v2029 = vshrl.u32 2131351028, %v2023
      %v2030 = vor.u32 %v2028, %v2029
      %v2031 = vshll.u32 2131351028, %v2022
      %v2032 = vshrl.u32 2102212464, %v2023
      %v2033 = vor.u32 %v2031, %v2032
      %v2034 = vshll.u32 2102212464, %v2022
      %v2035 = vshrl.u32 920167782, %v2023
      %v2036 = vor.u32 %v2034, %v2035
      %v2037 = vshll.u32 920167782, %v2022
      %v2038 = vshrl.u32 1326507024, %v2023
      %v2039 = vor.u32 %v2037, %v2038
      %vm2040 = vcmp.lt.s32.totalorder %v2021, 1
      %vm2041 = vcmp.lt.s32.totalorder %v2021, 2
      %vm2042 = vcmp.lt.s32.totalorder %v2021, 3
      %vm2043 = vcmp.lt.s32.totalorder %v2021, 4
      %v2044 = vsel %vm2040, %v2024, %v2027
      %v2045 = vsel %vm2043, %v2033, 2102212464
      %v2046 = vsel %vm2042, %v2030, %v2045
      %v2047 = vsel %vm2041, %v2044, %v2046
      %v2048 = vsel %vm2040, %v2027, %v2030
      %v2049 = vsel %vm2043, %v2036, 920167782
      %v2050 = vsel %vm2042, %v2033, %v2049
      %v2051 = vsel %vm2041, %v2048, %v2050
      %v2052 = vsel %vm2040, %v2030, %v2033
      %v2053 = vsel %vm2043, %v2039, 1326507024
      %v2054 = vsel %vm2042, %v2036, %v2053
      %v2055 = vsel %vm2041, %v2052, %v2054
      %v2056 = vshll.u32 %v2016, 8
      %v2057 = vmul.u32.u64.compose %v2056, %v2055
      %v2058 = vextract.low.u32 %v2057
      %v2059 = vextract.high.u32 %v2057
      %v2060 = vmul.u32.u64.compose %v2056, %v2051
      %v2061 = vextract.low.u32 %v2060
      %v2062 = vextract.high.u32 %v2060
      %v2063 = vmul.u32 %v2056, %v2047
      %v2064 = vadd.s32 %v2059, %v2061
      %vm2065 = vc.u32 %v2059, %v2061
      %v2066 = vadd.s32 %v2062, 1
      %v2067 = vsel %vm2065, %v2066, %v2062
      %v2068 = vadd.s32 %v2063, %v2067
      %v2069 = vadd.s32 %v2068, 536870912
      %v2070 = vshrl.u32 %v2069, 30
      %v2071 = vshll.u32 %v2070, 30
      %v2072 = vsub.s32 %v2068, %v2071
      %vm2073 = vcmp.lt.s32.totalorder %v2072, 0
      %v2074 = vsub.s32 0, %v2072
      %v2075 = vsel %vm2073, %v2074, %v2072
      %v2076 = vclz %v2075
      %v2077 = vsub.s32 %v2076, 2
      %vm2078 = vcmp.gt.s32.totalorder 0, %v2077
      %v2079 = vsel %vm2078, 0, %v2077
      %v2080 = vsub.s32 32, %v2079
      %v2081 = vshll.u32 %v2072, %v2079
      %v2082 = vshrl.u32 %v2064, %v2080
      %v2083 = vor.u32 %v2081, %v2082
      %v2084 = vsub.s32 4294967266, %v2079
      %v2085 = vadd.s32 %v2084, 127
      %v2086 = vshll.u32 %v2085, 23
      %v2087 = vor.u32 4788187, %v2086
      %v2088 = vand.u32 2147483647, %v2087
      %v2090 = vcvt.s32.f32 %v2083
      %v2091 = vmul.f32 %v2090, %v2088
      %v2092 = vxor.u32 %v2091, 2147483648
      %v2093 = vsel %vm2010, %v2092, %v2091
      %v2094 = vsub.s32 4, %v2070
      %v2095 = vsel %vm2010, %v2094, %v2070
      %v2096 = vsel %vm2009, %v756, %v2093
      %v2097 = vsel %vm2009, 0, %v2095
      %v2098 = vcosq.f32.pop %v2096
      %v2099 = vsinq.f32.pop %v2096
      %vm2100 = vweird.f32 %v756
      %v2101 = vadd.s32 %v2097, 3
      %v2102 = vand.u32 %v2101, 3
      %vm2103 = vcmp.lt.s32.totalorder %v2102, 2
      %vm2104 = vcmp.eq.s32.totalorder %v2102, 0
      %v2105 = vxor.u32 %v2099, 2147483648
      %v2106 = vsel %vm2104, %v2098, %v2105
      %vm2107 = vcmp.eq.s32.totalorder %v2102, 2
      %v2108 = vxor.u32 %v2098, 2147483648
      %v2109 = vsel %vm2107, %v2108, %v2099
      %v2110 = vsel %vm2103, %v2106, %v2109
      %v2111 = vsel %vm2100, nan, %v2110
      %v2112 = vand.u32 2147483647, %v757
      %vm2113 = vcmp.le.f32.partialorder %v2112, 0.7853982
      %vm2114 = vcmp.lt.s32.totalorder %v757, 0
      %v2115 = vand.u32 %v757, 2139095040
      %v2116 = vshrl.u32 %v2115, 23
      %v2117 = vsub.s32 %v2116, 127
      %v2118 = vand.u32 2147483647, %v757
      %v2119 = vand.u32 %v2118, 8388607
      %v2120 = vor.u32 %v2119, 8388608
      %v2121 = vsub.s32 0, %v2120
      %v2122 = vadd.s32 %v2117, 1
      %vm2123 = vcmp.gt.s32.totalorder %v2122, 0
      %v2124 = vsel %vm2123, %v2122, 0
      %v2125 = vshrl.u32 %v2124, 5
      %v2126 = vand.u32 %v2124, 31
      %v2127 = vsub.s32 32, %v2126
      %v2128 = vshrl.u32 683565275, %v2127
      %v2129 = vshll.u32 683565275, %v2126
      %v2130 = vshrl.u32 2475754826, %v2127
      %v2131 = vor.u32 %v2129, %v2130
      %v2132 = vshll.u32 2475754826, %v2126
      %v2133 = vshrl.u32 2131351028, %v2127
      %v2134 = vor.u32 %v2132, %v2133
      %v2135 = vshll.u32 2131351028, %v2126
      %v2136 = vshrl.u32 2102212464, %v2127
      %v2137 = vor.u32 %v2135, %v2136
      %v2138 = vshll.u32 2102212464, %v2126
      %v2139 = vshrl.u32 920167782, %v2127
      %v2140 = vor.u32 %v2138, %v2139
      %v2141 = vshll.u32 920167782, %v2126
      %v2142 = vshrl.u32 1326507024, %v2127
      %v2143 = vor.u32 %v2141, %v2142
      %vm2144 = vcmp.lt.s32.totalorder %v2125, 1
      %vm2145 = vcmp.lt.s32.totalorder %v2125, 2
      %vm2146 = vcmp.lt.s32.totalorder %v2125, 3
      %vm2147 = vcmp.lt.s32.totalorder %v2125, 4
      %v2148 = vsel %vm2144, %v2128, %v2131
      %v2149 = vsel %vm2147, %v2137, 2102212464
      %v2150 = vsel %vm2146, %v2134, %v2149
      %v2151 = vsel %vm2145, %v2148, %v2150
      %v2152 = vsel %vm2144, %v2131, %v2134
      %v2153 = vsel %vm2147, %v2140, 920167782
      %v2154 = vsel %vm2146, %v2137, %v2153
      %v2155 = vsel %vm2145, %v2152, %v2154
      %v2156 = vsel %vm2144, %v2134, %v2137
      %v2157 = vsel %vm2147, %v2143, 1326507024
      %v2158 = vsel %vm2146, %v2140, %v2157
      %v2159 = vsel %vm2145, %v2156, %v2158
      %v2160 = vshll.u32 %v2120, 8
      %v2161 = vmul.u32.u64.compose %v2160, %v2159
      %v2162 = vextract.low.u32 %v2161
      %v2163 = vextract.high.u32 %v2161
      %v2164 = vmul.u32.u64.compose %v2160, %v2155
      %v2165 = vextract.low.u32 %v2164
      %v2166 = vextract.high.u32 %v2164
      %v2167 = vmul.u32 %v2160, %v2151
      %v2168 = vadd.s32 %v2163, %v2165
      %vm2169 = vc.u32 %v2163, %v2165
      %v2170 = vadd.s32 %v2166, 1
      %v2171 = vsel %vm2169, %v2170, %v2166
      %v2172 = vadd.s32 %v2167, %v2171
      %v2173 = vadd.s32 %v2172, 536870912
      %v2174 = vshrl.u32 %v2173, 30
      %v2175 = vshll.u32 %v2174, 30
      %v2176 = vsub.s32 %v2172, %v2175
      %vm2177 = vcmp.lt.s32.totalorder %v2176, 0
      %v2178 = vsub.s32 0, %v2176
      %v2179 = vsel %vm2177, %v2178, %v2176
      %v2180 = vclz %v2179
      %v2181 = vsub.s32 %v2180, 2
      %vm2182 = vcmp.gt.s32.totalorder 0, %v2181
      %v2183 = vsel %vm2182, 0, %v2181
      %v2184 = vsub.s32 32, %v2183
      %v2185 = vshll.u32 %v2176, %v2183
      %v2186 = vshrl.u32 %v2168, %v2184
      %v2187 = vor.u32 %v2185, %v2186
      %v2188 = vsub.s32 4294967266, %v2183
      %v2189 = vadd.s32 %v2188, 127
      %v2190 = vshll.u32 %v2189, 23
      %v2191 = vor.u32 4788187, %v2190
      %v2192 = vand.u32 2147483647, %v2191
      %v2194 = vcvt.s32.f32 %v2187
      %v2195 = vmul.f32 %v2194, %v2192
      %v2196 = vxor.u32 %v2195, 2147483648
      %v2197 = vsel %vm2114, %v2196, %v2195
      %v2198 = vsub.s32 4, %v2174
      %v2199 = vsel %vm2114, %v2198, %v2174
      %v2200 = vsel %vm2113, %v757, %v2197
      %v2201 = vsel %vm2113, 0, %v2199
      %v2202 = vcosq.f32.pop %v2200
      %v2203 = vsinq.f32.pop %v2200
      %vm2204 = vweird.f32 %v757
      %v2205 = vadd.s32 %v2201, 3
      %v2206 = vand.u32 %v2205, 3
      %vm2207 = vcmp.lt.s32.totalorder %v2206, 2
      %vm2208 = vcmp.eq.s32.totalorder %v2206, 0
      %v2209 = vxor.u32 %v2203, 2147483648
      %v2210 = vsel %vm2208, %v2202, %v2209
      %vm2211 = vcmp.eq.s32.totalorder %v2206, 2
      %v2212 = vxor.u32 %v2202, 2147483648
      %v2213 = vsel %vm2211, %v2212, %v2203
      %v2214 = vsel %vm2207, %v2210, %v2213
      %v2215 = vsel %vm2204, nan, %v2214
      %v2216 = vand.u32 2147483647, %v758
      %vm2217 = vcmp.le.f32.partialorder %v2216, 0.7853982
      %vm2218 = vcmp.lt.s32.totalorder %v758, 0
      %v2219 = vand.u32 %v758, 2139095040
      %v2220 = vshrl.u32 %v2219, 23
      %v2221 = vsub.s32 %v2220, 127
      %v2222 = vand.u32 2147483647, %v758
      %v2223 = vand.u32 %v2222, 8388607
      %v2224 = vor.u32 %v2223, 8388608
      %v2225 = vsub.s32 0, %v2224
      %v2226 = vadd.s32 %v2221, 1
      %vm2227 = vcmp.gt.s32.totalorder %v2226, 0
      %v2228 = vsel %vm2227, %v2226, 0
      %v2229 = vshrl.u32 %v2228, 5
      %v2230 = vand.u32 %v2228, 31
      %v2231 = vsub.s32 32, %v2230
      %v2232 = vshrl.u32 683565275, %v2231
      %v2233 = vshll.u32 683565275, %v2230
      %v2234 = vshrl.u32 2475754826, %v2231
      %v2235 = vor.u32 %v2233, %v2234
      %v2236 = vshll.u32 2475754826, %v2230
      %v2237 = vshrl.u32 2131351028, %v2231
      %v2238 = vor.u32 %v2236, %v2237
      %v2239 = vshll.u32 2131351028, %v2230
      %v2240 = vshrl.u32 2102212464, %v2231
      %v2241 = vor.u32 %v2239, %v2240
      %v2242 = vshll.u32 2102212464, %v2230
      %v2243 = vshrl.u32 920167782, %v2231
      %v2244 = vor.u32 %v2242, %v2243
      %v2245 = vshll.u32 920167782, %v2230
      %v2246 = vshrl.u32 1326507024, %v2231
      %v2247 = vor.u32 %v2245, %v2246
      %vm2248 = vcmp.lt.s32.totalorder %v2229, 1
      %vm2249 = vcmp.lt.s32.totalorder %v2229, 2
      %vm2250 = vcmp.lt.s32.totalorder %v2229, 3
      %vm2251 = vcmp.lt.s32.totalorder %v2229, 4
      %v2252 = vsel %vm2248, %v2232, %v2235
      %v2253 = vsel %vm2251, %v2241, 2102212464
      %v2254 = vsel %vm2250, %v2238, %v2253
      %v2255 = vsel %vm2249, %v2252, %v2254
      %v2256 = vsel %vm2248, %v2235, %v2238
      %v2257 = vsel %vm2251, %v2244, 920167782
      %v2258 = vsel %vm2250, %v2241, %v2257
      %v2259 = vsel %vm2249, %v2256, %v2258
      %v2260 = vsel %vm2248, %v2238, %v2241
      %v2261 = vsel %vm2251, %v2247, 1326507024
      %v2262 = vsel %vm2250, %v2244, %v2261
      %v2263 = vsel %vm2249, %v2260, %v2262
      %v2264 = vshll.u32 %v2224, 8
      %v2265 = vmul.u32.u64.compose %v2264, %v2263
      %v2266 = vextract.low.u32 %v2265
      %v2267 = vextract.high.u32 %v2265
      %v2268 = vmul.u32.u64.compose %v2264, %v2259
      %v2269 = vextract.low.u32 %v2268
      %v2270 = vextract.high.u32 %v2268
      %v2271 = vmul.u32 %v2264, %v2255
      %v2272 = vadd.s32 %v2267, %v2269
      %vm2273 = vc.u32 %v2267, %v2269
      %v2274 = vadd.s32 %v2270, 1
      %v2275 = vsel %vm2273, %v2274, %v2270
      %v2276 = vadd.s32 %v2271, %v2275
      %v2277 = vadd.s32 %v2276, 536870912
      %v2278 = vshrl.u32 %v2277, 30
      %v2279 = vshll.u32 %v2278, 30
      %v2280 = vsub.s32 %v2276, %v2279
      %vm2281 = vcmp.lt.s32.totalorder %v2280, 0
      %v2282 = vsub.s32 0, %v2280
      %v2283 = vsel %vm2281, %v2282, %v2280
      %v2284 = vclz %v2283
      %v2285 = vsub.s32 %v2284, 2
      %vm2286 = vcmp.gt.s32.totalorder 0, %v2285
      %v2287 = vsel %vm2286, 0, %v2285
      %v2288 = vsub.s32 32, %v2287
      %v2289 = vshll.u32 %v2280, %v2287
      %v2290 = vshrl.u32 %v2272, %v2288
      %v2291 = vor.u32 %v2289, %v2290
      %v2292 = vsub.s32 4294967266, %v2287
      %v2293 = vadd.s32 %v2292, 127
      %v2294 = vshll.u32 %v2293, 23
      %v2295 = vor.u32 4788187, %v2294
      %v2296 = vand.u32 2147483647, %v2295
      %v2298 = vcvt.s32.f32 %v2291
      %v2299 = vmul.f32 %v2298, %v2296
      %v2300 = vxor.u32 %v2299, 2147483648
      %v2301 = vsel %vm2218, %v2300, %v2299
      %v2302 = vsub.s32 4, %v2278
      %v2303 = vsel %vm2218, %v2302, %v2278
      %v2304 = vsel %vm2217, %v758, %v2301
      %v2305 = vsel %vm2217, 0, %v2303
      %v2306 = vcosq.f32.pop %v2304
      %v2307 = vsinq.f32.pop %v2304
      %vm2308 = vweird.f32 %v758
      %v2309 = vadd.s32 %v2305, 3
      %v2310 = vand.u32 %v2309, 3
      %vm2311 = vcmp.lt.s32.totalorder %v2310, 2
      %vm2312 = vcmp.eq.s32.totalorder %v2310, 0
      %v2313 = vxor.u32 %v2307, 2147483648
      %v2314 = vsel %vm2312, %v2306, %v2313
      %vm2315 = vcmp.eq.s32.totalorder %v2310, 2
      %v2316 = vxor.u32 %v2306, 2147483648
      %v2317 = vsel %vm2315, %v2316, %v2307
      %v2318 = vsel %vm2311, %v2314, %v2317
      %v2319 = vsel %vm2308, nan, %v2318
      %v2320 = vand.u32 2147483647, %v759
      %vm2321 = vcmp.le.f32.partialorder %v2320, 0.7853982
      %vm2322 = vcmp.lt.s32.totalorder %v759, 0
      %v2323 = vand.u32 %v759, 2139095040
      %v2324 = vshrl.u32 %v2323, 23
      %v2325 = vsub.s32 %v2324, 127
      %v2326 = vand.u32 2147483647, %v759
      %v2327 = vand.u32 %v2326, 8388607
      %v2328 = vor.u32 %v2327, 8388608
      %v2329 = vsub.s32 0, %v2328
      %v2330 = vadd.s32 %v2325, 1
      %vm2331 = vcmp.gt.s32.totalorder %v2330, 0
      %v2332 = vsel %vm2331, %v2330, 0
      %v2333 = vshrl.u32 %v2332, 5
      %v2334 = vand.u32 %v2332, 31
      %v2335 = vsub.s32 32, %v2334
      %v2336 = vshrl.u32 683565275, %v2335
      %v2337 = vshll.u32 683565275, %v2334
      %v2338 = vshrl.u32 2475754826, %v2335
      %v2339 = vor.u32 %v2337, %v2338
      %v2340 = vshll.u32 2475754826, %v2334
      %v2341 = vshrl.u32 2131351028, %v2335
      %v2342 = vor.u32 %v2340, %v2341
      %v2343 = vshll.u32 2131351028, %v2334
      %v2344 = vshrl.u32 2102212464, %v2335
      %v2345 = vor.u32 %v2343, %v2344
      %v2346 = vshll.u32 2102212464, %v2334
      %v2347 = vshrl.u32 920167782, %v2335
      %v2348 = vor.u32 %v2346, %v2347
      %v2349 = vshll.u32 920167782, %v2334
      %v2350 = vshrl.u32 1326507024, %v2335
      %v2351 = vor.u32 %v2349, %v2350
      %vm2352 = vcmp.lt.s32.totalorder %v2333, 1
      %vm2353 = vcmp.lt.s32.totalorder %v2333, 2
      %vm2354 = vcmp.lt.s32.totalorder %v2333, 3
      %vm2355 = vcmp.lt.s32.totalorder %v2333, 4
      %v2356 = vsel %vm2352, %v2336, %v2339
      %v2357 = vsel %vm2355, %v2345, 2102212464
      %v2358 = vsel %vm2354, %v2342, %v2357
      %v2359 = vsel %vm2353, %v2356, %v2358
      %v2360 = vsel %vm2352, %v2339, %v2342
      %v2361 = vsel %vm2355, %v2348, 920167782
      %v2362 = vsel %vm2354, %v2345, %v2361
      %v2363 = vsel %vm2353, %v2360, %v2362
      %v2364 = vsel %vm2352, %v2342, %v2345
      %v2365 = vsel %vm2355, %v2351, 1326507024
      %v2366 = vsel %vm2354, %v2348, %v2365
      %v2367 = vsel %vm2353, %v2364, %v2366
      %v2368 = vshll.u32 %v2328, 8
      %v2369 = vmul.u32.u64.compose %v2368, %v2367
      %v2370 = vextract.low.u32 %v2369
      %v2371 = vextract.high.u32 %v2369
      %v2372 = vmul.u32.u64.compose %v2368, %v2363
      %v2373 = vextract.low.u32 %v2372
      %v2374 = vextract.high.u32 %v2372
      %v2375 = vmul.u32 %v2368, %v2359
      %v2376 = vadd.s32 %v2371, %v2373
      %vm2377 = vc.u32 %v2371, %v2373
      %v2378 = vadd.s32 %v2374, 1
      %v2379 = vsel %vm2377, %v2378, %v2374
      %v2380 = vadd.s32 %v2375, %v2379
      %v2381 = vadd.s32 %v2380, 536870912
      %v2382 = vshrl.u32 %v2381, 30
      %v2383 = vshll.u32 %v2382, 30
      %v2384 = vsub.s32 %v2380, %v2383
      %vm2385 = vcmp.lt.s32.totalorder %v2384, 0
      %v2386 = vsub.s32 0, %v2384
      %v2387 = vsel %vm2385, %v2386, %v2384
      %v2388 = vclz %v2387
      %v2389 = vsub.s32 %v2388, 2
      %vm2390 = vcmp.gt.s32.totalorder 0, %v2389
      %v2391 = vsel %vm2390, 0, %v2389
      %v2392 = vsub.s32 32, %v2391
      %v2393 = vshll.u32 %v2384, %v2391
      %v2394 = vshrl.u32 %v2376, %v2392
      %v2395 = vor.u32 %v2393, %v2394
      %v2396 = vsub.s32 4294967266, %v2391
      %v2397 = vadd.s32 %v2396, 127
      %v2398 = vshll.u32 %v2397, 23
      %v2399 = vor.u32 4788187, %v2398
      %v2400 = vand.u32 2147483647, %v2399
      %v2402 = vcvt.s32.f32 %v2395
      %v2403 = vmul.f32 %v2402, %v2400
      %v2404 = vxor.u32 %v2403, 2147483648
      %v2405 = vsel %vm2322, %v2404, %v2403
      %v2406 = vsub.s32 4, %v2382
      %v2407 = vsel %vm2322, %v2406, %v2382
      %v2408 = vsel %vm2321, %v759, %v2405
      %v2409 = vsel %vm2321, 0, %v2407
      %v2410 = vcosq.f32.pop %v2408
      %v2411 = vsinq.f32.pop %v2408
      %vm2412 = vweird.f32 %v759
      %v2413 = vadd.s32 %v2409, 3
      %v2414 = vand.u32 %v2413, 3
      %vm2415 = vcmp.lt.s32.totalorder %v2414, 2
      %vm2416 = vcmp.eq.s32.totalorder %v2414, 0
      %v2417 = vxor.u32 %v2411, 2147483648
      %v2418 = vsel %vm2416, %v2410, %v2417
      %vm2419 = vcmp.eq.s32.totalorder %v2414, 2
      %v2420 = vxor.u32 %v2410, 2147483648
      %v2421 = vsel %vm2419, %v2420, %v2411
      %v2422 = vsel %vm2415, %v2418, %v2421
      %v2423 = vsel %vm2412, nan, %v2422
      %2425 = vset.pattern.permute.xlu0 0
      %2426 = vperm.xlu0 %2425, %v259
      %v2427 = vpop.permute.xlu0 %2426
      %2430 = vset.pattern.permute.xlu0 0
      %2431 = vperm.xlu0 %2430, %v260
      %v2432 = vpop.permute.xlu0 %2431
      %2435 = vset.pattern.permute.xlu0 0
      %2436 = vperm.xlu0 %2435, %v261
      %v2437 = vpop.permute.xlu0 %2436
      %2440 = vset.pattern.permute.xlu0 0
      %2441 = vperm.xlu0 %2440, %v262
      %v2442 = vpop.permute.xlu0 %2441
      %2445 = vset.pattern.permute.xlu0 0
      %2446 = vperm.xlu0 %2445, %v263
      %v2447 = vpop.permute.xlu0 %2446
      %2450 = vset.pattern.permute.xlu0 0
      %2451 = vperm.xlu0 %2450, %v264
      %v2452 = vpop.permute.xlu0 %2451
      %2455 = vset.pattern.permute.xlu0 0
      %2456 = vperm.xlu0 %2455, %v265
      %v2457 = vpop.permute.xlu0 %2456
      %2460 = vset.pattern.permute.xlu0 0
      %2461 = vperm.xlu0 %2460, %v266
      %v2462 = vpop.permute.xlu0 %2461
      %v2464 = vmul.f32 %v2427, %v863
      %v2465 = vmul.f32 %v2427, %v967
      %v2466 = vmul.f32 %v2432, %v1071
      %v2467 = vmul.f32 %v2432, %v1175
      %v2468 = vmul.f32 %v2437, %v1279
      %v2469 = vmul.f32 %v2437, %v1383
      %v2470 = vmul.f32 %v2442, %v1487
      %v2471 = vmul.f32 %v2442, %v1591
      %v2472 = vmul.f32 %v2447, %v1695
      %v2473 = vmul.f32 %v2447, %v1799
      %v2474 = vmul.f32 %v2452, %v1903
      %v2475 = vmul.f32 %v2452, %v2007
      %v2476 = vmul.f32 %v2457, %v2111
      %v2477 = vmul.f32 %v2457, %v2215
      %v2478 = vmul.f32 %v2462, %v2319
      %v2479 = vmul.f32 %v2462, %v2423
      %v2480 = vadd.f32 %v632, %v2464
      %v2481 = vadd.f32 %v633, %v2465
      %v2482 = vadd.f32 %v634, %v2466
      %v2483 = vadd.f32 %v635, %v2467
      %v2484 = vadd.f32 %v636, %v2468
      %v2485 = vadd.f32 %v637, %v2469
      %v2486 = vadd.f32 %v638, %v2470
      %v2487 = vadd.f32 %v639, %v2471
      %v2488 = vadd.f32 %v640, %v2472
      %v2489 = vadd.f32 %v641, %v2473
      %v2490 = vadd.f32 %v642, %v2474
      %v2491 = vadd.f32 %v643, %v2475
      %v2492 = vadd.f32 %v644, %v2476
      %v2493 = vadd.f32 %v645, %v2477
      %v2494 = vadd.f32 %v646, %v2478
      %v2495 = vadd.f32 %v647, %v2479
      %v2496 = vld [vmem:[%s1] sm:$0xff]
      %v2497 = vld [vmem:[%s1 + $0x8] sm:$0xff]
      %v2498 = vld [vmem:[%s1 + $0x10] sm:$0xff]
      %v2499 = vld [vmem:[%s1 + $0x18] sm:$0xff]
      %v2500 = vld [vmem:[%s1 + $0x20] sm:$0xff]
      %v2501 = vld [vmem:[%s1 + $0x28] sm:$0xff]
      %v2502 = vld [vmem:[%s1 + $0x30] sm:$0xff]
      %v2503 = vld [vmem:[%s1 + $0x38] sm:$0xff]
      %v2504 = vld [vmem:[%s2] sm:$0xff]
      %v2505 = vld [vmem:[%s2 + $0x8] sm:$0xff]
      %v2506 = vld [vmem:[%s2 + $0x10] sm:$0xff]
      %v2507 = vld [vmem:[%s2 + $0x18] sm:$0xff]
      %v2508 = vld [vmem:[%s2 + $0x20] sm:$0xff]
      %v2509 = vld [vmem:[%s2 + $0x28] sm:$0xff]
      %v2510 = vld [vmem:[%s2 + $0x30] sm:$0xff]
      %v2511 = vld [vmem:[%s2 + $0x38] sm:$0xff]
      %2513 = vset.pattern.permute.xlu0 0
      %2514 = vperm.xlu0 %2513, %v2504
      %v2515 = vpop.permute.xlu0 %2514
      %2518 = vset.pattern.permute.xlu0 0
      %2519 = vperm.xlu0 %2518, %v2505
      %v2520 = vpop.permute.xlu0 %2519
      %2523 = vset.pattern.permute.xlu0 0
      %2524 = vperm.xlu0 %2523, %v2506
      %v2525 = vpop.permute.xlu0 %2524
      %2528 = vset.pattern.permute.xlu0 0
      %2529 = vperm.xlu0 %2528, %v2507
      %v2530 = vpop.permute.xlu0 %2529
      %2533 = vset.pattern.permute.xlu0 0
      %2534 = vperm.xlu0 %2533, %v2508
      %v2535 = vpop.permute.xlu0 %2534
      %2538 = vset.pattern.permute.xlu0 0
      %2539 = vperm.xlu0 %2538, %v2509
      %v2540 = vpop.permute.xlu0 %2539
      %2543 = vset.pattern.permute.xlu0 0
      %2544 = vperm.xlu0 %2543, %v2510
      %v2545 = vpop.permute.xlu0 %2544
      %2548 = vset.pattern.permute.xlu0 0
      %2549 = vperm.xlu0 %2548, %v2511
      %v2550 = vpop.permute.xlu0 %2549
      %vm2552 = vcmask 523264
      %v2554 = vsel %vm2552, %v2496, 0
      %v2557 = vsel %vm2552, %v2497, 0
      %v2560 = vsel %vm2552, %v2498, 0
      %v2563 = vsel %vm2552, %v2499, 0
      %v2566 = vsel %vm2552, %v2500, 0
      %v2569 = vsel %vm2552, %v2501, 0
      %v2572 = vsel %vm2552, %v2502, 0
      %v2575 = vsel %vm2552, %v2503, 0
      %2577 = vmatprep.subr.mxu0 %v2481
      %2578 = vmatpush1.msra.mxu0 %v2480
      %2579 = vmatprep.subr.mxu0 %v2483
      %2580 = vmatpush1.msra.mxu0 %v2482
      %2581 = vmatprep.subr.mxu0 %v2485
      %2582 = vmatpush1.msra.mxu0 %v2484
      %2583 = vmatprep.subr.mxu0 %v2487
      %2584 = vmatpush1.msra.mxu0 %v2486
      %2585 = vmatprep.subr.mxu0 %v2489
      %2586 = vmatpush1.msra.mxu0 %v2488
      %2587 = vmatprep.subr.mxu0 %v2491
      %2588 = vmatpush1.msra.mxu0 %v2490
      %2589 = vmatprep.subr.mxu0 %v2493
      %2590 = vmatpush1.msra.mxu0 %v2492
      %2591 = vmatprep.subr.mxu0 %v2495
      %2592 = vmatpush1.msra.mxu0 %v2494
      %2593 = vmatprep.subr.mxu0 0.0
      %2594 = vmatpush1.msra.mxu0 0.0
      %2595 = vmatprep.subr.mxu0 0.0
      %2596 = vmatpush1.msra.mxu0 0.0
      %2597 = vmatprep.subr.mxu0 0.0
      %2598 = vmatpush1.msra.mxu0 0.0
      %2599 = vmatprep.subr.mxu0 0.0
      %2600 = vmatpush1.msra.mxu0 0.0
      %2601 = vmatprep.subr.mxu0 0.0
      %2602 = vmatpush1.msra.mxu0 0.0
      %2603 = vmatprep.subr.mxu0 0.0
      %2604 = vmatpush1.msra.mxu0 0.0
      %2605 = vmatprep.subr.mxu0 0.0
      %2606 = vmatpush1.msra.mxu0 0.0
      %2607 = vmatprep.subr.mxu0 0.0
      %2608 = vmatpush1.msra.mxu0 0.0
      %2609 = vmatprep.subr.mxu0 0.0
      %2610 = vmatpush1.msra.mxu0 0.0
      %2611 = vmatprep.subr.mxu0 0.0
      %2612 = vmatpush1.msra.mxu0 0.0
      %2613 = vmatprep.subr.mxu0 0.0
      %2614 = vmatpush1.msra.mxu0 0.0
      %2615 = vmatprep.subr.mxu0 0.0
      %2616 = vmatpush1.msra.mxu0 0.0
      %2617 = vmatprep.subr.mxu0 0.0
      %2618 = vmatpush1.msra.mxu0 0.0
      %2619 = vmatprep.subr.mxu0 0.0
      %2620 = vmatpush1.msra.mxu0 0.0
      %2621 = vmatprep.subr.mxu0 0.0
      %2622 = vmatpush1.msra.mxu0 0.0
      %2623 = vmatprep.subr.mxu0 0.0
      %2624 = vmatpush1.msra.mxu0 0.0
      %2625 = vmatprep.subr.mxu0 0.0
      %2626 = vmatpush1.msra.mxu0 0.0
      %2627 = vmatprep.subr.mxu0 0.0
      %2628 = vmatpush1.msra.mxu0 0.0
      %2629 = vmatprep.subr.mxu0 0.0
      %2630 = vmatpush1.msra.mxu0 0.0
      %2631 = vmatprep.subr.mxu0 0.0
      %2632 = vmatpush1.msra.mxu0 0.0
      %2633 = vmatprep.subr.mxu0 0.0
      %2634 = vmatpush1.msra.mxu0 0.0
      %2635 = vmatprep.subr.mxu0 0.0
      %2636 = vmatpush1.msra.mxu0 0.0
      %2637 = vmatprep.subr.mxu0 0.0
      %2638 = vmatpush1.msra.mxu0 0.0
      %2639 = vmatprep.subr.mxu0 0.0
      %2640 = vmatpush1.msra.mxu0 0.0
      %2641 = vmatprep.mubr.f32.mxu0 0.0
      %2642 = vmatmul.mubr.f32.gmra.mrb[0].mxu0 %v2554
      %v2643 = vpop.f32.mrb[0].mxu0
      %v2644 = vadd.f32 %v2515, %v2643
      %v2645 = vpop.f32.mrb[0].mxu0
      %v2646 = vadd.f32 %v2515, %v2645
      %2647 = vmatprep.mubr.f32.mxu0 0.0
      %2648 = vmatmul.mubr.f32.gmra.mrb[0].mxu0 %v2557
      %v2649 = vpop.f32.mrb[0].mxu0
      %v2650 = vadd.f32 %v2520, %v2649
      %v2651 = vpop.f32.mrb[0].mxu0
      %v2652 = vadd.f32 %v2520, %v2651
      %2653 = vmatprep.mubr.f32.mxu0 0.0
      %2654 = vmatmul.mubr.f32.gmra.mrb[0].mxu0 %v2560
      %v2655 = vpop.f32.mrb[0].mxu0
      %v2656 = vadd.f32 %v2525, %v2655
      %v2657 = vpop.f32.mrb[0].mxu0
      %v2658 = vadd.f32 %v2525, %v2657
      %2659 = vmatprep.mubr.f32.mxu0 0.0
      %2660 = vmatmul.mubr.f32.gmra.mrb[0].mxu0 %v2563
      %v2661 = vpop.f32.mrb[0].mxu0
      %v2662 = vadd.f32 %v2530, %v2661
      %v2663 = vpop.f32.mrb[0].mxu0
      %v2664 = vadd.f32 %v2530, %v2663
      %2665 = vmatprep.mubr.f32.mxu0 0.0
      %2666 = vmatmul.mubr.f32.gmra.mrb[0].mxu0 %v2566
      %v2667 = vpop.f32.mrb[0].mxu0
      %v2668 = vadd.f32 %v2535, %v2667
      %v2669 = vpop.f32.mrb[0].mxu0
      %v2670 = vadd.f32 %v2535, %v2669
      %2671 = vmatprep.mubr.f32.mxu0 0.0
      %2672 = vmatmul.mubr.f32.gmra.mrb[0].mxu0 %v2569
      %v2673 = vpop.f32.mrb[0].mxu0
      %v2674 = vadd.f32 %v2540, %v2673
      %v2675 = vpop.f32.mrb[0].mxu0
      %v2676 = vadd.f32 %v2540, %v2675
      %2677 = vmatprep.mubr.f32.mxu0 0.0
      %2678 = vmatmul.mubr.f32.gmra.mrb[0].mxu0 %v2572
      %v2679 = vpop.f32.mrb[0].mxu0
      %v2680 = vadd.f32 %v2545, %v2679
      %v2681 = vpop.f32.mrb[0].mxu0
      %v2682 = vadd.f32 %v2545, %v2681
      %2683 = vmatprep.mubr.f32.mxu0 0.0
      %2684 = vmatmul.mubr.f32.gmra.mrb[0].mxu0 %v2575
      %v2685 = vpop.f32.mrb[0].mxu0
      %v2686 = vadd.f32 %v2550, %v2685
      %v2687 = vpop.f32.mrb[0].mxu0
      %v2688 = vadd.f32 %v2550, %v2687
      %2689 = vdwg.mxu0
      %v2690 = vmax.f32 %v2644, 0.0
      %v2691 = vmax.f32 %v2646, 0.0
      %v2692 = vmax.f32 %v2650, 0.0
      %v2693 = vmax.f32 %v2652, 0.0
      %v2694 = vmax.f32 %v2656, 0.0
      %v2695 = vmax.f32 %v2658, 0.0
      %v2696 = vmax.f32 %v2662, 0.0
      %v2697 = vmax.f32 %v2664, 0.0
      %v2698 = vmax.f32 %v2668, 0.0
      %v2699 = vmax.f32 %v2670, 0.0
      %v2700 = vmax.f32 %v2674, 0.0
      %v2701 = vmax.f32 %v2676, 0.0
      %v2702 = vmax.f32 %v2680, 0.0
      %v2703 = vmax.f32 %v2682, 0.0
      %v2704 = vmax.f32 %v2686, 0.0
      %v2705 = vmax.f32 %v2688, 0.0
      %s2706 = scalar_lea.vmem %s1, 64
      %v2707 = vld [vmem:[%s2706] sm:$0xff]
      %v2708 = vld [vmem:[%s2706 + $0x8] sm:$0xff]
      %v2709 = vld [vmem:[%s2706 + $0x10] sm:$0xff]
      %v2710 = vld [vmem:[%s2706 + $0x18] sm:$0xff]
      %v2711 = vld [vmem:[%s2706 + $0x20] sm:$0xff]
      %v2712 = vld [vmem:[%s2706 + $0x28] sm:$0xff]
      %v2713 = vld [vmem:[%s2706 + $0x30] sm:$0xff]
      %v2714 = vld [vmem:[%s2706 + $0x38] sm:$0xff]
      %s2715 = scalar_lea.vmem %s2, 64
      %v2716 = vld [vmem:[%s2715] sm:$0xff]
      %v2717 = vld [vmem:[%s2715 + $0x8] sm:$0xff]
      %v2718 = vld [vmem:[%s2715 + $0x10] sm:$0xff]
      %v2719 = vld [vmem:[%s2715 + $0x18] sm:$0xff]
      %v2720 = vld [vmem:[%s2715 + $0x20] sm:$0xff]
      %v2721 = vld [vmem:[%s2715 + $0x28] sm:$0xff]
      %v2722 = vld [vmem:[%s2715 + $0x30] sm:$0xff]
      %v2723 = vld [vmem:[%s2715 + $0x38] sm:$0xff]
      %2725 = vset.pattern.permute.xlu0 0
      %2726 = vperm.xlu0 %2725, %v2716
      %v2727 = vpop.permute.xlu0 %2726
      %2730 = vset.pattern.permute.xlu0 0
      %2731 = vperm.xlu0 %2730, %v2717
      %v2732 = vpop.permute.xlu0 %2731
      %2735 = vset.pattern.permute.xlu0 0
      %2736 = vperm.xlu0 %2735, %v2718
      %v2737 = vpop.permute.xlu0 %2736
      %2740 = vset.pattern.permute.xlu0 0
      %2741 = vperm.xlu0 %2740, %v2719
      %v2742 = vpop.permute.xlu0 %2741
      %2745 = vset.pattern.permute.xlu0 0
      %2746 = vperm.xlu0 %2745, %v2720
      %v2747 = vpop.permute.xlu0 %2746
      %2750 = vset.pattern.permute.xlu0 0
      %2751 = vperm.xlu0 %2750, %v2721
      %v2752 = vpop.permute.xlu0 %2751
      %2755 = vset.pattern.permute.xlu0 0
      %2756 = vperm.xlu0 %2755, %v2722
      %v2757 = vpop.permute.xlu0 %2756
      %2760 = vset.pattern.permute.xlu0 0
      %2761 = vperm.xlu0 %2760, %v2723
      %v2762 = vpop.permute.xlu0 %2761
      %v2765 = vsel %vm2552, %v2707, 0
      %v2768 = vsel %vm2552, %v2708, 0
      %v2771 = vsel %vm2552, %v2709, 0
      %v2774 = vsel %vm2552, %v2710, 0
      %v2777 = vsel %vm2552, %v2711, 0
      %v2780 = vsel %vm2552, %v2712, 0
      %v2783 = vsel %vm2552, %v2713, 0
      %v2786 = vsel %vm2552, %v2714, 0
      %2788 = vmatprep.subr.mxu0 %v2691
      %2789 = vmatpush1.msra.mxu0 %v2690
      %2790 = vmatprep.subr.mxu0 %v2693
      %2791 = vmatpush1.msra.mxu0 %v2692
      %2792 = vmatprep.subr.mxu0 %v2695
      %2793 = vmatpush1.msra.mxu0 %v2694
      %2794 = vmatprep.subr.mxu0 %v2697
      %2795 = vmatpush1.msra.mxu0 %v2696
      %2796 = vmatprep.subr.mxu0 %v2699
      %2797 = vmatpush1.msra.mxu0 %v2698
      %2798 = vmatprep.subr.mxu0 %v2701
      %2799 = vmatpush1.msra.mxu0 %v2700
      %2800 = vmatprep.subr.mxu0 %v2703
      %2801 = vmatpush1.msra.mxu0 %v2702
      %2802 = vmatprep.subr.mxu0 %v2705
      %2803 = vmatpush1.msra.mxu0 %v2704
      %2804 = vmatprep.subr.mxu0 0.0
      %2805 = vmatpush1.msra.mxu0 0.0
      %2806 = vmatprep.subr.mxu0 0.0
      %2807 = vmatpush1.msra.mxu0 0.0
      %2808 = vmatprep.subr.mxu0 0.0
      %2809 = vmatpush1.msra.mxu0 0.0
      %2810 = vmatprep.subr.mxu0 0.0
      %2811 = vmatpush1.msra.mxu0 0.0
      %2812 = vmatprep.subr.mxu0 0.0
      %2813 = vmatpush1.msra.mxu0 0.0
      %2814 = vmatprep.subr.mxu0 0.0
      %2815 = vmatpush1.msra.mxu0 0.0
      %2816 = vmatprep.subr.mxu0 0.0
      %2817 = vmatpush1.msra.mxu0 0.0
      %2818 = vmatprep.subr.mxu0 0.0
      %2819 = vmatpush1.msra.mxu0 0.0
      %2820 = vmatprep.subr.mxu0 0.0
      %2821 = vmatpush1.msra.mxu0 0.0
      %2822 = vmatprep.subr.mxu0 0.0
      %2823 = vmatpush1.msra.mxu0 0.0
      %2824 = vmatprep.subr.mxu0 0.0
      %2825 = vmatpush1.msra.mxu0 0.0
      %2826 = vmatprep.subr.mxu0 0.0
      %2827 = vmatpush1.msra.mxu0 0.0
      %2828 = vmatprep.subr.mxu0 0.0
      %2829 = vmatpush1.msra.mxu0 0.0
      %2830 = vmatprep.subr.mxu0 0.0
      %2831 = vmatpush1.msra.mxu0 0.0
      %2832 = vmatprep.subr.mxu0 0.0
      %2833 = vmatpush1.msra.mxu0 0.0
      %2834 = vmatprep.subr.mxu0 0.0
      %2835 = vmatpush1.msra.mxu0 0.0
      %2836 = vmatprep.subr.mxu0 0.0
      %2837 = vmatpush1.msra.mxu0 0.0
      %2838 = vmatprep.subr.mxu0 0.0
      %2839 = vmatpush1.msra.mxu0 0.0
      %2840 = vmatprep.subr.mxu0 0.0
      %2841 = vmatpush1.msra.mxu0 0.0
      %2842 = vmatprep.subr.mxu0 0.0
      %2843 = vmatpush1.msra.mxu0 0.0
      %2844 = vmatprep.subr.mxu0 0.0
      %2845 = vmatpush1.msra.mxu0 0.0
      %2846 = vmatprep.subr.mxu0 0.0
      %2847 = vmatpush1.msra.mxu0 0.0
      %2848 = vmatprep.subr.mxu0 0.0
      %2849 = vmatpush1.msra.mxu0 0.0
      %2850 = vmatprep.subr.mxu0 0.0
      %2851 = vmatpush1.msra.mxu0 0.0
      %2852 = vmatprep.mubr.f32.mxu0 0.0
      %2853 = vmatmul.mubr.f32.gmra.mrb[0].mxu0 %v2765
      %v2854 = vpop.f32.mrb[0].mxu0
      %v2855 = vadd.f32 %v2727, %v2854
      %v2856 = vpop.f32.mrb[0].mxu0
      %v2857 = vadd.f32 %v2727, %v2856
      %2858 = vmatprep.mubr.f32.mxu0 0.0
      %2859 = vmatmul.mubr.f32.gmra.mrb[0].mxu0 %v2768
      %v2860 = vpop.f32.mrb[0].mxu0
      %v2861 = vadd.f32 %v2732, %v2860
      %v2862 = vpop.f32.mrb[0].mxu0
      %v2863 = vadd.f32 %v2732, %v2862
      %2864 = vmatprep.mubr.f32.mxu0 0.0
      %2865 = vmatmul.mubr.f32.gmra.mrb[0].mxu0 %v2771
      %v2866 = vpop.f32.mrb[0].mxu0
      %v2867 = vadd.f32 %v2737, %v2866
      %v2868 = vpop.f32.mrb[0].mxu0
      %v2869 = vadd.f32 %v2737, %v2868
      %2870 = vmatprep.mubr.f32.mxu0 0.0
      %2871 = vmatmul.mubr.f32.gmra.mrb[0].mxu0 %v2774
      %v2872 = vpop.f32.mrb[0].mxu0
      %v2873 = vadd.f32 %v2742, %v2872
      %v2874 = vpop.f32.mrb[0].mxu0
      %v2875 = vadd.f32 %v2742, %v2874
      %2876 = vmatprep.mubr.f32.mxu0 0.0
      %2877 = vmatmul.mubr.f32.gmra.mrb[0].mxu0 %v2777
      %v2878 = vpop.f32.mrb[0].mxu0
      %v2879 = vadd.f32 %v2747, %v2878
      %v2880 = vpop.f32.mrb[0].mxu0
      %v2881 = vadd.f32 %v2747, %v2880
      %2882 = vmatprep.mubr.f32.mxu0 0.0
      %2883 = vmatmul.mubr.f32.gmra.mrb[0].mxu0 %v2780
      %v2884 = vpop.f32.mrb[0].mxu0
      %v2885 = vadd.f32 %v2752, %v2884
      %v2886 = vpop.f32.mrb[0].mxu0
      %v2887 = vadd.f32 %v2752, %v2886
      %2888 = vmatprep.mubr.f32.mxu0 0.0
      %2889 = vmatmul.mubr.f32.gmra.mrb[0].mxu0 %v2783
      %v2890 = vpop.f32.mrb[0].mxu0
      %v2891 = vadd.f32 %v2757, %v2890
      %v2892 = vpop.f32.mrb[0].mxu0
      %v2893 = vadd.f32 %v2757, %v2892
      %2894 = vmatprep.mubr.f32.mxu0 0.0
      %2895 = vmatmul.mubr.f32.gmra.mrb[0].mxu0 %v2786
      %v2896 = vpop.f32.mrb[0].mxu0
      %v2897 = vadd.f32 %v2762, %v2896
      %v2898 = vpop.f32.mrb[0].mxu0
      %v2899 = vadd.f32 %v2762, %v2898
      %2900 = vdwg.mxu0
      %v2901 = vmax.f32 %v2855, 0.0
      %v2902 = vmax.f32 %v2857, 0.0
      %v2903 = vmax.f32 %v2861, 0.0
      %v2904 = vmax.f32 %v2863, 0.0
      %v2905 = vmax.f32 %v2867, 0.0
      %v2906 = vmax.f32 %v2869, 0.0
      %v2907 = vmax.f32 %v2873, 0.0
      %v2908 = vmax.f32 %v2875, 0.0
      %v2909 = vmax.f32 %v2879, 0.0
      %v2910 = vmax.f32 %v2881, 0.0
      %v2911 = vmax.f32 %v2885, 0.0
      %v2912 = vmax.f32 %v2887, 0.0
      %v2913 = vmax.f32 %v2891, 0.0
      %v2914 = vmax.f32 %v2893, 0.0
      %v2915 = vmax.f32 %v2897, 0.0
      %v2916 = vmax.f32 %v2899, 0.0
      %s2917 = scalar_lea.vmem %s1, 128
      %v2918 = vld [vmem:[%s2917] sm:$0xff]
      %v2919 = vld [vmem:[%s2917 + $0x8] sm:$0xff]
      %v2920 = vld [vmem:[%s2917 + $0x10] sm:$0xff]
      %v2921 = vld [vmem:[%s2917 + $0x18] sm:$0xff]
      %v2922 = vld [vmem:[%s2917 + $0x20] sm:$0xff]
      %v2923 = vld [vmem:[%s2917 + $0x28] sm:$0xff]
      %v2924 = vld [vmem:[%s2917 + $0x30] sm:$0xff]
      %v2925 = vld [vmem:[%s2917 + $0x38] sm:$0xff]
      %s2926 = scalar_lea.vmem %s2, 128
      %v2927 = vld [vmem:[%s2926] sm:$0xff]
      %v2928 = vld [vmem:[%s2926 + $0x8] sm:$0xff]
      %v2929 = vld [vmem:[%s2926 + $0x10] sm:$0xff]
      %v2930 = vld [vmem:[%s2926 + $0x18] sm:$0xff]
      %v2931 = vld [vmem:[%s2926 + $0x20] sm:$0xff]
      %v2932 = vld [vmem:[%s2926 + $0x28] sm:$0xff]
      %v2933 = vld [vmem:[%s2926 + $0x30] sm:$0xff]
      %v2934 = vld [vmem:[%s2926 + $0x38] sm:$0xff]
      %2936 = vset.pattern.permute.xlu0 0
      %2937 = vperm.xlu0 %2936, %v2927
      %v2938 = vpop.permute.xlu0 %2937
      %2941 = vset.pattern.permute.xlu0 0
      %2942 = vperm.xlu0 %2941, %v2928
      %v2943 = vpop.permute.xlu0 %2942
      %2946 = vset.pattern.permute.xlu0 0
      %2947 = vperm.xlu0 %2946, %v2929
      %v2948 = vpop.permute.xlu0 %2947
      %2951 = vset.pattern.permute.xlu0 0
      %2952 = vperm.xlu0 %2951, %v2930
      %v2953 = vpop.permute.xlu0 %2952
      %2956 = vset.pattern.permute.xlu0 0
      %2957 = vperm.xlu0 %2956, %v2931
      %v2958 = vpop.permute.xlu0 %2957
      %2961 = vset.pattern.permute.xlu0 0
      %2962 = vperm.xlu0 %2961, %v2932
      %v2963 = vpop.permute.xlu0 %2962
      %2966 = vset.pattern.permute.xlu0 0
      %2967 = vperm.xlu0 %2966, %v2933
      %v2968 = vpop.permute.xlu0 %2967
      %2971 = vset.pattern.permute.xlu0 0
      %2972 = vperm.xlu0 %2971, %v2934
      %v2973 = vpop.permute.xlu0 %2972
      %v2976 = vsel %vm2552, %v2918, 0
      %v2979 = vsel %vm2552, %v2919, 0
      %v2982 = vsel %vm2552, %v2920, 0
      %v2985 = vsel %vm2552, %v2921, 0
      %v2988 = vsel %vm2552, %v2922, 0
      %v2991 = vsel %vm2552, %v2923, 0
      %v2994 = vsel %vm2552, %v2924, 0
      %v2997 = vsel %vm2552, %v2925, 0
      %2999 = vmatprep.subr.mxu0 %v2902
      %3000 = vmatpush1.msra.mxu0 %v2901
      %3001 = vmatprep.subr.mxu0 %v2904
      %3002 = vmatpush1.msra.mxu0 %v2903
      %3003 = vmatprep.subr.mxu0 %v2906
      %3004 = vmatpush1.msra.mxu0 %v2905
      %3005 = vmatprep.subr.mxu0 %v2908
      %3006 = vmatpush1.msra.mxu0 %v2907
      %3007 = vmatprep.subr.mxu0 %v2910
      %3008 = vmatpush1.msra.mxu0 %v2909
      %3009 = vmatprep.subr.mxu0 %v2912
      %3010 = vmatpush1.msra.mxu0 %v2911
      %3011 = vmatprep.subr.mxu0 %v2914
      %3012 = vmatpush1.msra.mxu0 %v2913
      %3013 = vmatprep.subr.mxu0 %v2916
      %3014 = vmatpush1.msra.mxu0 %v2915
      %3015 = vmatprep.subr.mxu0 0.0
      %3016 = vmatpush1.msra.mxu0 0.0
      %3017 = vmatprep.subr.mxu0 0.0
      %3018 = vmatpush1.msra.mxu0 0.0
      %3019 = vmatprep.subr.mxu0 0.0
      %3020 = vmatpush1.msra.mxu0 0.0
      %3021 = vmatprep.subr.mxu0 0.0
      %3022 = vmatpush1.msra.mxu0 0.0
      %3023 = vmatprep.subr.mxu0 0.0
      %3024 = vmatpush1.msra.mxu0 0.0
      %3025 = vmatprep.subr.mxu0 0.0
      %3026 = vmatpush1.msra.mxu0 0.0
      %3027 = vmatprep.subr.mxu0 0.0
      %3028 = vmatpush1.msra.mxu0 0.0
      %3029 = vmatprep.subr.mxu0 0.0
      %3030 = vmatpush1.msra.mxu0 0.0
      %3031 = vmatprep.subr.mxu0 0.0
      %3032 = vmatpush1.msra.mxu0 0.0
      %3033 = vmatprep.subr.mxu0 0.0
      %3034 = vmatpush1.msra.mxu0 0.0
      %3035 = vmatprep.subr.mxu0 0.0
      %3036 = vmatpush1.msra.mxu0 0.0
      %3037 = vmatprep.subr.mxu0 0.0
      %3038 = vmatpush1.msra.mxu0 0.0
      %3039 = vmatprep.subr.mxu0 0.0
      %3040 = vmatpush1.msra.mxu0 0.0
      %3041 = vmatprep.subr.mxu0 0.0
      %3042 = vmatpush1.msra.mxu0 0.0
      %3043 = vmatprep.subr.mxu0 0.0
      %3044 = vmatpush1.msra.mxu0 0.0
      %3045 = vmatprep.subr.mxu0 0.0
      %3046 = vmatpush1.msra.mxu0 0.0
      %3047 = vmatprep.subr.mxu0 0.0
      %3048 = vmatpush1.msra.mxu0 0.0
      %3049 = vmatprep.subr.mxu0 0.0
      %3050 = vmatpush1.msra.mxu0 0.0
      %3051 = vmatprep.subr.mxu0 0.0
      %3052 = vmatpush1.msra.mxu0 0.0
      %3053 = vmatprep.subr.mxu0 0.0
      %3054 = vmatpush1.msra.mxu0 0.0
      %3055 = vmatprep.subr.mxu0 0.0
      %3056 = vmatpush1.msra.mxu0 0.0
      %3057 = vmatprep.subr.mxu0 0.0
      %3058 = vmatpush1.msra.mxu0 0.0
      %3059 = vmatprep.subr.mxu0 0.0
      %3060 = vmatpush1.msra.mxu0 0.0
      %3061 = vmatprep.subr.mxu0 0.0
      %3062 = vmatpush1.msra.mxu0 0.0
      %3063 = vmatprep.mubr.f32.mxu0 0.0
      %3064 = vmatmul.mubr.f32.gmra.mrb[0].mxu0 %v2976
      %v3065 = vpop.f32.mrb[0].mxu0
      %v3066 = vadd.f32 %v2938, %v3065
      %v3067 = vpop.f32.mrb[0].mxu0
      %v3068 = vadd.f32 %v2938, %v3067
      %3069 = vmatprep.mubr.f32.mxu0 0.0
      %3070 = vmatmul.mubr.f32.gmra.mrb[0].mxu0 %v2979
      %v3071 = vpop.f32.mrb[0].mxu0
      %v3072 = vadd.f32 %v2943, %v3071
      %v3073 = vpop.f32.mrb[0].mxu0
      %v3074 = vadd.f32 %v2943, %v3073
      %3075 = vmatprep.mubr.f32.mxu0 0.0
      %3076 = vmatmul.mubr.f32.gmra.mrb[0].mxu0 %v2982
      %v3077 = vpop.f32.mrb[0].mxu0
      %v3078 = vadd.f32 %v2948, %v3077
      %v3079 = vpop.f32.mrb[0].mxu0
      %v3080 = vadd.f32 %v2948, %v3079
      %3081 = vmatprep.mubr.f32.mxu0 0.0
      %3082 = vmatmul.mubr.f32.gmra.mrb[0].mxu0 %v2985
      %v3083 = vpop.f32.mrb[0].mxu0
      %v3084 = vadd.f32 %v2953, %v3083
      %v3085 = vpop.f32.mrb[0].mxu0
      %v3086 = vadd.f32 %v2953, %v3085
      %3087 = vmatprep.mubr.f32.mxu0 0.0
      %3088 = vmatmul.mubr.f32.gmra.mrb[0].mxu0 %v2988
      %v3089 = vpop.f32.mrb[0].mxu0
      %v3090 = vadd.f32 %v2958, %v3089
      %v3091 = vpop.f32.mrb[0].mxu0
      %v3092 = vadd.f32 %v2958, %v3091
      %3093 = vmatprep.mubr.f32.mxu0 0.0
      %3094 = vmatmul.mubr.f32.gmra.mrb[0].mxu0 %v2991
      %v3095 = vpop.f32.mrb[0].mxu0
      %v3096 = vadd.f32 %v2963, %v3095
      %v3097 = vpop.f32.mrb[0].mxu0
      %v3098 = vadd.f32 %v2963, %v3097
      %3099 = vmatprep.mubr.f32.mxu0 0.0
      %3100 = vmatmul.mubr.f32.gmra.mrb[0].mxu0 %v2994
      %v3101 = vpop.f32.mrb[0].mxu0
      %v3102 = vadd.f32 %v2968, %v3101
      %v3103 = vpop.f32.mrb[0].mxu0
      %v3104 = vadd.f32 %v2968, %v3103
      %3105 = vmatprep.mubr.f32.mxu0 0.0
      %3106 = vmatmul.mubr.f32.gmra.mrb[0].mxu0 %v2997
      %v3107 = vpop.f32.mrb[0].mxu0
      %v3108 = vadd.f32 %v2973, %v3107
      %v3109 = vpop.f32.mrb[0].mxu0
      %v3110 = vadd.f32 %v2973, %v3109
      %3111 = vdwg.mxu0
      %v3112 = vmax.f32 %v3066, 0.0
      %v3113 = vmax.f32 %v3068, 0.0
      %v3114 = vmax.f32 %v3072, 0.0
      %v3115 = vmax.f32 %v3074, 0.0
      %v3116 = vmax.f32 %v3078, 0.0
      %v3117 = vmax.f32 %v3080, 0.0
      %v3118 = vmax.f32 %v3084, 0.0
      %v3119 = vmax.f32 %v3086, 0.0
      %v3120 = vmax.f32 %v3090, 0.0
      %v3121 = vmax.f32 %v3092, 0.0
      %v3122 = vmax.f32 %v3096, 0.0
      %v3123 = vmax.f32 %v3098, 0.0
      %v3124 = vmax.f32 %v3102, 0.0
      %v3125 = vmax.f32 %v3104, 0.0
      %v3126 = vmax.f32 %v3108, 0.0
      %v3127 = vmax.f32 %v3110, 0.0
      %s3128 = scalar_lea.vmem %s1, 192
      %v3129 = vld [vmem:[%s3128] sm:$0xff]
      %v3130 = vld [vmem:[%s3128 + $0x8] sm:$0xff]
      %v3131 = vld [vmem:[%s3128 + $0x10] sm:$0xff]
      %v3132 = vld [vmem:[%s3128 + $0x18] sm:$0xff]
      %v3133 = vld [vmem:[%s3128 + $0x20] sm:$0xff]
      %v3134 = vld [vmem:[%s3128 + $0x28] sm:$0xff]
      %v3135 = vld [vmem:[%s3128 + $0x30] sm:$0xff]
      %v3136 = vld [vmem:[%s3128 + $0x38] sm:$0xff]
      %s3137 = scalar_lea.vmem %s2, 192
      %v3138 = vld [vmem:[%s3137] sm:$0xff]
      %v3139 = vld [vmem:[%s3137 + $0x8] sm:$0xff]
      %v3140 = vld [vmem:[%s3137 + $0x10] sm:$0xff]
      %v3141 = vld [vmem:[%s3137 + $0x18] sm:$0xff]
      %v3142 = vld [vmem:[%s3137 + $0x20] sm:$0xff]
      %v3143 = vld [vmem:[%s3137 + $0x28] sm:$0xff]
      %v3144 = vld [vmem:[%s3137 + $0x30] sm:$0xff]
      %v3145 = vld [vmem:[%s3137 + $0x38] sm:$0xff]
      %3147 = vset.pattern.permute.xlu0 0
      %3148 = vperm.xlu0 %3147, %v3138
      %v3149 = vpop.permute.xlu0 %3148
      %3152 = vset.pattern.permute.xlu0 0
      %3153 = vperm.xlu0 %3152, %v3139
      %v3154 = vpop.permute.xlu0 %3153
      %3157 = vset.pattern.permute.xlu0 0
      %3158 = vperm.xlu0 %3157, %v3140
      %v3159 = vpop.permute.xlu0 %3158
      %3162 = vset.pattern.permute.xlu0 0
      %3163 = vperm.xlu0 %3162, %v3141
      %v3164 = vpop.permute.xlu0 %3163
      %3167 = vset.pattern.permute.xlu0 0
      %3168 = vperm.xlu0 %3167, %v3142
      %v3169 = vpop.permute.xlu0 %3168
      %3172 = vset.pattern.permute.xlu0 0
      %3173 = vperm.xlu0 %3172, %v3143
      %v3174 = vpop.permute.xlu0 %3173
      %3177 = vset.pattern.permute.xlu0 0
      %3178 = vperm.xlu0 %3177, %v3144
      %v3179 = vpop.permute.xlu0 %3178
      %3182 = vset.pattern.permute.xlu0 0
      %3183 = vperm.xlu0 %3182, %v3145
      %v3184 = vpop.permute.xlu0 %3183
      %v3187 = vsel %vm2552, %v3129, 0
      %v3190 = vsel %vm2552, %v3130, 0
      %v3193 = vsel %vm2552, %v3131, 0
      %v3196 = vsel %vm2552, %v3132, 0
      %v3199 = vsel %vm2552, %v3133, 0
      %v3202 = vsel %vm2552, %v3134, 0
      %v3205 = vsel %vm2552, %v3135, 0
      %v3208 = vsel %vm2552, %v3136, 0
      %3210 = vmatprep.subr.mxu0 %v3113
      %3211 = vmatpush1.msra.mxu0 %v3112
      %3212 = vmatprep.subr.mxu0 %v3115
      %3213 = vmatpush1.msra.mxu0 %v3114
      %3214 = vmatprep.subr.mxu0 %v3117
      %3215 = vmatpush1.msra.mxu0 %v3116
      %3216 = vmatprep.subr.mxu0 %v3119
      %3217 = vmatpush1.msra.mxu0 %v3118
      %3218 = vmatprep.subr.mxu0 %v3121
      %3219 = vmatpush1.msra.mxu0 %v3120
      %3220 = vmatprep.subr.mxu0 %v3123
      %3221 = vmatpush1.msra.mxu0 %v3122
      %3222 = vmatprep.subr.mxu0 %v3125
      %3223 = vmatpush1.msra.mxu0 %v3124
      %3224 = vmatprep.subr.mxu0 %v3127
      %3225 = vmatpush1.msra.mxu0 %v3126
      %3226 = vmatprep.subr.mxu0 0.0
      %3227 = vmatpush1.msra.mxu0 0.0
      %3228 = vmatprep.subr.mxu0 0.0
      %3229 = vmatpush1.msra.mxu0 0.0
      %3230 = vmatprep.subr.mxu0 0.0
      %3231 = vmatpush1.msra.mxu0 0.0
      %3232 = vmatprep.subr.mxu0 0.0
      %3233 = vmatpush1.msra.mxu0 0.0
      %3234 = vmatprep.subr.mxu0 0.0
      %3235 = vmatpush1.msra.mxu0 0.0
      %3236 = vmatprep.subr.mxu0 0.0
      %3237 = vmatpush1.msra.mxu0 0.0
      %3238 = vmatprep.subr.mxu0 0.0
      %3239 = vmatpush1.msra.mxu0 0.0
      %3240 = vmatprep.subr.mxu0 0.0
      %3241 = vmatpush1.msra.mxu0 0.0
      %3242 = vmatprep.subr.mxu0 0.0
      %3243 = vmatpush1.msra.mxu0 0.0
      %3244 = vmatprep.subr.mxu0 0.0
      %3245 = vmatpush1.msra.mxu0 0.0
      %3246 = vmatprep.subr.mxu0 0.0
      %3247 = vmatpush1.msra.mxu0 0.0
      %3248 = vmatprep.subr.mxu0 0.0
      %3249 = vmatpush1.msra.mxu0 0.0
      %3250 = vmatprep.subr.mxu0 0.0
      %3251 = vmatpush1.msra.mxu0 0.0
      %3252 = vmatprep.subr.mxu0 0.0
      %3253 = vmatpush1.msra.mxu0 0.0
      %3254 = vmatprep.subr.mxu0 0.0
      %3255 = vmatpush1.msra.mxu0 0.0
      %3256 = vmatprep.subr.mxu0 0.0
      %3257 = vmatpush1.msra.mxu0 0.0
      %3258 = vmatprep.subr.mxu0 0.0
      %3259 = vmatpush1.msra.mxu0 0.0
      %3260 = vmatprep.subr.mxu0 0.0
      %3261 = vmatpush1.msra.mxu0 0.0
      %3262 = vmatprep.subr.mxu0 0.0
      %3263 = vmatpush1.msra.mxu0 0.0
      %3264 = vmatprep.subr.mxu0 0.0
      %3265 = vmatpush1.msra.mxu0 0.0
      %3266 = vmatprep.subr.mxu0 0.0
      %3267 = vmatpush1.msra.mxu0 0.0
      %3268 = vmatprep.subr.mxu0 0.0
      %3269 = vmatpush1.msra.mxu0 0.0
      %3270 = vmatprep.subr.mxu0 0.0
      %3271 = vmatpush1.msra.mxu0 0.0
      %3272 = vmatprep.subr.mxu0 0.0
      %3273 = vmatpush1.msra.mxu0 0.0
      %3274 = vmatprep.mubr.f32.mxu0 0.0
      %3275 = vmatmul.mubr.f32.gmra.mrb[0].mxu0 %v3187
      %v3276 = vpop.f32.mrb[0].mxu0
      %v3277 = vadd.f32 %v3149, %v3276
      %v3278 = vpop.f32.mrb[0].mxu0
      %v3279 = vadd.f32 %v3149, %v3278
      %3280 = vmatprep.mubr.f32.mxu0 0.0
      %3281 = vmatmul.mubr.f32.gmra.mrb[0].mxu0 %v3190
      %v3282 = vpop.f32.mrb[0].mxu0
      %v3283 = vadd.f32 %v3154, %v3282
      %v3284 = vpop.f32.mrb[0].mxu0
      %v3285 = vadd.f32 %v3154, %v3284
      %3286 = vmatprep.mubr.f32.mxu0 0.0
      %3287 = vmatmul.mubr.f32.gmra.mrb[0].mxu0 %v3193
      %v3288 = vpop.f32.mrb[0].mxu0
      %v3289 = vadd.f32 %v3159, %v3288
      %v3290 = vpop.f32.mrb[0].mxu0
      %v3291 = vadd.f32 %v3159, %v3290
      %3292 = vmatprep.mubr.f32.mxu0 0.0
      %3293 = vmatmul.mubr.f32.gmra.mrb[0].mxu0 %v3196
      %v3294 = vpop.f32.mrb[0].mxu0
      %v3295 = vadd.f32 %v3164, %v3294
      %v3296 = vpop.f32.mrb[0].mxu0
      %v3297 = vadd.f32 %v3164, %v3296
      %3298 = vmatprep.mubr.f32.mxu0 0.0
      %3299 = vmatmul.mubr.f32.gmra.mrb[0].mxu0 %v3199
      %v3300 = vpop.f32.mrb[0].mxu0
      %v3301 = vadd.f32 %v3169, %v3300
      %v3302 = vpop.f32.mrb[0].mxu0
      %v3303 = vadd.f32 %v3169, %v3302
      %3304 = vmatprep.mubr.f32.mxu0 0.0
      %3305 = vmatmul.mubr.f32.gmra.mrb[0].mxu0 %v3202
      %v3306 = vpop.f32.mrb[0].mxu0
      %v3307 = vadd.f32 %v3174, %v3306
      %v3308 = vpop.f32.mrb[0].mxu0
      %v3309 = vadd.f32 %v3174, %v3308
      %3310 = vmatprep.mubr.f32.mxu0 0.0
      %3311 = vmatmul.mubr.f32.gmra.mrb[0].mxu0 %v3205
      %v3312 = vpop.f32.mrb[0].mxu0
      %v3313 = vadd.f32 %v3179, %v3312
      %v3314 = vpop.f32.mrb[0].mxu0
      %v3315 = vadd.f32 %v3179, %v3314
      %3316 = vmatprep.mubr.f32.mxu0 0.0
      %3317 = vmatmul.mubr.f32.gmra.mrb[0].mxu0 %v3208
      %v3318 = vpop.f32.mrb[0].mxu0
      %v3319 = vadd.f32 %v3184, %v3318
      %v3320 = vpop.f32.mrb[0].mxu0
      %v3321 = vadd.f32 %v3184, %v3320
      %3322 = vdwg.mxu0
      %v3323 = vmax.f32 %v3277, 0.0
      %v3324 = vmax.f32 %v3279, 0.0
      %v3325 = vmax.f32 %v3283, 0.0
      %v3326 = vmax.f32 %v3285, 0.0
      %v3327 = vmax.f32 %v3289, 0.0
      %v3328 = vmax.f32 %v3291, 0.0
      %v3329 = vmax.f32 %v3295, 0.0
      %v3330 = vmax.f32 %v3297, 0.0
      %v3331 = vmax.f32 %v3301, 0.0
      %v3332 = vmax.f32 %v3303, 0.0
      %v3333 = vmax.f32 %v3307, 0.0
      %v3334 = vmax.f32 %v3309, 0.0
      %v3335 = vmax.f32 %v3313, 0.0
      %v3336 = vmax.f32 %v3315, 0.0
      %v3337 = vmax.f32 %v3319, 0.0
      %v3338 = vmax.f32 %v3321, 0.0
      %s3339 = scalar_lea.vmem %s1, 256
      %v3340 = vld [vmem:[%s3339] sm:$0xff]
      %v3341 = vld [vmem:[%s3339 + $0x8] sm:$0xff]
      %v3342 = vld [vmem:[%s3339 + $0x10] sm:$0xff]
      %v3343 = vld [vmem:[%s3339 + $0x18] sm:$0xff]
      %v3344 = vld [vmem:[%s3339 + $0x20] sm:$0xff]
      %v3345 = vld [vmem:[%s3339 + $0x28] sm:$0xff]
      %v3346 = vld [vmem:[%s3339 + $0x30] sm:$0xff]
      %v3347 = vld [vmem:[%s3339 + $0x38] sm:$0xff]
      %s3348 = scalar_lea.vmem %s2, 256
      %v3349 = vld [vmem:[%s3348] sm:$0xff]
      %v3350 = vld [vmem:[%s3348 + $0x8] sm:$0xff]
      %v3351 = vld [vmem:[%s3348 + $0x10] sm:$0xff]
      %v3352 = vld [vmem:[%s3348 + $0x18] sm:$0xff]
      %v3353 = vld [vmem:[%s3348 + $0x20] sm:$0xff]
      %v3354 = vld [vmem:[%s3348 + $0x28] sm:$0xff]
      %v3355 = vld [vmem:[%s3348 + $0x30] sm:$0xff]
      %v3356 = vld [vmem:[%s3348 + $0x38] sm:$0xff]
      %3358 = vset.pattern.permute.xlu0 0
      %3359 = vperm.xlu0 %3358, %v3349
      %v3360 = vpop.permute.xlu0 %3359
      %3363 = vset.pattern.permute.xlu0 0
      %3364 = vperm.xlu0 %3363, %v3350
      %v3365 = vpop.permute.xlu0 %3364
      %3368 = vset.pattern.permute.xlu0 0
      %3369 = vperm.xlu0 %3368, %v3351
      %v3370 = vpop.permute.xlu0 %3369
      %3373 = vset.pattern.permute.xlu0 0
      %3374 = vperm.xlu0 %3373, %v3352
      %v3375 = vpop.permute.xlu0 %3374
      %3378 = vset.pattern.permute.xlu0 0
      %3379 = vperm.xlu0 %3378, %v3353
      %v3380 = vpop.permute.xlu0 %3379
      %3383 = vset.pattern.permute.xlu0 0
      %3384 = vperm.xlu0 %3383, %v3354
      %v3385 = vpop.permute.xlu0 %3384
      %3388 = vset.pattern.permute.xlu0 0
      %3389 = vperm.xlu0 %3388, %v3355
      %v3390 = vpop.permute.xlu0 %3389
      %3393 = vset.pattern.permute.xlu0 0
      %3394 = vperm.xlu0 %3393, %v3356
      %v3395 = vpop.permute.xlu0 %3394
      %v3398 = vsel %vm2552, %v3340, 0
      %v3401 = vsel %vm2552, %v3341, 0
      %v3404 = vsel %vm2552, %v3342, 0
      %v3407 = vsel %vm2552, %v3343, 0
      %v3410 = vsel %vm2552, %v3344, 0
      %v3413 = vsel %vm2552, %v3345, 0
      %v3416 = vsel %vm2552, %v3346, 0
      %v3419 = vsel %vm2552, %v3347, 0
      %3421 = vmatprep.subr.mxu0 %v3324
      %3422 = vmatpush1.msra.mxu0 %v3323
      %3423 = vmatprep.subr.mxu0 %v3326
      %3424 = vmatpush1.msra.mxu0 %v3325
      %3425 = vmatprep.subr.mxu0 %v3328
      %3426 = vmatpush1.msra.mxu0 %v3327
      %3427 = vmatprep.subr.mxu0 %v3330
      %3428 = vmatpush1.msra.mxu0 %v3329
      %3429 = vmatprep.subr.mxu0 %v3332
      %3430 = vmatpush1.msra.mxu0 %v3331
      %3431 = vmatprep.subr.mxu0 %v3334
      %3432 = vmatpush1.msra.mxu0 %v3333
      %3433 = vmatprep.subr.mxu0 %v3336
      %3434 = vmatpush1.msra.mxu0 %v3335
      %3435 = vmatprep.subr.mxu0 %v3338
      %3436 = vmatpush1.msra.mxu0 %v3337
      %3437 = vmatprep.subr.mxu0 0.0
      %3438 = vmatpush1.msra.mxu0 0.0
      %3439 = vmatprep.subr.mxu0 0.0
      %3440 = vmatpush1.msra.mxu0 0.0
      %3441 = vmatprep.subr.mxu0 0.0
      %3442 = vmatpush1.msra.mxu0 0.0
      %3443 = vmatprep.subr.mxu0 0.0
      %3444 = vmatpush1.msra.mxu0 0.0
      %3445 = vmatprep.subr.mxu0 0.0
      %3446 = vmatpush1.msra.mxu0 0.0
      %3447 = vmatprep.subr.mxu0 0.0
      %3448 = vmatpush1.msra.mxu0 0.0
      %3449 = vmatprep.subr.mxu0 0.0
      %3450 = vmatpush1.msra.mxu0 0.0
      %3451 = vmatprep.subr.mxu0 0.0
      %3452 = vmatpush1.msra.mxu0 0.0
      %3453 = vmatprep.subr.mxu0 0.0
      %3454 = vmatpush1.msra.mxu0 0.0
      %3455 = vmatprep.subr.mxu0 0.0
      %3456 = vmatpush1.msra.mxu0 0.0
      %3457 = vmatprep.subr.mxu0 0.0
      %3458 = vmatpush1.msra.mxu0 0.0
      %3459 = vmatprep.subr.mxu0 0.0
      %3460 = vmatpush1.msra.mxu0 0.0
      %3461 = vmatprep.subr.mxu0 0.0
      %3462 = vmatpush1.msra.mxu0 0.0
      %3463 = vmatprep.subr.mxu0 0.0
      %3464 = vmatpush1.msra.mxu0 0.0
      %3465 = vmatprep.subr.mxu0 0.0
      %3466 = vmatpush1.msra.mxu0 0.0
      %3467 = vmatprep.subr.mxu0 0.0
      %3468 = vmatpush1.msra.mxu0 0.0
      %3469 = vmatprep.subr.mxu0 0.0
      %3470 = vmatpush1.msra.mxu0 0.0
      %3471 = vmatprep.subr.mxu0 0.0
      %3472 = vmatpush1.msra.mxu0 0.0
      %3473 = vmatprep.subr.mxu0 0.0
      %3474 = vmatpush1.msra.mxu0 0.0
      %3475 = vmatprep.subr.mxu0 0.0
      %3476 = vmatpush1.msra.mxu0 0.0
      %3477 = vmatprep.subr.mxu0 0.0
      %3478 = vmatpush1.msra.mxu0 0.0
      %3479 = vmatprep.subr.mxu0 0.0
      %3480 = vmatpush1.msra.mxu0 0.0
      %3481 = vmatprep.subr.mxu0 0.0
      %3482 = vmatpush1.msra.mxu0 0.0
      %3483 = vmatprep.subr.mxu0 0.0
      %3484 = vmatpush1.msra.mxu0 0.0
      %3485 = vmatprep.mubr.f32.mxu0 0.0
      %3486 = vmatmul.mubr.f32.gmra.mrb[0].mxu0 %v3398
      %v3487 = vpop.f32.mrb[0].mxu0
      %v3488 = vadd.f32 %v3360, %v3487
      %v3489 = vpop.f32.mrb[0].mxu0
      %v3490 = vadd.f32 %v3360, %v3489
      %3491 = vmatprep.mubr.f32.mxu0 0.0
      %3492 = vmatmul.mubr.f32.gmra.mrb[0].mxu0 %v3401
      %v3493 = vpop.f32.mrb[0].mxu0
      %v3494 = vadd.f32 %v3365, %v3493
      %v3495 = vpop.f32.mrb[0].mxu0
      %v3496 = vadd.f32 %v3365, %v3495
      %3497 = vmatprep.mubr.f32.mxu0 0.0
      %3498 = vmatmul.mubr.f32.gmra.mrb[0].mxu0 %v3404
      %v3499 = vpop.f32.mrb[0].mxu0
      %v3500 = vadd.f32 %v3370, %v3499
      %v3501 = vpop.f32.mrb[0].mxu0
      %v3502 = vadd.f32 %v3370, %v3501
      %3503 = vmatprep.mubr.f32.mxu0 0.0
      %3504 = vmatmul.mubr.f32.gmra.mrb[0].mxu0 %v3407
      %v3505 = vpop.f32.mrb[0].mxu0
      %v3506 = vadd.f32 %v3375, %v3505
      %v3507 = vpop.f32.mrb[0].mxu0
      %v3508 = vadd.f32 %v3375, %v3507
      %3509 = vmatprep.mubr.f32.mxu0 0.0
      %3510 = vmatmul.mubr.f32.gmra.mrb[0].mxu0 %v3410
      %v3511 = vpop.f32.mrb[0].mxu0
      %v3512 = vadd.f32 %v3380, %v3511
      %v3513 = vpop.f32.mrb[0].mxu0
      %v3514 = vadd.f32 %v3380, %v3513
      %3515 = vmatprep.mubr.f32.mxu0 0.0
      %3516 = vmatmul.mubr.f32.gmra.mrb[0].mxu0 %v3413
      %v3517 = vpop.f32.mrb[0].mxu0
      %v3518 = vadd.f32 %v3385, %v3517
      %v3519 = vpop.f32.mrb[0].mxu0
      %v3520 = vadd.f32 %v3385, %v3519
      %3521 = vmatprep.mubr.f32.mxu0 0.0
      %3522 = vmatmul.mubr.f32.gmra.mrb[0].mxu0 %v3416
      %v3523 = vpop.f32.mrb[0].mxu0
      %v3524 = vadd.f32 %v3390, %v3523
      %v3525 = vpop.f32.mrb[0].mxu0
      %v3526 = vadd.f32 %v3390, %v3525
      %3527 = vmatprep.mubr.f32.mxu0 0.0
      %3528 = vmatmul.mubr.f32.gmra.mrb[0].mxu0 %v3419
      %v3529 = vpop.f32.mrb[0].mxu0
      %v3530 = vadd.f32 %v3395, %v3529
      %v3531 = vpop.f32.mrb[0].mxu0
      %v3532 = vadd.f32 %v3395, %v3531
      %3533 = vdwg.mxu0
      %v3534 = vmax.f32 %v3488, 0.0
      %v3535 = vmax.f32 %v3490, 0.0
      %v3536 = vmax.f32 %v3494, 0.0
      %v3537 = vmax.f32 %v3496, 0.0
      %v3538 = vmax.f32 %v3500, 0.0
      %v3539 = vmax.f32 %v3502, 0.0
      %v3540 = vmax.f32 %v3506, 0.0
      %v3541 = vmax.f32 %v3508, 0.0
      %v3542 = vmax.f32 %v3512, 0.0
      %v3543 = vmax.f32 %v3514, 0.0
      %v3544 = vmax.f32 %v3518, 0.0
      %v3545 = vmax.f32 %v3520, 0.0
      %v3546 = vmax.f32 %v3524, 0.0
      %v3547 = vmax.f32 %v3526, 0.0
      %v3548 = vmax.f32 %v3530, 0.0
      %v3549 = vmax.f32 %v3532, 0.0
      %s3550 = scalar_lea.vmem %s1, 320
      %v3551 = vld [vmem:[%s3550] sm:$0xff]
      %v3552 = vld [vmem:[%s3550 + $0x8] sm:$0xff]
      %v3553 = vld [vmem:[%s3550 + $0x10] sm:$0xff]
      %v3554 = vld [vmem:[%s3550 + $0x18] sm:$0xff]
      %v3555 = vld [vmem:[%s3550 + $0x20] sm:$0xff]
      %v3556 = vld [vmem:[%s3550 + $0x28] sm:$0xff]
      %v3557 = vld [vmem:[%s3550 + $0x30] sm:$0xff]
      %v3558 = vld [vmem:[%s3550 + $0x38] sm:$0xff]
      %s3559 = scalar_lea.vmem %s2, 320
      %v3560 = vld [vmem:[%s3559] sm:$0xff]
      %v3561 = vld [vmem:[%s3559 + $0x8] sm:$0xff]
      %v3562 = vld [vmem:[%s3559 + $0x10] sm:$0xff]
      %v3563 = vld [vmem:[%s3559 + $0x18] sm:$0xff]
      %v3564 = vld [vmem:[%s3559 + $0x20] sm:$0xff]
      %v3565 = vld [vmem:[%s3559 + $0x28] sm:$0xff]
      %v3566 = vld [vmem:[%s3559 + $0x30] sm:$0xff]
      %v3567 = vld [vmem:[%s3559 + $0x38] sm:$0xff]
      %3569 = vset.pattern.permute.xlu0 0
      %3570 = vperm.xlu0 %3569, %v3560
      %v3571 = vpop.permute.xlu0 %3570
      %3574 = vset.pattern.permute.xlu0 0
      %3575 = vperm.xlu0 %3574, %v3561
      %v3576 = vpop.permute.xlu0 %3575
      %3579 = vset.pattern.permute.xlu0 0
      %3580 = vperm.xlu0 %3579, %v3562
      %v3581 = vpop.permute.xlu0 %3580
      %3584 = vset.pattern.permute.xlu0 0
      %3585 = vperm.xlu0 %3584, %v3563
      %v3586 = vpop.permute.xlu0 %3585
      %3589 = vset.pattern.permute.xlu0 0
      %3590 = vperm.xlu0 %3589, %v3564
      %v3591 = vpop.permute.xlu0 %3590
      %3594 = vset.pattern.permute.xlu0 0
      %3595 = vperm.xlu0 %3594, %v3565
      %v3596 = vpop.permute.xlu0 %3595
      %3599 = vset.pattern.permute.xlu0 0
      %3600 = vperm.xlu0 %3599, %v3566
      %v3601 = vpop.permute.xlu0 %3600
      %3604 = vset.pattern.permute.xlu0 0
      %3605 = vperm.xlu0 %3604, %v3567
      %v3606 = vpop.permute.xlu0 %3605
      %v3609 = vsel %vm2552, %v3551, 0
      %v3612 = vsel %vm2552, %v3552, 0
      %v3615 = vsel %vm2552, %v3553, 0
      %v3618 = vsel %vm2552, %v3554, 0
      %v3621 = vsel %vm2552, %v3555, 0
      %v3624 = vsel %vm2552, %v3556, 0
      %v3627 = vsel %vm2552, %v3557, 0
      %v3630 = vsel %vm2552, %v3558, 0
      %3632 = vmatprep.subr.mxu0 %v3535
      %3633 = vmatpush1.msra.mxu0 %v3534
      %3634 = vmatprep.subr.mxu0 %v3537
      %3635 = vmatpush1.msra.mxu0 %v3536
      %3636 = vmatprep.subr.mxu0 %v3539
      %3637 = vmatpush1.msra.mxu0 %v3538
      %3638 = vmatprep.subr.mxu0 %v3541
      %3639 = vmatpush1.msra.mxu0 %v3540
      %3640 = vmatprep.subr.mxu0 %v3543
      %3641 = vmatpush1.msra.mxu0 %v3542
      %3642 = vmatprep.subr.mxu0 %v3545
      %3643 = vmatpush1.msra.mxu0 %v3544
      %3644 = vmatprep.subr.mxu0 %v3547
      %3645 = vmatpush1.msra.mxu0 %v3546
      %3646 = vmatprep.subr.mxu0 %v3549
      %3647 = vmatpush1.msra.mxu0 %v3548
      %3648 = vmatprep.subr.mxu0 0.0
      %3649 = vmatpush1.msra.mxu0 0.0
      %3650 = vmatprep.subr.mxu0 0.0
      %3651 = vmatpush1.msra.mxu0 0.0
      %3652 = vmatprep.subr.mxu0 0.0
      %3653 = vmatpush1.msra.mxu0 0.0
      %3654 = vmatprep.subr.mxu0 0.0
      %3655 = vmatpush1.msra.mxu0 0.0
      %3656 = vmatprep.subr.mxu0 0.0
      %3657 = vmatpush1.msra.mxu0 0.0
      %3658 = vmatprep.subr.mxu0 0.0
      %3659 = vmatpush1.msra.mxu0 0.0
      %3660 = vmatprep.subr.mxu0 0.0
      %3661 = vmatpush1.msra.mxu0 0.0
      %3662 = vmatprep.subr.mxu0 0.0
      %3663 = vmatpush1.msra.mxu0 0.0
      %3664 = vmatprep.subr.mxu0 0.0
      %3665 = vmatpush1.msra.mxu0 0.0
      %3666 = vmatprep.subr.mxu0 0.0
      %3667 = vmatpush1.msra.mxu0 0.0
      %3668 = vmatprep.subr.mxu0 0.0
      %3669 = vmatpush1.msra.mxu0 0.0
      %3670 = vmatprep.subr.mxu0 0.0
      %3671 = vmatpush1.msra.mxu0 0.0
      %3672 = vmatprep.subr.mxu0 0.0
      %3673 = vmatpush1.msra.mxu0 0.0
      %3674 = vmatprep.subr.mxu0 0.0
      %3675 = vmatpush1.msra.mxu0 0.0
      %3676 = vmatprep.subr.mxu0 0.0
      %3677 = vmatpush1.msra.mxu0 0.0
      %3678 = vmatprep.subr.mxu0 0.0
      %3679 = vmatpush1.msra.mxu0 0.0
      %3680 = vmatprep.subr.mxu0 0.0
      %3681 = vmatpush1.msra.mxu0 0.0
      %3682 = vmatprep.subr.mxu0 0.0
      %3683 = vmatpush1.msra.mxu0 0.0
      %3684 = vmatprep.subr.mxu0 0.0
      %3685 = vmatpush1.msra.mxu0 0.0
      %3686 = vmatprep.subr.mxu0 0.0
      %3687 = vmatpush1.msra.mxu0 0.0
      %3688 = vmatprep.subr.mxu0 0.0
      %3689 = vmatpush1.msra.mxu0 0.0
      %3690 = vmatprep.subr.mxu0 0.0
      %3691 = vmatpush1.msra.mxu0 0.0
      %3692 = vmatprep.subr.mxu0 0.0
      %3693 = vmatpush1.msra.mxu0 0.0
      %3694 = vmatprep.subr.mxu0 0.0
      %3695 = vmatpush1.msra.mxu0 0.0
      %3696 = vmatprep.mubr.f32.mxu0 0.0
      %3697 = vmatmul.mubr.f32.gmra.mrb[0].mxu0 %v3609
      %v3698 = vpop.f32.mrb[0].mxu0
      %v3699 = vadd.f32 %v3571, %v3698
      %v3700 = vpop.f32.mrb[0].mxu0
      %v3701 = vadd.f32 %v3571, %v3700
      %3702 = vmatprep.mubr.f32.mxu0 0.0
      %3703 = vmatmul.mubr.f32.gmra.mrb[0].mxu0 %v3612
      %v3704 = vpop.f32.mrb[0].mxu0
      %v3705 = vadd.f32 %v3576, %v3704
      %v3706 = vpop.f32.mrb[0].mxu0
      %v3707 = vadd.f32 %v3576, %v3706
      %3708 = vmatprep.mubr.f32.mxu0 0.0
      %3709 = vmatmul.mubr.f32.gmra.mrb[0].mxu0 %v3615
      %v3710 = vpop.f32.mrb[0].mxu0
      %v3711 = vadd.f32 %v3581, %v3710
      %v3712 = vpop.f32.mrb[0].mxu0
      %v3713 = vadd.f32 %v3581, %v3712
      %3714 = vmatprep.mubr.f32.mxu0 0.0
      %3715 = vmatmul.mubr.f32.gmra.mrb[0].mxu0 %v3618
      %v3716 = vpop.f32.mrb[0].mxu0
      %v3717 = vadd.f32 %v3586, %v3716
      %v3718 = vpop.f32.mrb[0].mxu0
      %v3719 = vadd.f32 %v3586, %v3718
      %3720 = vmatprep.mubr.f32.mxu0 0.0
      %3721 = vmatmul.mubr.f32.gmra.mrb[0].mxu0 %v3621
      %v3722 = vpop.f32.mrb[0].mxu0
      %v3723 = vadd.f32 %v3591, %v3722
      %v3724 = vpop.f32.mrb[0].mxu0
      %v3725 = vadd.f32 %v3591, %v3724
      %3726 = vmatprep.mubr.f32.mxu0 0.0
      %3727 = vmatmul.mubr.f32.gmra.mrb[0].mxu0 %v3624
      %v3728 = vpop.f32.mrb[0].mxu0
      %v3729 = vadd.f32 %v3596, %v3728
      %v3730 = vpop.f32.mrb[0].mxu0
      %v3731 = vadd.f32 %v3596, %v3730
      %3732 = vmatprep.mubr.f32.mxu0 0.0
      %3733 = vmatmul.mubr.f32.gmra.mrb[0].mxu0 %v3627
      %v3734 = vpop.f32.mrb[0].mxu0
      %v3735 = vadd.f32 %v3601, %v3734
      %v3736 = vpop.f32.mrb[0].mxu0
      %v3737 = vadd.f32 %v3601, %v3736
      %3738 = vmatprep.mubr.f32.mxu0 0.0
      %3739 = vmatmul.mubr.f32.gmra.mrb[0].mxu0 %v3630
      %v3740 = vpop.f32.mrb[0].mxu0
      %v3741 = vadd.f32 %v3606, %v3740
      %v3742 = vpop.f32.mrb[0].mxu0
      %v3743 = vadd.f32 %v3606, %v3742
      %3744 = vdwg.mxu0
      %v3745 = vmax.f32 %v3699, 0.0
      %v3746 = vmax.f32 %v3701, 0.0
      %v3747 = vmax.f32 %v3705, 0.0
      %v3748 = vmax.f32 %v3707, 0.0
      %v3749 = vmax.f32 %v3711, 0.0
      %v3750 = vmax.f32 %v3713, 0.0
      %v3751 = vmax.f32 %v3717, 0.0
      %v3752 = vmax.f32 %v3719, 0.0
      %v3753 = vmax.f32 %v3723, 0.0
      %v3754 = vmax.f32 %v3725, 0.0
      %v3755 = vmax.f32 %v3729, 0.0
      %v3756 = vmax.f32 %v3731, 0.0
      %v3757 = vmax.f32 %v3735, 0.0
      %v3758 = vmax.f32 %v3737, 0.0
      %v3759 = vmax.f32 %v3741, 0.0
      %v3760 = vmax.f32 %v3743, 0.0
      %s3761 = scalar_lea.vmem %s1, 384
      %v3762 = vld [vmem:[%s3761] sm:$0xff]
      %v3763 = vld [vmem:[%s3761 + $0x8] sm:$0xff]
      %v3764 = vld [vmem:[%s3761 + $0x10] sm:$0xff]
      %v3765 = vld [vmem:[%s3761 + $0x18] sm:$0xff]
      %v3766 = vld [vmem:[%s3761 + $0x20] sm:$0xff]
      %v3767 = vld [vmem:[%s3761 + $0x28] sm:$0xff]
      %v3768 = vld [vmem:[%s3761 + $0x30] sm:$0xff]
      %v3769 = vld [vmem:[%s3761 + $0x38] sm:$0xff]
      %s3770 = scalar_lea.vmem %s2, 384
      %v3771 = vld [vmem:[%s3770] sm:$0xff]
      %v3772 = vld [vmem:[%s3770 + $0x8] sm:$0xff]
      %v3773 = vld [vmem:[%s3770 + $0x10] sm:$0xff]
      %v3774 = vld [vmem:[%s3770 + $0x18] sm:$0xff]
      %v3775 = vld [vmem:[%s3770 + $0x20] sm:$0xff]
      %v3776 = vld [vmem:[%s3770 + $0x28] sm:$0xff]
      %v3777 = vld [vmem:[%s3770 + $0x30] sm:$0xff]
      %v3778 = vld [vmem:[%s3770 + $0x38] sm:$0xff]
      %3780 = vset.pattern.permute.xlu0 0
      %3781 = vperm.xlu0 %3780, %v3771
      %v3782 = vpop.permute.xlu0 %3781
      %3785 = vset.pattern.permute.xlu0 0
      %3786 = vperm.xlu0 %3785, %v3772
      %v3787 = vpop.permute.xlu0 %3786
      %3790 = vset.pattern.permute.xlu0 0
      %3791 = vperm.xlu0 %3790, %v3773
      %v3792 = vpop.permute.xlu0 %3791
      %3795 = vset.pattern.permute.xlu0 0
      %3796 = vperm.xlu0 %3795, %v3774
      %v3797 = vpop.permute.xlu0 %3796
      %3800 = vset.pattern.permute.xlu0 0
      %3801 = vperm.xlu0 %3800, %v3775
      %v3802 = vpop.permute.xlu0 %3801
      %3805 = vset.pattern.permute.xlu0 0
      %3806 = vperm.xlu0 %3805, %v3776
      %v3807 = vpop.permute.xlu0 %3806
      %3810 = vset.pattern.permute.xlu0 0
      %3811 = vperm.xlu0 %3810, %v3777
      %v3812 = vpop.permute.xlu0 %3811
      %3815 = vset.pattern.permute.xlu0 0
      %3816 = vperm.xlu0 %3815, %v3778
      %v3817 = vpop.permute.xlu0 %3816
      %v3820 = vsel %vm2552, %v3762, 0
      %v3823 = vsel %vm2552, %v3763, 0
      %v3826 = vsel %vm2552, %v3764, 0
      %v3829 = vsel %vm2552, %v3765, 0
      %v3832 = vsel %vm2552, %v3766, 0
      %v3835 = vsel %vm2552, %v3767, 0
      %v3838 = vsel %vm2552, %v3768, 0
      %v3841 = vsel %vm2552, %v3769, 0
      %3843 = vmatprep.subr.mxu0 %v3746
      %3844 = vmatpush1.msra.mxu0 %v3745
      %3845 = vmatprep.subr.mxu0 %v3748
      %3846 = vmatpush1.msra.mxu0 %v3747
      %3847 = vmatprep.subr.mxu0 %v3750
      %3848 = vmatpush1.msra.mxu0 %v3749
      %3849 = vmatprep.subr.mxu0 %v3752
      %3850 = vmatpush1.msra.mxu0 %v3751
      %3851 = vmatprep.subr.mxu0 %v3754
      %3852 = vmatpush1.msra.mxu0 %v3753
      %3853 = vmatprep.subr.mxu0 %v3756
      %3854 = vmatpush1.msra.mxu0 %v3755
      %3855 = vmatprep.subr.mxu0 %v3758
      %3856 = vmatpush1.msra.mxu0 %v3757
      %3857 = vmatprep.subr.mxu0 %v3760
      %3858 = vmatpush1.msra.mxu0 %v3759
      %3859 = vmatprep.subr.mxu0 0.0
      %3860 = vmatpush1.msra.mxu0 0.0
      %3861 = vmatprep.subr.mxu0 0.0
      %3862 = vmatpush1.msra.mxu0 0.0
      %3863 = vmatprep.subr.mxu0 0.0
      %3864 = vmatpush1.msra.mxu0 0.0
      %3865 = vmatprep.subr.mxu0 0.0
      %3866 = vmatpush1.msra.mxu0 0.0
      %3867 = vmatprep.subr.mxu0 0.0
      %3868 = vmatpush1.msra.mxu0 0.0
      %3869 = vmatprep.subr.mxu0 0.0
      %3870 = vmatpush1.msra.mxu0 0.0
      %3871 = vmatprep.subr.mxu0 0.0
      %3872 = vmatpush1.msra.mxu0 0.0
      %3873 = vmatprep.subr.mxu0 0.0
      %3874 = vmatpush1.msra.mxu0 0.0
      %3875 = vmatprep.subr.mxu0 0.0
      %3876 = vmatpush1.msra.mxu0 0.0
      %3877 = vmatprep.subr.mxu0 0.0
      %3878 = vmatpush1.msra.mxu0 0.0
      %3879 = vmatprep.subr.mxu0 0.0
      %3880 = vmatpush1.msra.mxu0 0.0
      %3881 = vmatprep.subr.mxu0 0.0
      %3882 = vmatpush1.msra.mxu0 0.0
      %3883 = vmatprep.subr.mxu0 0.0
      %3884 = vmatpush1.msra.mxu0 0.0
      %3885 = vmatprep.subr.mxu0 0.0
      %3886 = vmatpush1.msra.mxu0 0.0
      %3887 = vmatprep.subr.mxu0 0.0
      %3888 = vmatpush1.msra.mxu0 0.0
      %3889 = vmatprep.subr.mxu0 0.0
      %3890 = vmatpush1.msra.mxu0 0.0
      %3891 = vmatprep.subr.mxu0 0.0
      %3892 = vmatpush1.msra.mxu0 0.0
      %3893 = vmatprep.subr.mxu0 0.0
      %3894 = vmatpush1.msra.mxu0 0.0
      %3895 = vmatprep.subr.mxu0 0.0
      %3896 = vmatpush1.msra.mxu0 0.0
      %3897 = vmatprep.subr.mxu0 0.0
      %3898 = vmatpush1.msra.mxu0 0.0
      %3899 = vmatprep.subr.mxu0 0.0
      %3900 = vmatpush1.msra.mxu0 0.0
      %3901 = vmatprep.subr.mxu0 0.0
      %3902 = vmatpush1.msra.mxu0 0.0
      %3903 = vmatprep.subr.mxu0 0.0
      %3904 = vmatpush1.msra.mxu0 0.0
      %3905 = vmatprep.subr.mxu0 0.0
      %3906 = vmatpush1.msra.mxu0 0.0
      %3907 = vmatprep.mubr.f32.mxu0 0.0
      %3908 = vmatmul.mubr.f32.gmra.mrb[0].mxu0 %v3820
      %v3909 = vpop.f32.mrb[0].mxu0
      %v3910 = vadd.f32 %v3782, %v3909
      %v3911 = vpop.f32.mrb[0].mxu0
      %v3912 = vadd.f32 %v3782, %v3911
      %3913 = vmatprep.mubr.f32.mxu0 0.0
      %3914 = vmatmul.mubr.f32.gmra.mrb[0].mxu0 %v3823
      %v3915 = vpop.f32.mrb[0].mxu0
      %v3916 = vadd.f32 %v3787, %v3915
      %v3917 = vpop.f32.mrb[0].mxu0
      %v3918 = vadd.f32 %v3787, %v3917
      %3919 = vmatprep.mubr.f32.mxu0 0.0
      %3920 = vmatmul.mubr.f32.gmra.mrb[0].mxu0 %v3826
      %v3921 = vpop.f32.mrb[0].mxu0
      %v3922 = vadd.f32 %v3792, %v3921
      %v3923 = vpop.f32.mrb[0].mxu0
      %v3924 = vadd.f32 %v3792, %v3923
      %3925 = vmatprep.mubr.f32.mxu0 0.0
      %3926 = vmatmul.mubr.f32.gmra.mrb[0].mxu0 %v3829
      %v3927 = vpop.f32.mrb[0].mxu0
      %v3928 = vadd.f32 %v3797, %v3927
      %v3929 = vpop.f32.mrb[0].mxu0
      %v3930 = vadd.f32 %v3797, %v3929
      %3931 = vmatprep.mubr.f32.mxu0 0.0
      %3932 = vmatmul.mubr.f32.gmra.mrb[0].mxu0 %v3832
      %v3933 = vpop.f32.mrb[0].mxu0
      %v3934 = vadd.f32 %v3802, %v3933
      %v3935 = vpop.f32.mrb[0].mxu0
      %v3936 = vadd.f32 %v3802, %v3935
      %3937 = vmatprep.mubr.f32.mxu0 0.0
      %3938 = vmatmul.mubr.f32.gmra.mrb[0].mxu0 %v3835
      %v3939 = vpop.f32.mrb[0].mxu0
      %v3940 = vadd.f32 %v3807, %v3939
      %v3941 = vpop.f32.mrb[0].mxu0
      %v3942 = vadd.f32 %v3807, %v3941
      %3943 = vmatprep.mubr.f32.mxu0 0.0
      %3944 = vmatmul.mubr.f32.gmra.mrb[0].mxu0 %v3838
      %v3945 = vpop.f32.mrb[0].mxu0
      %v3946 = vadd.f32 %v3812, %v3945
      %v3947 = vpop.f32.mrb[0].mxu0
      %v3948 = vadd.f32 %v3812, %v3947
      %3949 = vmatprep.mubr.f32.mxu0 0.0
      %3950 = vmatmul.mubr.f32.gmra.mrb[0].mxu0 %v3841
      %v3951 = vpop.f32.mrb[0].mxu0
      %v3952 = vadd.f32 %v3817, %v3951
      %v3953 = vpop.f32.mrb[0].mxu0
      %v3954 = vadd.f32 %v3817, %v3953
      %3955 = vdwg.mxu0
      %v3956 = vmax.f32 %v3910, 0.0
      %v3957 = vmax.f32 %v3912, 0.0
      %v3958 = vmax.f32 %v3916, 0.0
      %v3959 = vmax.f32 %v3918, 0.0
      %v3960 = vmax.f32 %v3922, 0.0
      %v3961 = vmax.f32 %v3924, 0.0
      %v3962 = vmax.f32 %v3928, 0.0
      %v3963 = vmax.f32 %v3930, 0.0
      %v3964 = vmax.f32 %v3934, 0.0
      %v3965 = vmax.f32 %v3936, 0.0
      %v3966 = vmax.f32 %v3940, 0.0
      %v3967 = vmax.f32 %v3942, 0.0
      %v3968 = vmax.f32 %v3946, 0.0
      %v3969 = vmax.f32 %v3948, 0.0
      %v3970 = vmax.f32 %v3952, 0.0
      %v3971 = vmax.f32 %v3954, 0.0
      %v3972 = vld [vmem:[%s3] sm:$0x3]
      %v3973 = vld [vmem:[%s4] sm:$0x3]
      %3975 = vset.pattern.permute.xlu0 0
      %3976 = vperm.xlu0 %3975, %v3973
      %v3977 = vpop.permute.xlu0 %3976
      %v3980 = vsel %vm2552, %v3972, 0
      %3982 = vmatprep.subr.mxu0 %v3957
      %3983 = vmatpush1.msra.mxu0 %v3956
      %3984 = vmatprep.subr.mxu0 %v3959
      %3985 = vmatpush1.msra.mxu0 %v3958
      %3986 = vmatprep.subr.mxu0 %v3961
      %3987 = vmatpush1.msra.mxu0 %v3960
      %3988 = vmatprep.subr.mxu0 %v3963
      %3989 = vmatpush1.msra.mxu0 %v3962
      %3990 = vmatprep.subr.mxu0 %v3965
      %3991 = vmatpush1.msra.mxu0 %v3964
      %3992 = vmatprep.subr.mxu0 %v3967
      %3993 = vmatpush1.msra.mxu0 %v3966
      %3994 = vmatprep.subr.mxu0 %v3969
      %3995 = vmatpush1.msra.mxu0 %v3968
      %3996 = vmatprep.subr.mxu0 %v3971
      %3997 = vmatpush1.msra.mxu0 %v3970
      %3998 = vmatprep.subr.mxu0 0.0
      %3999 = vmatpush1.msra.mxu0 0.0
      %4000 = vmatprep.subr.mxu0 0.0
      %4001 = vmatpush1.msra.mxu0 0.0
      %4002 = vmatprep.subr.mxu0 0.0
      %4003 = vmatpush1.msra.mxu0 0.0
      %4004 = vmatprep.subr.mxu0 0.0
      %4005 = vmatpush1.msra.mxu0 0.0
      %4006 = vmatprep.subr.mxu0 0.0
      %4007 = vmatpush1.msra.mxu0 0.0
      %4008 = vmatprep.subr.mxu0 0.0
      %4009 = vmatpush1.msra.mxu0 0.0
      %4010 = vmatprep.subr.mxu0 0.0
      %4011 = vmatpush1.msra.mxu0 0.0
      %4012 = vmatprep.subr.mxu0 0.0
      %4013 = vmatpush1.msra.mxu0 0.0
      %4014 = vmatprep.subr.mxu0 0.0
      %4015 = vmatpush1.msra.mxu0 0.0
      %4016 = vmatprep.subr.mxu0 0.0
      %4017 = vmatpush1.msra.mxu0 0.0
      %4018 = vmatprep.subr.mxu0 0.0
      %4019 = vmatpush1.msra.mxu0 0.0
      %4020 = vmatprep.subr.mxu0 0.0
      %4021 = vmatpush1.msra.mxu0 0.0
      %4022 = vmatprep.subr.mxu0 0.0
      %4023 = vmatpush1.msra.mxu0 0.0
      %4024 = vmatprep.subr.mxu0 0.0
      %4025 = vmatpush1.msra.mxu0 0.0
      %4026 = vmatprep.subr.mxu0 0.0
      %4027 = vmatpush1.msra.mxu0 0.0
      %4028 = vmatprep.subr.mxu0 0.0
      %4029 = vmatpush1.msra.mxu0 0.0
      %4030 = vmatprep.subr.mxu0 0.0
      %4031 = vmatpush1.msra.mxu0 0.0
      %4032 = vmatprep.subr.mxu0 0.0
      %4033 = vmatpush1.msra.mxu0 0.0
      %4034 = vmatprep.subr.mxu0 0.0
      %4035 = vmatpush1.msra.mxu0 0.0
      %4036 = vmatprep.subr.mxu0 0.0
      %4037 = vmatpush1.msra.mxu0 0.0
      %4038 = vmatprep.subr.mxu0 0.0
      %4039 = vmatpush1.msra.mxu0 0.0
      %4040 = vmatprep.subr.mxu0 0.0
      %4041 = vmatpush1.msra.mxu0 0.0
      %4042 = vmatprep.subr.mxu0 0.0
      %4043 = vmatpush1.msra.mxu0 0.0
      %4044 = vmatprep.subr.mxu0 0.0
      %4045 = vmatpush1.msra.mxu0 0.0
      %4046 = vmatprep.mubr.f32.mxu0 0.0
      %4047 = vmatmul.mubr.f32.gmra.mrb[0].mxu0 %v3980
      %v4048 = vpop.f32.mrb[0].mxu0
      %v4049 = vadd.f32 %v3977, %v4048
      %v4050 = vpop.f32.mrb[0].mxu0
      %v4051 = vadd.f32 %v3977, %v4050
      %4052 = vdwg.mxu0
      %v4053 = vxor.u32 %v4049, 2147483648
      %v4054 = vxor.u32 %v4051, 2147483648
      %v4055 = vmul.f32 %v4053, 1.442695
      %v4056 = vpow.pop %v4055
      %v4057 = vmul.f32 %v4054, 1.442695
      %v4058 = vpow.pop %v4057
      %v4059 = vadd.f32 %v4056, 1.0
      %v4060 = vadd.f32 %v4058, 1.0
      %v4061 = vrcp.pop %v4059
      %v4062 = vmul.f32 1.0, %v4061
      %v4063 = vrcp.pop %v4060
      %v4064 = vmul.f32 1.0, %v4063
      %vm4065 = vcmask 1041408
      %v4066 = vsel %vm4065, %v4062, 0.0
      %v4067 = vrot.slane %v4066, 4
      %v4068 = vadd.f32 %v4066, %v4067
      %v4069 = vrot.slane %v4068, 2
      %v4070 = vadd.f32 %v4068, %v4069
      %v4071 = vrot.slane %v4070, 1
      %v4072 = vadd.f32 %v4070, %v4071
      %v4073 = vsel %vm4065, %v4064, 0.0
      %v4074 = vrot.slane %v4073, 4
      %v4075 = vadd.f32 %v4073, %v4074
      %v4076 = vrot.slane %v4075, 2
      %v4077 = vadd.f32 %v4075, %v4076
      %v4078 = vrot.slane %v4077, 1
      %v4079 = vadd.f32 %v4077, %v4078
      %v4082 = vcombine.low %v4072, %v4079
      %v4084 = vunpack.c.l.s4 1966171168
      %v4085 = vunpack.c.0.s8 %v4084
      %v4086 = vlaneseq
      %v4087 = vshrl.u32 %v4086, 7
      %v4088 = vsub.s32 %v4085, %v4087
      %v4089 = vrot.slane %v4082, %v4088
      %v4091 = vunpack.c.l.s4 1966171168
      %v4092 = vunpack.c.0.s8 %v4091
      %v4093 = vlaneseq
      %v4094 = vshrl.u32 %v4093, 7
      %v4095 = vsub.s32 %v4092, %v4094
      %v4096 = vrot.slane %v4089, %v4095
      %v4098 = vlaneseq
      %vm4099 = vcmp.ge.s32.totalorder %v4098, 0
      %vm4100 = vcmp.lt.s32.totalorder %v4098, 256
      %vm4101 = vmand %vm4099, %vm4100
      %4102 = vst.msk [vmem:[%s224] sm:$0x3] %vm4101, %v4096
      %s4103 = smul.u32 2, %s16
      %p4104 = scmp.lt.s32.totalorder %s4103, 7
      %s4105 = scalar_select %p4104, %s4103, 7
      %s4106 = scalar_lea.vmem %s5, %s4105
      // Predicated region
      $region41: #{full_odenet_forward.1} parent=39 // pred_check
        %p4107 = pneg %p144
      $region42: #{full_odenet_forward.1} parent=39 // pred_check_branch
        %4109 = sbr.rel (%p4107) target = $region44
      $region43: #{full_odenet_forward.1} parent=39 // pred_region
        %s4110 = smul.u32 2, %s16
      $region44: #{full_odenet_forward.1} parent=39 // pred_fallthru
        _
    $region40: #{full_odenet_forward.1} parent=5 // pred_fallthru
      _
    %p4111 = scmp.le.s32.totalorder 2, %s11
    // Predicated region
    $region45: #{full_odenet_forward.1} parent=5 // pred_check
      %p4112 = pneg %p4111
    $region46: #{full_odenet_forward.1} parent=5 // pred_check_branch
      %4114 = sbr.rel (%p4112) target = $region48
    $region47: #{full_odenet_forward.1} parent=5 // pred_region
      %s4115 = ssub.s32 %s11, 2
      // Predicated region
      $region49: #{full_odenet_forward.1} parent=47 // pred_check
        %p4116 = pneg %p150
      $region50: #{full_odenet_forward.1} parent=47 // pred_check_branch
        %4118 = sbr.rel (%p4116) target = $region52
      $region51: #{full_odenet_forward.1} parent=47 // pred_region
        %s4119 = smul.u32 2, %s17
        %p4120 = scmp.lt.s32.totalorder %s4119, 7
        %s4121 = scalar_select %p4120, %s4119, 7
        %s4122 = scalar_lea.vmem %s5, %s4121
      $region52: #{full_odenet_forward.1} parent=47 // pred_fallthru
        _
    $region48: #{full_odenet_forward.1} parent=5 // pred_fallthru
      _
  $region6: #{full_odenet_forward.1} parent=0 // loop_footer
    %s15 = sadd.s32 1, %s11
  $region7: #{full_odenet_forward.1} parent=0 // loop_footer_branch
    %10 = sbr.rel target = $region3
  $region8: #{full_odenet_forward.1} parent=0 // loop_exit
    _

</llo_original>
